<compile_context>
chip_gen: v5e
topology: v5e:2x2
jax: 0.10.0
libtpu: 0.0.40
codegen_flags: <defaults>
</compile_context>

<pallas_src>
import jax
import jax.numpy as jnp
import numpy as np
from jax.experimental import pallas as pl
from jax.experimental.pallas import tpu as pltpu


# ---------------- fused Pallas kernel ----------------

def _down_kernel(x_ref, halo_ref, w1_ref, b1_ref, w2_ref, b2_ref, o_ref,
                 pool_sc, c1_sc):
    # x_ref    : (TR, 2, Wp, 2, Cin)   raw input rows for this tile (bf16)
    # halo_ref : (4, 2, Wp, 2, Cin)    4 extra pooled-rows worth of raw rows
    # w1_ref   : (9, Cin, CP)          conv1 weights, tap-major (bf16)
    # b1_ref   : (1, CP)               conv1 bias (f32)
    # w2_ref   : (9, CP, CP)           conv2 weights, tap-major (bf16)
    # b2_ref   : (1, CP)               conv2 bias (f32)
    # o_ref    : (TR, Wo2, CP)         output tile (f32, lane-dense last dim)
    # pool_sc  : (TR + 4, Wp, Cin)     pooled rows scratch (f32, VMEM)
    # c1_sc    : (TR + 2, Wo1, CP)     conv1 output scratch (f32, VMEM)
    tr = pool_sc.shape[0] - 4
    wo1 = c1_sc.shape[1]
    wo2 = o_ref.shape[1]
    cp = w1_ref.shape[2]

    # ---- fused 2x2 max-pool into VMEM scratch (no HBM round trip) ----
    xm = jnp.max(jnp.max(x_ref[...], axis=3), axis=1)        # (TR, Wp, Cin)
    pool_sc[0:tr] = xm.astype(pool_sc.dtype)
    xh = jnp.max(jnp.max(halo_ref[...], axis=3), axis=1)     # (4, Wp, Cin)
    pool_sc[tr:tr + 4] = xh.astype(pool_sc.dtype)

    b1 = b1_ref[...]
    b2 = b2_ref[...]

    # ---- conv1: 3x3 valid + ReLU, 9-tap MXU accumulation (no im2col) ----
    def c1_row(q, carry):
        acc = jnp.zeros((wo1, cp), jnp.float32)
        for di in range(3):
            for dj in range(3):
                xs = pool_sc[q + di, pl.ds(dj, wo1), :].astype(jnp.bfloat16)
                acc = acc + jnp.dot(xs, w1_ref[di * 3 + dj],
                                    preferred_element_type=jnp.float32)
        c1_sc[q] = jnp.maximum(acc + b1, 0.0).astype(c1_sc.dtype)
        return carry

    jax.lax.fori_loop(0, tr + 2, c1_row, 0)

    # ---- conv2: 3x3 valid + ReLU, reads conv1 result from VMEM scratch ----
    def c2_row(r, carry):
        acc = jnp.zeros((wo2, cp), jnp.float32)
        for di in range(3):
            for dj in range(3):
                xs = c1_sc[r + di, pl.ds(dj, wo2), :].astype(jnp.bfloat16)
            # NOTE: dot per tap; accumulate in f32
                acc = acc + jnp.dot(xs, w2_ref[di * 3 + dj],
                                    preferred_element_type=jnp.float32)
        o_ref[r] = jnp.maximum(acc + b2, 0.0).astype(o_ref.dtype)
        return carry

    jax.lax.fori_loop(0, tr, c2_row, 0)


# ---------------- wrapper (layout glue + pallas_call) ----------------

def _round_up(x, m):
    return ((x + m - 1) // m) * m


def _prep_weight(w_oihw, cin_pad, cout_pad):
    # (Cout, Cin, 3, 3) -> (9, Cin_pad, Cout_pad), tap index = di*3 + dj, bf16.
    co, ci, kh, kw = w_oihw.shape
    w = jnp.transpose(w_oihw, (2, 3, 1, 0)).reshape(kh * kw, ci, co)
    w = jnp.pad(w, ((0, 0), (0, cin_pad - ci), (0, cout_pad - co)))
    return w.astype(jnp.bfloat16)


def down_forward(x_nchw, params, *, tile_rows=None):
    w1, b1, w2, b2 = params["w1"], params["b1"], params["w2"], params["b2"]
    N, cin, H, W = x_nchw.shape
    cout = w1.shape[0]
    hp, wp = H // 2, W // 2                 # pooled spatial size (floor, as PyTorch)
    wo1, wo2 = wp - 2, wp - 4               # conv1 / conv2 output width
    ho2 = hp - 4                            # conv2 output height
    if ho2 <= 0 or wo2 <= 0:
        raise ValueError("input too small for MaxPool(2) + two valid 3x3 convs")
    cp = _round_up(cout, 128)               # lane-dense channel padding

    tr = tile_rows if tile_rows is not None else min(ho2, 8)
    tr = max(1, min(tr, ho2))
    n_tiles = (ho2 + tr - 1) // tr
    ho2_pad = n_tiles * tr
    hp_need = ho2_pad + 4                   # pooled rows required overall

    # NCHW -> NHWC, bf16 activations (halves HBM traffic, 2x MXU throughput).
    x = jnp.transpose(x_nchw, (0, 2, 3, 1)).astype(jnp.bfloat16)
    x = x[:, :2 * hp, :2 * wp, :]           # floor-pooling crop (odd H/W safe)
    if hp_need > hp:                        # pad rows so tiles divide evenly
        x = jnp.pad(x, ((0, 0), (0, 2 * (hp_need - hp)), (0, 0), (0, 0)))
    # Split H and W into (pooled index, phase): pure contiguous reshape, no
    # transpose / extra HBM copy; the kernel pools with plain axis reductions.
    x6 = x.reshape(N, hp_need, 2, wp, 2, cin)

    # 4 pooled rows of halo per tile (only re-read, ~4/tr of the input).
    halo = jnp.stack(
        [x6[:, tr * (t + 1): tr * (t + 1) + 4] for t in range(n_tiles)], axis=1)

    w1m = _prep_weight(w1, cin, cp)                                  # (9, cin, cp)
    w2m = _prep_weight(w2, cp, cp)                                   # (9, cp, cp)
    b1m = jnp.pad(b1, (0, cp - cout)).reshape(1, cp).astype(jnp.float32)
    b2m = jnp.pad(b2, (0, cp - cout)).reshape(1, cp).astype(jnp.float32)

    flops = 2 * N * n_tiles * 9 * ((tr + 2) * wo1 * cin * cp + tr * wo2 * cp * cp)
    bytes_accessed = ((x6.size + halo.size + w1m.size + w2m.size) * 2
                      + (b1m.size + b2m.size) * 4
                      + N * ho2_pad * wo2 * cp * 4)

    out = pl.pallas_call(
        _down_kernel,
        out_shape=jax.ShapeDtypeStruct((N, ho2_pad, wo2, cp), jnp.float32),
        grid_spec=pltpu.PrefetchScalarGridSpec(
            num_scalar_prefetch=0,
            grid=(N, n_tiles),
            in_specs=[
                # raw input rows of this tile (batch dim squeezed)
                pl.BlockSpec((None, tr, 2, wp, 2, cin),
                             lambda n, t: (n, t, 0, 0, 0, 0)),
                # halo rows (batch + tile dims squeezed)
                pl.BlockSpec((None, None, 4, 2, wp, 2, cin),
                             lambda n, t: (n, t, 0, 0, 0, 0, 0)),
                # weights / biases: constant index maps -> stay VMEM resident
                pl.BlockSpec((9, cin, cp), lambda n, t: (0, 0, 0)),
                pl.BlockSpec((1, cp), lambda n, t: (0, 0)),
                pl.BlockSpec((9, cp, cp), lambda n, t: (0, 0, 0)),
                pl.BlockSpec((1, cp), lambda n, t: (0, 0)),
            ],
            out_specs=pl.BlockSpec((None, tr, wo2, cp),
                                   lambda n, t: (n, t, 0, 0)),
            scratch_shapes=[
                pltpu.VMEM((tr + 4, wp, cin), jnp.float32),   # pooled rows
                pltpu.VMEM((tr + 2, wo1, cp), jnp.float32),   # conv1 output
            ],
        ),
        compiler_params=pltpu.CompilerParams(
            dimension_semantics=("parallel", "parallel"),
            vmem_limit_bytes=48 * 1024 * 1024,
        ),
        cost_estimate=pl.CostEstimate(flops=flops, transcendentals=0,
                                      bytes_accessed=bytes_accessed),
    )(x6, halo, w1m, b1m, w2m, b2m)

    out = out[:, :ho2, :, :cout]            # crop row padding + channel padding
    return jnp.transpose(out, (0, 3, 1, 2)).astype(x_nchw.dtype)   # NHWC -> NCHW


# ---------------- deterministic parameter init ----------------

def init_params(key, in_dim, out_dim):
    # Matches nn.Conv2d default init style (uniform in +-1/sqrt(fan_in)).
    k1, k2, k3, k4 = jax.random.split(key, 4)
    s1 = 1.0 / np.sqrt(in_dim * 9)
    s2 = 1.0 / np.sqrt(out_dim * 9)
    return {
        "w1": jax.random.uniform(k1, (out_dim, in_dim, 3, 3), jnp.float32, -s1, s1),
        "b1": jax.random.uniform(k2, (out_dim,), jnp.float32, -s1, s1),
        "w2": jax.random.uniform(k3, (out_dim, out_dim, 3, 3), jnp.float32, -s2, s2),
        "b2": jax.random.uniform(k4, (out_dim,), jnp.float32, -s2, s2),
    }


# ---------------- reference (plain JAX) for sanity check ----------------

def reference(x_nchw, params):
    x = jax.lax.reduce_window(x_nchw, -jnp.inf, jax.lax.max,
                              (1, 1, 2, 2), (1, 1, 2, 2), "VALID")

    def conv(x, w, b):
        y = jax.lax.conv_general_dilated(
            x, w, window_strides=(1, 1), padding="VALID",
            dimension_numbers=("NCHW", "OIHW", "NCHW"))
        return jax.nn.relu(y + b[None, :, None, None])

    x = conv(x, params["w1"], params["b1"])
    x = conv(x, params["w2"], params["b2"])
    return x


if __name__ == "__main__":
    key = jax.random.PRNGKey(0)
    kx, kp = jax.random.split(key)

    N, in_dim, out_dim, H, W = 2, 4, 8, 16, 16
    x = jax.random.normal(kx, (N, in_dim, H, W), jnp.float32)
    params = init_params(kp, in_dim, out_dim)

    fwd = jax.jit(down_forward)
    y = jax.block_until_ready(fwd(x, params))
    assert y.shape == (N, out_dim, (H // 2) - 4, (W // 2) - 4), y.shape

    y_ref = jax.block_until_ready(reference(x, params))
    np.testing.assert_allclose(np.asarray(y), np.asarray(y_ref),
                               rtol=2e-2, atol=2e-2)

    print("KERNEL_OK")
</pallas_src>

<mosaic_0001>
module attributes {stable_mosaic.version = 11 : i64} {
  func.func @_down_kernel(%arg0: i32, %arg1: i32, %arg2: memref<1x4x2x8x2x4xbf16, #tpu.memory_space<vmem>>, %arg3: memref<1x1x4x2x8x2x4xbf16, #tpu.memory_space<vmem>>, %arg4: memref<9x4x128xbf16, #tpu.memory_space<vmem>>, %arg5: memref<1x128xf32, #tpu.memory_space<vmem>>, %arg6: memref<9x128x128xbf16, #tpu.memory_space<vmem>>, %arg7: memref<1x128xf32, #tpu.memory_space<vmem>>, %arg8: memref<1x4x4x128xf32, #tpu.memory_space<vmem>>, %arg9: memref<8x8x4xf32, #tpu.memory_space<vmem>>, %arg10: memref<6x6x128xf32, #tpu.memory_space<vmem>>) attributes {dimension_semantics = [#tpu.dimension_semantics<parallel>, #tpu.dimension_semantics<parallel>], iteration_bounds = array<i64: 2, 1>, scalar_prefetch = 0 : i64, scratch_operands = 2 : i64, tpu.core_type = #tpu.core_type<tc>, window_params = [{transform_indices = @transform_0, window_bounds = array<i64: 1, 4, 2, 8, 2, 4>}, {transform_indices = @transform_1, window_bounds = array<i64: 1, 1, 4, 2, 8, 2, 4>}, {pipeline_mode = #tpu.pipeline_mode<synchronous>, transform_indices = @transform_2, window_bounds = array<i64: 9, 4, 128>}, {pipeline_mode = #tpu.pipeline_mode<synchronous>, transform_indices = @transform_3, window_bounds = array<i64: 1, 128>}, {pipeline_mode = #tpu.pipeline_mode<synchronous>, transform_indices = @transform_4, window_bounds = array<i64: 9, 128, 128>}, {pipeline_mode = #tpu.pipeline_mode<synchronous>, transform_indices = @transform_5, window_bounds = array<i64: 1, 128>}, {transform_indices = @transform_6, window_bounds = array<i64: 1, 4, 4, 128>}]} {
    %c0 = arith.constant 0 : index
    %c0_0 = arith.constant 0 : index
    %c0_1 = arith.constant 0 : index
    %c0_2 = arith.constant 0 : index
    %c0_3 = arith.constant 0 : index
    %c0_4 = arith.constant 0 : index
    %0 = vector.load %arg2[%c0, %c0_0, %c0_1, %c0_2, %c0_3, %c0_4] : memref<1x4x2x8x2x4xbf16, #tpu.memory_space<vmem>>, vector<1x4x2x8x2x4xbf16>
    %1 = vector.shape_cast %0 : vector<1x4x2x8x2x4xbf16> to vector<4x2x8x2x4xbf16>
    %cst = arith.constant dense<0xFF80> : vector<4x2x8x4xbf16>
    %2 = vector.multi_reduction <maximumf>, %1, %cst [3] : vector<4x2x8x2x4xbf16> to vector<4x2x8x4xbf16>
    %cst_5 = arith.constant dense<0xFF80> : vector<4x8x4xbf16>
    %3 = vector.multi_reduction <maximumf>, %2, %cst_5 [1] : vector<4x2x8x4xbf16> to vector<4x8x4xbf16>
    %4 = arith.extf %3 : vector<4x8x4xbf16> to vector<4x8x4xf32>
    %c0_6 = arith.constant 0 : index
    %c0_7 = arith.constant 0 : index
    %c0_8 = arith.constant 0 : index
    %5 = vector.load %arg9[%c0_6, %c0_7, %c0_8] : memref<8x8x4xf32, #tpu.memory_space<vmem>>, vector<4x8x4xf32>
    tpu.vector_store %arg9[%c0_6, %c0_7, %c0_8], %4 {strides = array<i32>} : memref<8x8x4xf32, #tpu.memory_space<vmem>>, vector<4x8x4xf32>,
    %c0_9 = arith.constant 0 : index
    %c0_10 = arith.constant 0 : index
    %c0_11 = arith.constant 0 : index
    %c0_12 = arith.constant 0 : index
    %c0_13 = arith.constant 0 : index
    %c0_14 = arith.constant 0 : index
    %c0_15 = arith.constant 0 : index
    %6 = vector.load %arg3[%c0_9, %c0_10, %c0_11, %c0_12, %c0_13, %c0_14, %c0_15] : memref<1x1x4x2x8x2x4xbf16, #tpu.memory_space<vmem>>, vector<1x1x4x2x8x2x4xbf16>
    %7 = vector.shape_cast %6 : vector<1x1x4x2x8x2x4xbf16> to vector<4x2x8x2x4xbf16>
    %cst_16 = arith.constant dense<0xFF80> : vector<4x2x8x4xbf16>
    %8 = vector.multi_reduction <maximumf>, %7, %cst_16 [3] : vector<4x2x8x2x4xbf16> to vector<4x2x8x4xbf16>
    %cst_17 = arith.constant dense<0xFF80> : vector<4x8x4xbf16>
    %9 = vector.multi_reduction <maximumf>, %8, %cst_17 [1] : vector<4x2x8x4xbf16> to vector<4x8x4xbf16>
    %10 = arith.extf %9 : vector<4x8x4xbf16> to vector<4x8x4xf32>
    %c4 = arith.constant 4 : index
    %c0_18 = arith.constant 0 : index
    %c0_19 = arith.constant 0 : index
    %11 = vector.load %arg9[%c4, %c0_18, %c0_19] : memref<8x8x4xf32, #tpu.memory_space<vmem>>, vector<4x8x4xf32>
    tpu.vector_store %arg9[%c4, %c0_18, %c0_19], %10 {strides = array<i32>} : memref<8x8x4xf32, #tpu.memory_space<vmem>>, vector<4x8x4xf32>,
    %c0_20 = arith.constant 0 : index
    %c0_21 = arith.constant 0 : index
    %12 = vector.load %arg5[%c0_20, %c0_21] : memref<1x128xf32, #tpu.memory_space<vmem>>, vector<1x128xf32>
    %c0_22 = arith.constant 0 : index
    %c0_23 = arith.constant 0 : index
    %13 = vector.load %arg7[%c0_22, %c0_23] : memref<1x128xf32, #tpu.memory_space<vmem>>, vector<1x128xf32>
    %c0_i32 = arith.constant 0 : i32
    %c6_i32 = arith.constant 6 : i32
    %14 = arith.addi %c0_i32, %c6_i32 : i32
    %c1_i32 = arith.constant 1 : i32
    scf.for %arg11 = %c0_i32 to %14 step %c1_i32  : i32 {
      %cst_28 = arith.constant 0.000000e+00 : f32
      %16 = vector.broadcast %cst_28 : f32 to vector<6x128xf32>
      %c0_i32_29 = arith.constant 0 : i32
      %17 = arith.addi %arg11, %c0_i32_29 : i32
      %18 = arith.index_cast %17 : i32 to index
      %c0_30 = arith.constant 0 : index
      %c0_31 = arith.constant 0 : index
      %19 = vector.load %arg9[%18, %c0_30, %c0_31] : memref<8x8x4xf32, #tpu.memory_space<vmem>>, vector<1x6x4xf32>
      %20 = vector.shape_cast %19 : vector<1x6x4xf32> to vector<6x4xf32>
      %21 = arith.truncf %20 : vector<6x4xf32> to vector<6x4xbf16>
      %c0_32 = arith.constant 0 : index
      %c0_33 = arith.constant 0 : index
      %c0_34 = arith.constant 0 : index
      %22 = vector.load %arg4[%c0_32, %c0_33, %c0_34] : memref<9x4x128xbf16, #tpu.memory_space<vmem>>, vector<1x4x128xbf16>
      %23 = vector.shape_cast %22 : vector<1x4x128xbf16> to vector<4x128xbf16>
      %cst_35 = arith.constant dense<0.000000e+00> : vector<6x128xf32>
      %24 = tpu.matmul %21, %23, %cst_35 {dimension_numbers = #tpu.dot_dimension_numbers<[1], [0], [0], [1], [0, 0, 1, 1], [], []>} : vector<6x4xbf16>, vector<4x128xbf16>, vector<6x128xf32> -> vector<6x128xf32>
      %25 = arith.addf %16, %24 : vector<6x128xf32>
      %c0_i32_36 = arith.constant 0 : i32
      %26 = arith.addi %arg11, %c0_i32_36 : i32
      %27 = arith.index_cast %26 : i32 to index
      %c1 = arith.constant 1 : index
      %c0_37 = arith.constant 0 : index
      %28 = vector.load %arg9[%27, %c1, %c0_37] : memref<8x8x4xf32, #tpu.memory_space<vmem>>, vector<1x6x4xf32>
      %29 = vector.shape_cast %28 : vector<1x6x4xf32> to vector<6x4xf32>
      %30 = arith.truncf %29 : vector<6x4xf32> to vector<6x4xbf16>
      %c1_38 = arith.constant 1 : index
      %c0_39 = arith.constant 0 : index
      %c0_40 = arith.constant 0 : index
      %31 = vector.load %arg4[%c1_38, %c0_39, %c0_40] : memref<9x4x128xbf16, #tpu.memory_space<vmem>>, vector<1x4x128xbf16>
      %32 = vector.shape_cast %31 : vector<1x4x128xbf16> to vector<4x128xbf16>
      %cst_41 = arith.constant dense<0.000000e+00> : vector<6x128xf32>
      %33 = tpu.matmul %30, %32, %cst_41 {dimension_numbers = #tpu.dot_dimension_numbers<[1], [0], [0], [1], [0, 0, 1, 1], [], []>} : vector<6x4xbf16>, vector<4x128xbf16>, vector<6x128xf32> -> vector<6x128xf32>
      %34 = arith.addf %25, %33 : vector<6x128xf32>
      %c0_i32_42 = arith.constant 0 : i32
      %35 = arith.addi %arg11, %c0_i32_42 : i32
      %36 = arith.index_cast %35 : i32 to index
      %c2 = arith.constant 2 : index
      %c0_43 = arith.constant 0 : index
      %37 = vector.load %arg9[%36, %c2, %c0_43] : memref<8x8x4xf32, #tpu.memory_space<vmem>>, vector<1x6x4xf32>
      %38 = vector.shape_cast %37 : vector<1x6x4xf32> to vector<6x4xf32>
      %39 = arith.truncf %38 : vector<6x4xf32> to vector<6x4xbf16>
      %c2_44 = arith.constant 2 : index
      %c0_45 = arith.constant 0 : index
      %c0_46 = arith.constant 0 : index
      %40 = vector.load %arg4[%c2_44, %c0_45, %c0_46] : memref<9x4x128xbf16, #tpu.memory_space<vmem>>, vector<1x4x128xbf16>
      %41 = vector.shape_cast %40 : vector<1x4x128xbf16> to vector<4x128xbf16>
      %cst_47 = arith.constant dense<0.000000e+00> : vector<6x128xf32>
      %42 = tpu.matmul %39, %41, %cst_47 {dimension_numbers = #tpu.dot_dimension_numbers<[1], [0], [0], [1], [0, 0, 1, 1], [], []>} : vector<6x4xbf16>, vector<4x128xbf16>, vector<6x128xf32> -> vector<6x128xf32>
      %43 = arith.addf %34, %42 : vector<6x128xf32>
      %c1_i32_48 = arith.constant 1 : i32
      %44 = arith.addi %arg11, %c1_i32_48 : i32
      %45 = arith.index_cast %44 : i32 to index
      %c0_49 = arith.constant 0 : index
      %c0_50 = arith.constant 0 : index
      %46 = vector.load %arg9[%45, %c0_49, %c0_50] : memref<8x8x4xf32, #tpu.memory_space<vmem>>, vector<1x6x4xf32>
      %47 = vector.shape_cast %46 : vector<1x6x4xf32> to vector<6x4xf32>
      %48 = arith.truncf %47 : vector<6x4xf32> to vector<6x4xbf16>
      %c3 = arith.constant 3 : index
      %c0_51 = arith.constant 0 : index
      %c0_52 = arith.constant 0 : index
      %49 = vector.load %arg4[%c3, %c0_51, %c0_52] : memref<9x4x128xbf16, #tpu.memory_space<vmem>>, vector<1x4x128xbf16>
      %50 = vector.shape_cast %49 : vector<1x4x128xbf16> to vector<4x128xbf16>
      %cst_53 = arith.constant dense<0.000000e+00> : vector<6x128xf32>
      %51 = tpu.matmul %48, %50, %cst_53 {dimension_numbers = #tpu.dot_dimension_numbers<[1], [0], [0], [1], [0, 0, 1, 1], [], []>} : vector<6x4xbf16>, vector<4x128xbf16>, vector<6x128xf32> -> vector<6x128xf32>
      %52 = arith.addf %43, %51 : vector<6x128xf32>
      %c1_i32_54 = arith.constant 1 : i32
      %53 = arith.addi %arg11, %c1_i32_54 : i32
      %54 = arith.index_cast %53 : i32 to index
      %c1_55 = arith.constant 1 : index
      %c0_56 = arith.constant 0 : index
      %55 = vector.load %arg9[%54, %c1_55, %c0_56] : memref<8x8x4xf32, #tpu.memory_space<vmem>>, vector<1x6x4xf32>
      %56 = vector.shape_cast %55 : vector<1x6x4xf32> to vector<6x4xf32>
      %57 = arith.truncf %56 : vector<6x4xf32> to vector<6x4xbf16>
      %c4_57 = arith.constant 4 : index
      %c0_58 = arith.constant 0 : index
      %c0_59 = arith.constant 0 : index
      %58 = vector.load %arg4[%c4_57, %c0_58, %c0_59] : memref<9x4x128xbf16, #tpu.memory_space<vmem>>, vector<1x4x128xbf16>
      %59 = vector.shape_cast %58 : vector<1x4x128xbf16> to vector<4x128xbf16>
      %cst_60 = arith.constant dense<0.000000e+00> : vector<6x128xf32>
      %60 = tpu.matmul %57, %59, %cst_60 {dimension_numbers = #tpu.dot_dimension_numbers<[1], [0], [0], [1], [0, 0, 1, 1], [], []>} : vector<6x4xbf16>, vector<4x128xbf16>, vector<6x128xf32> -> vector<6x128xf32>
      %61 = arith.addf %52, %60 : vector<6x128xf32>
      %c1_i32_61 = arith.constant 1 : i32
      %62 = arith.addi %arg11, %c1_i32_61 : i32
      %63 = arith.index_cast %62 : i32 to index
      %c2_62 = arith.constant 2 : index
      %c0_63 = arith.constant 0 : index
      %64 = vector.load %arg9[%63, %c2_62, %c0_63] : memref<8x8x4xf32, #tpu.memory_space<vmem>>, vector<1x6x4xf32>
      %65 = vector.shape_cast %64 : vector<1x6x4xf32> to vector<6x4xf32>
      %66 = arith.truncf %65 : vector<6x4xf32> to vector<6x4xbf16>
      %c5 = arith.constant 5 : index
      %c0_64 = arith.constant 0 : index
      %c0_65 = arith.constant 0 : index
      %67 = vector.load %arg4[%c5, %c0_64, %c0_65] : memref<9x4x128xbf16, #tpu.memory_space<vmem>>, vector<1x4x128xbf16>
      %68 = vector.shape_cast %67 : vector<1x4x128xbf16> to vector<4x128xbf16>
      %cst_66 = arith.constant dense<0.000000e+00> : vector<6x128xf32>
      %69 = tpu.matmul %66, %68, %cst_66 {dimension_numbers = #tpu.dot_dimension_numbers<[1], [0], [0], [1], [0, 0, 1, 1], [], []>} : vector<6x4xbf16>, vector<4x128xbf16>, vector<6x128xf32> -> vector<6x128xf32>
      %70 = arith.addf %61, %69 : vector<6x128xf32>
      %c2_i32 = arith.constant 2 : i32
      %71 = arith.addi %arg11, %c2_i32 : i32
      %72 = arith.index_cast %71 : i32 to index
      %c0_67 = arith.constant 0 : index
      %c0_68 = arith.constant 0 : index
      %73 = vector.load %arg9[%72, %c0_67, %c0_68] : memref<8x8x4xf32, #tpu.memory_space<vmem>>, vector<1x6x4xf32>
      %74 = vector.shape_cast %73 : vector<1x6x4xf32> to vector<6x4xf32>
      %75 = arith.truncf %74 : vector<6x4xf32> to vector<6x4xbf16>
      %c6 = arith.constant 6 : index
      %c0_69 = arith.constant 0 : index
      %c0_70 = arith.constant 0 : index
      %76 = vector.load %arg4[%c6, %c0_69, %c0_70] : memref<9x4x128xbf16, #tpu.memory_space<vmem>>, vector<1x4x128xbf16>
      %77 = vector.shape_cast %76 : vector<1x4x128xbf16> to vector<4x128xbf16>
      %cst_71 = arith.constant dense<0.000000e+00> : vector<6x128xf32>
      %78 = tpu.matmul %75, %77, %cst_71 {dimension_numbers = #tpu.dot_dimension_numbers<[1], [0], [0], [1], [0, 0, 1, 1], [], []>} : vector<6x4xbf16>, vector<4x128xbf16>, vector<6x128xf32> -> vector<6x128xf32>
      %79 = arith.addf %70, %78 : vector<6x128xf32>
      %c2_i32_72 = arith.constant 2 : i32
      %80 = arith.addi %arg11, %c2_i32_72 : i32
      %81 = arith.index_cast %80 : i32 to index
      %c1_73 = arith.constant 1 : index
      %c0_74 = arith.constant 0 : index
      %82 = vector.load %arg9[%81, %c1_73, %c0_74] : memref<8x8x4xf32, #tpu.memory_space<vmem>>, vector<1x6x4xf32>
      %83 = vector.shape_cast %82 : vector<1x6x4xf32> to vector<6x4xf32>
      %84 = arith.truncf %83 : vector<6x4xf32> to vector<6x4xbf16>
      %c7 = arith.constant 7 : index
      %c0_75 = arith.constant 0 : index
      %c0_76 = arith.constant 0 : index
      %85 = vector.load %arg4[%c7, %c0_75, %c0_76] : memref<9x4x128xbf16, #tpu.memory_space<vmem>>, vector<1x4x128xbf16>
      %86 = vector.shape_cast %85 : vector<1x4x128xbf16> to vector<4x128xbf16>
      %cst_77 = arith.constant dense<0.000000e+00> : vector<6x128xf32>
      %87 = tpu.matmul %84, %86, %cst_77 {dimension_numbers = #tpu.dot_dimension_numbers<[1], [0], [0], [1], [0, 0, 1, 1], [], []>} : vector<6x4xbf16>, vector<4x128xbf16>, vector<6x128xf32> -> vector<6x128xf32>
      %88 = arith.addf %79, %87 : vector<6x128xf32>
      %c2_i32_78 = arith.constant 2 : i32
      %89 = arith.addi %arg11, %c2_i32_78 : i32
      %90 = arith.index_cast %89 : i32 to index
      %c2_79 = arith.constant 2 : index
      %c0_80 = arith.constant 0 : index
      %91 = vector.load %arg9[%90, %c2_79, %c0_80] : memref<8x8x4xf32, #tpu.memory_space<vmem>>, vector<1x6x4xf32>
      %92 = vector.shape_cast %91 : vector<1x6x4xf32> to vector<6x4xf32>
      %93 = arith.truncf %92 : vector<6x4xf32> to vector<6x4xbf16>
      %c8 = arith.constant 8 : index
      %c0_81 = arith.constant 0 : index
      %c0_82 = arith.constant 0 : index
      %94 = vector.load %arg4[%c8, %c0_81, %c0_82] : memref<9x4x128xbf16, #tpu.memory_space<vmem>>, vector<1x4x128xbf16>
      %95 = vector.shape_cast %94 : vector<1x4x128xbf16> to vector<4x128xbf16>
      %cst_83 = arith.constant dense<0.000000e+00> : vector<6x128xf32>
      %96 = tpu.matmul %93, %95, %cst_83 {dimension_numbers = #tpu.dot_dimension_numbers<[1], [0], [0], [1], [0, 0, 1, 1], [], []>} : vector<6x4xbf16>, vector<4x128xbf16>, vector<6x128xf32> -> vector<6x128xf32>
      %97 = arith.addf %88, %96 : vector<6x128xf32>
      %98 = vector.broadcast %12 : vector<1x128xf32> to vector<6x128xf32>
      %99 = arith.addf %97, %98 : vector<6x128xf32>
      %cst_84 = arith.constant 0.000000e+00 : f32
      %100 = vector.broadcast %cst_84 : f32 to vector<6x128xf32>
      %101 = arith.maximumf %99, %100 : vector<6x128xf32>
      %102 = arith.index_cast %arg11 : i32 to index
      %c0_85 = arith.constant 0 : index
      %c0_86 = arith.constant 0 : index
      %103 = vector.load %arg10[%102, %c0_85, %c0_86] : memref<6x6x128xf32, #tpu.memory_space<vmem>>, vector<1x6x128xf32>
      %104 = vector.shape_cast %103 : vector<1x6x128xf32> to vector<6x128xf32>
      %105 = vector.shape_cast %101 : vector<6x128xf32> to vector<1x6x128xf32>
      tpu.vector_store %arg10[%102, %c0_85, %c0_86], %105 {strides = array<i32>} : memref<6x6x128xf32, #tpu.memory_space<vmem>>, vector<1x6x128xf32>,
    }
    %c6_i32_24 = arith.constant 6 : i32
    %c0_i32_25 = arith.constant 0 : i32
    %c4_i32 = arith.constant 4 : i32
    %15 = arith.addi %c0_i32_25, %c4_i32 : i32
    %c1_i32_26 = arith.constant 1 : i32
    scf.for %arg11 = %c0_i32_25 to %15 step %c1_i32_26  : i32 {
      %cst_28 = arith.constant 0.000000e+00 : f32
      %16 = vector.broadcast %cst_28 : f32 to vector<4x128xf32>
      %c0_i32_29 = arith.constant 0 : i32
      %17 = arith.addi %arg11, %c0_i32_29 : i32
      %18 = arith.index_cast %17 : i32 to index
      %c0_30 = arith.constant 0 : index
      %c0_31 = arith.constant 0 : index
      %19 = vector.load %arg10[%18, %c0_30, %c0_31] : memref<6x6x128xf32, #tpu.memory_space<vmem>>, vector<1x4x128xf32>
      %20 = vector.shape_cast %19 : vector<1x4x128xf32> to vector<4x128xf32>
      %21 = arith.truncf %20 : vector<4x128xf32> to vector<4x128xbf16>
      %c0_32 = arith.constant 0 : index
      %c0_33 = arith.constant 0 : index
      %c0_34 = arith.constant 0 : index
      %22 = vector.load %arg6[%c0_32, %c0_33, %c0_34] : memref<9x128x128xbf16, #tpu.memory_space<vmem>>, vector<1x128x128xbf16>
      %23 = vector.shape_cast %22 : vector<1x128x128xbf16> to vector<128x128xbf16>
      %cst_35 = arith.constant dense<0.000000e+00> : vector<4x128xf32>
      %24 = tpu.matmul %21, %23, %cst_35 {dimension_numbers = #tpu.dot_dimension_numbers<[1], [0], [0], [1], [0, 0, 1, 1], [], []>} : vector<4x128xbf16>, vector<128x128xbf16>, vector<4x128xf32> -> vector<4x128xf32>
      %25 = arith.addf %16, %24 : vector<4x128xf32>
      %c0_i32_36 = arith.constant 0 : i32
      %26 = arith.addi %arg11, %c0_i32_36 : i32
      %27 = arith.index_cast %26 : i32 to index
      %c1 = arith.constant 1 : index
      %c0_37 = arith.constant 0 : index
      %28 = vector.load %arg10[%27, %c1, %c0_37] : memref<6x6x128xf32, #tpu.memory_space<vmem>>, vector<1x4x128xf32>
      %29 = vector.shape_cast %28 : vector<1x4x128xf32> to vector<4x128xf32>
      %30 = arith.truncf %29 : vector<4x128xf32> to vector<4x128xbf16>
      %c1_38 = arith.constant 1 : index
      %c0_39 = arith.constant 0 : index
      %c0_40 = arith.constant 0 : index
      %31 = vector.load %arg6[%c1_38, %c0_39, %c0_40] : memref<9x128x128xbf16, #tpu.memory_space<vmem>>, vector<1x128x128xbf16>
      %32 = vector.shape_cast %31 : vector<1x128x128xbf16> to vector<128x128xbf16>
      %cst_41 = arith.constant dense<0.000000e+00> : vector<4x128xf32>
      %33 = tpu.matmul %30, %32, %cst_41 {dimension_numbers = #tpu.dot_dimension_numbers<[1], [0], [0], [1], [0, 0, 1, 1], [], []>} : vector<4x128xbf16>, vector<128x128xbf16>, vector<4x128xf32> -> vector<4x128xf32>
      %34 = arith.addf %25, %33 : vector<4x128xf32>
      %c0_i32_42 = arith.constant 0 : i32
      %35 = arith.addi %arg11, %c0_i32_42 : i32
      %36 = arith.index_cast %35 : i32 to index
      %c2 = arith.constant 2 : index
      %c0_43 = arith.constant 0 : index
      %37 = vector.load %arg10[%36, %c2, %c0_43] : memref<6x6x128xf32, #tpu.memory_space<vmem>>, vector<1x4x128xf32>
      %38 = vector.shape_cast %37 : vector<1x4x128xf32> to vector<4x128xf32>
      %39 = arith.truncf %38 : vector<4x128xf32> to vector<4x128xbf16>
      %c2_44 = arith.constant 2 : index
      %c0_45 = arith.constant 0 : index
      %c0_46 = arith.constant 0 : index
      %40 = vector.load %arg6[%c2_44, %c0_45, %c0_46] : memref<9x128x128xbf16, #tpu.memory_space<vmem>>, vector<1x128x128xbf16>
      %41 = vector.shape_cast %40 : vector<1x128x128xbf16> to vector<128x128xbf16>
      %cst_47 = arith.constant dense<0.000000e+00> : vector<4x128xf32>
      %42 = tpu.matmul %39, %41, %cst_47 {dimension_numbers = #tpu.dot_dimension_numbers<[1], [0], [0], [1], [0, 0, 1, 1], [], []>} : vector<4x128xbf16>, vector<128x128xbf16>, vector<4x128xf32> -> vector<4x128xf32>
      %43 = arith.addf %34, %42 : vector<4x128xf32>
      %c1_i32_48 = arith.constant 1 : i32
      %44 = arith.addi %arg11, %c1_i32_48 : i32
      %45 = arith.index_cast %44 : i32 to index
      %c0_49 = arith.constant 0 : index
      %c0_50 = arith.constant 0 : index
      %46 = vector.load %arg10[%45, %c0_49, %c0_50] : memref<6x6x128xf32, #tpu.memory_space<vmem>>, vector<1x4x128xf32>
      %47 = vector.shape_cast %46 : vector<1x4x128xf32> to vector<4x128xf32>
      %48 = arith.truncf %47 : vector<4x128xf32> to vector<4x128xbf16>
      %c3 = arith.constant 3 : index
      %c0_51 = arith.constant 0 : index
      %c0_52 = arith.constant 0 : index
      %49 = vector.load %arg6[%c3, %c0_51, %c0_52] : memref<9x128x128xbf16, #tpu.memory_space<vmem>>, vector<1x128x128xbf16>
      %50 = vector.shape_cast %49 : vector<1x128x128xbf16> to vector<128x128xbf16>
      %cst_53 = arith.constant dense<0.000000e+00> : vector<4x128xf32>
      %51 = tpu.matmul %48, %50, %cst_53 {dimension_numbers = #tpu.dot_dimension_numbers<[1], [0], [0], [1], [0, 0, 1, 1], [], []>} : vector<4x128xbf16>, vector<128x128xbf16>, vector<4x128xf32> -> vector<4x128xf32>
      %52 = arith.addf %43, %51 : vector<4x128xf32>
      %c1_i32_54 = arith.constant 1 : i32
      %53 = arith.addi %arg11, %c1_i32_54 : i32
      %54 = arith.index_cast %53 : i32 to index
      %c1_55 = arith.constant 1 : index
      %c0_56 = arith.constant 0 : index
      %55 = vector.load %arg10[%54, %c1_55, %c0_56] : memref<6x6x128xf32, #tpu.memory_space<vmem>>, vector<1x4x128xf32>
      %56 = vector.shape_cast %55 : vector<1x4x128xf32> to vector<4x128xf32>
      %57 = arith.truncf %56 : vector<4x128xf32> to vector<4x128xbf16>
      %c4_57 = arith.constant 4 : index
      %c0_58 = arith.constant 0 : index
      %c0_59 = arith.constant 0 : index
      %58 = vector.load %arg6[%c4_57, %c0_58, %c0_59] : memref<9x128x128xbf16, #tpu.memory_space<vmem>>, vector<1x128x128xbf16>
      %59 = vector.shape_cast %58 : vector<1x128x128xbf16> to vector<128x128xbf16>
      %cst_60 = arith.constant dense<0.000000e+00> : vector<4x128xf32>
      %60 = tpu.matmul %57, %59, %cst_60 {dimension_numbers = #tpu.dot_dimension_numbers<[1], [0], [0], [1], [0, 0, 1, 1], [], []>} : vector<4x128xbf16>, vector<128x128xbf16>, vector<4x128xf32> -> vector<4x128xf32>
      %61 = arith.addf %52, %60 : vector<4x128xf32>
      %c1_i32_61 = arith.constant 1 : i32
      %62 = arith.addi %arg11, %c1_i32_61 : i32
      %63 = arith.index_cast %62 : i32 to index
      %c2_62 = arith.constant 2 : index
      %c0_63 = arith.constant 0 : index
      %64 = vector.load %arg10[%63, %c2_62, %c0_63] : memref<6x6x128xf32, #tpu.memory_space<vmem>>, vector<1x4x128xf32>
      %65 = vector.shape_cast %64 : vector<1x4x128xf32> to vector<4x128xf32>
      %66 = arith.truncf %65 : vector<4x128xf32> to vector<4x128xbf16>
      %c5 = arith.constant 5 : index
      %c0_64 = arith.constant 0 : index
      %c0_65 = arith.constant 0 : index
      %67 = vector.load %arg6[%c5, %c0_64, %c0_65] : memref<9x128x128xbf16, #tpu.memory_space<vmem>>, vector<1x128x128xbf16>
      %68 = vector.shape_cast %67 : vector<1x128x128xbf16> to vector<128x128xbf16>
      %cst_66 = arith.constant dense<0.000000e+00> : vector<4x128xf32>
      %69 = tpu.matmul %66, %68, %cst_66 {dimension_numbers = #tpu.dot_dimension_numbers<[1], [0], [0], [1], [0, 0, 1, 1], [], []>} : vector<4x128xbf16>, vector<128x128xbf16>, vector<4x128xf32> -> vector<4x128xf32>
      %70 = arith.addf %61, %69 : vector<4x128xf32>
      %c2_i32 = arith.constant 2 : i32
      %71 = arith.addi %arg11, %c2_i32 : i32
      %72 = arith.index_cast %71 : i32 to index
      %c0_67 = arith.constant 0 : index
      %c0_68 = arith.constant 0 : index
      %73 = vector.load %arg10[%72, %c0_67, %c0_68] : memref<6x6x128xf32, #tpu.memory_space<vmem>>, vector<1x4x128xf32>
      %74 = vector.shape_cast %73 : vector<1x4x128xf32> to vector<4x128xf32>
      %75 = arith.truncf %74 : vector<4x128xf32> to vector<4x128xbf16>
      %c6 = arith.constant 6 : index
      %c0_69 = arith.constant 0 : index
      %c0_70 = arith.constant 0 : index
      %76 = vector.load %arg6[%c6, %c0_69, %c0_70] : memref<9x128x128xbf16, #tpu.memory_space<vmem>>, vector<1x128x128xbf16>
      %77 = vector.shape_cast %76 : vector<1x128x128xbf16> to vector<128x128xbf16>
      %cst_71 = arith.constant dense<0.000000e+00> : vector<4x128xf32>
      %78 = tpu.matmul %75, %77, %cst_71 {dimension_numbers = #tpu.dot_dimension_numbers<[1], [0], [0], [1], [0, 0, 1, 1], [], []>} : vector<4x128xbf16>, vector<128x128xbf16>, vector<4x128xf32> -> vector<4x128xf32>
      %79 = arith.addf %70, %78 : vector<4x128xf32>
      %c2_i32_72 = arith.constant 2 : i32
      %80 = arith.addi %arg11, %c2_i32_72 : i32
      %81 = arith.index_cast %80 : i32 to index
      %c1_73 = arith.constant 1 : index
      %c0_74 = arith.constant 0 : index
      %82 = vector.load %arg10[%81, %c1_73, %c0_74] : memref<6x6x128xf32, #tpu.memory_space<vmem>>, vector<1x4x128xf32>
      %83 = vector.shape_cast %82 : vector<1x4x128xf32> to vector<4x128xf32>
      %84 = arith.truncf %83 : vector<4x128xf32> to vector<4x128xbf16>
      %c7 = arith.constant 7 : index
      %c0_75 = arith.constant 0 : index
      %c0_76 = arith.constant 0 : index
      %85 = vector.load %arg6[%c7, %c0_75, %c0_76] : memref<9x128x128xbf16, #tpu.memory_space<vmem>>, vector<1x128x128xbf16>
      %86 = vector.shape_cast %85 : vector<1x128x128xbf16> to vector<128x128xbf16>
      %cst_77 = arith.constant dense<0.000000e+00> : vector<4x128xf32>
      %87 = tpu.matmul %84, %86, %cst_77 {dimension_numbers = #tpu.dot_dimension_numbers<[1], [0], [0], [1], [0, 0, 1, 1], [], []>} : vector<4x128xbf16>, vector<128x128xbf16>, vector<4x128xf32> -> vector<4x128xf32>
      %88 = arith.addf %79, %87 : vector<4x128xf32>
      %c2_i32_78 = arith.constant 2 : i32
      %89 = arith.addi %arg11, %c2_i32_78 : i32
      %90 = arith.index_cast %89 : i32 to index
      %c2_79 = arith.constant 2 : index
      %c0_80 = arith.constant 0 : index
      %91 = vector.load %arg10[%90, %c2_79, %c0_80] : memref<6x6x128xf32, #tpu.memory_space<vmem>>, vector<1x4x128xf32>
      %92 = vector.shape_cast %91 : vector<1x4x128xf32> to vector<4x128xf32>
      %93 = arith.truncf %92 : vector<4x128xf32> to vector<4x128xbf16>
      %c8 = arith.constant 8 : index
      %c0_81 = arith.constant 0 : index
      %c0_82 = arith.constant 0 : index
      %94 = vector.load %arg6[%c8, %c0_81, %c0_82] : memref<9x128x128xbf16, #tpu.memory_space<vmem>>, vector<1x128x128xbf16>
      %95 = vector.shape_cast %94 : vector<1x128x128xbf16> to vector<128x128xbf16>
      %cst_83 = arith.constant dense<0.000000e+00> : vector<4x128xf32>
      %96 = tpu.matmul %93, %95, %cst_83 {dimension_numbers = #tpu.dot_dimension_numbers<[1], [0], [0], [1], [0, 0, 1, 1], [], []>} : vector<4x128xbf16>, vector<128x128xbf16>, vector<4x128xf32> -> vector<4x128xf32>
      %97 = arith.addf %88, %96 : vector<4x128xf32>
      %98 = vector.broadcast %13 : vector<1x128xf32> to vector<4x128xf32>
      %99 = arith.addf %97, %98 : vector<4x128xf32>
      %cst_84 = arith.constant 0.000000e+00 : f32
      %100 = vector.broadcast %cst_84 : f32 to vector<4x128xf32>
      %101 = arith.maximumf %99, %100 : vector<4x128xf32>
      %c0_85 = arith.constant 0 : index
      %102 = arith.index_cast %arg11 : i32 to index
      %c0_86 = arith.constant 0 : index
      %c0_87 = arith.constant 0 : index
      %103 = vector.load %arg8[%c0_85, %102, %c0_86, %c0_87] : memref<1x4x4x128xf32, #tpu.memory_space<vmem>>, vector<1x1x4x128xf32>
      %104 = vector.shape_cast %103 : vector<1x1x4x128xf32> to vector<4x128xf32>
      %105 = vector.shape_cast %101 : vector<4x128xf32> to vector<1x1x4x128xf32>
      tpu.vector_store %arg8[%c0_85, %102, %c0_86, %c0_87], %105 {strides = array<i32>} : memref<1x4x4x128xf32, #tpu.memory_space<vmem>>, vector<1x1x4x128xf32>,
    }
    %c4_i32_27 = arith.constant 4 : i32
    return
  }
  func.func @transform_0(%arg0: i32, %arg1: i32) -> (i32, i32, i32, i32, i32, i32) {
    %c0_i32 = arith.constant 0 : i32
    %c0_i32_0 = arith.constant 0 : i32
    %c0_i32_1 = arith.constant 0 : i32
    %c0_i32_2 = arith.constant 0 : i32
    %c0_i32_3 = arith.constant 0 : i32
    return %arg0, %arg1, %c0_i32, %c0_i32_0, %c0_i32_1, %c0_i32_2 : i32, i32, i32, i32, i32, i32
  }
  func.func @transform_1(%arg0: i32, %arg1: i32) -> (i32, i32, i32, i32, i32, i32, i32) {
    %c0_i32 = arith.constant 0 : i32
    %c0_i32_0 = arith.constant 0 : i32
    %c0_i32_1 = arith.constant 0 : i32
    %c0_i32_2 = arith.constant 0 : i32
    %c0_i32_3 = arith.constant 0 : i32
    %c0_i32_4 = arith.constant 0 : i32
    return %arg0, %arg1, %c0_i32, %c0_i32_0, %c0_i32_1, %c0_i32_2, %c0_i32_3 : i32, i32, i32, i32, i32, i32, i32
  }
  func.func @transform_2(%arg0: i32, %arg1: i32) -> (i32, i32, i32) {
    %c0_i32 = arith.constant 0 : i32
    %c0_i32_0 = arith.constant 0 : i32
    %c0_i32_1 = arith.constant 0 : i32
    %c0_i32_2 = arith.constant 0 : i32
    return %c0_i32, %c0_i32_0, %c0_i32_1 : i32, i32, i32
  }
  func.func @transform_3(%arg0: i32, %arg1: i32) -> (i32, i32) {
    %c0_i32 = arith.constant 0 : i32
    %c0_i32_0 = arith.constant 0 : i32
    %c0_i32_1 = arith.constant 0 : i32
    return %c0_i32, %c0_i32_0 : i32, i32
  }
  func.func @transform_4(%arg0: i32, %arg1: i32) -> (i32, i32, i32) {
    %c0_i32 = arith.constant 0 : i32
    %c0_i32_0 = arith.constant 0 : i32
    %c0_i32_1 = arith.constant 0 : i32
    %c0_i32_2 = arith.constant 0 : i32
    return %c0_i32, %c0_i32_0, %c0_i32_1 : i32, i32, i32
  }
  func.func @transform_5(%arg0: i32, %arg1: i32) -> (i32, i32) {
    %c0_i32 = arith.constant 0 : i32
    %c0_i32_0 = arith.constant 0 : i32
    %c0_i32_1 = arith.constant 0 : i32
    return %c0_i32, %c0_i32_0 : i32, i32
  }
  func.func @transform_6(%arg0: i32, %arg1: i32) -> (i32, i32, i32, i32) {
    %c0_i32 = arith.constant 0 : i32
    %c0_i32_0 = arith.constant 0 : i32
    %c0_i32_1 = arith.constant 0 : i32
    return %arg0, %arg1, %c0_i32, %c0_i32_0 : i32, i32, i32, i32
  }
}

</mosaic_0001>

<llo_original>
// kernel: down_forward.1
$region0: #{down_forward.1}
  #allocation0 [shape = 'u32[]', space=smem, size = 0x4, offset = 0x4, fixed_abs, tag = 'smem constant byte address 0x4 - core index']
  #allocation1 [shape = 'u32[72,128]{1,0:T(1,128)}', space=vmem, size = 0x9000, scoped, tag = 'internal scratch']
  #allocation2 [shape = 'f32[8,8,4]{2,1,0:T(8,128)}', space=vmem, size = 0x8000, scoped, tag = 'scratch operand']
  #allocation3 [shape = 'f32[6,6,128]{2,1,0:T(8,128)}', space=vmem, size = 0x6000, scoped, tag = 'scratch operand']
  %s0 = inlined_call_operand.vmem [shape: bf16[2,8,2,8,2,4], index: 0, kind: input, shape index: {}]
  %s1 = inlined_call_operand.vmem [shape: bf16[2,1,4,2,8,2,4], index: 1, kind: input, shape index: {}]
  %s2 = inlined_call_operand.vmem [shape: bf16[9,4,128], index: 2, kind: input, shape index: {}]
  %s3 = inlined_call_operand.vmem [shape: f32[1,128], index: 3, kind: input, shape index: {}]
  %s4 = inlined_call_operand.vmem [shape: bf16[9,128,128], index: 4, kind: input, shape index: {}]
  %s5 = inlined_call_operand.vmem [shape: f32[1,128], index: 5, kind: input, shape index: {}]
  %s6 = inlined_call_operand.vmem [shape: f32[2,4,4,128], index: 6, kind: output, shape index: {}]
  %s7 = sld [smem:[#allocation0]]
  $region71: #{down_forward.1} parent=0
    _
  %s9 = ssub.s32 1, %s7
  %s10 = scalar_select 0, %s9, %s7
  loop: start=0, step=1, limit=4
  $region2: #{down_forward.1} parent=0 // loop_pre_header
    _
  $region3: #{down_forward.1} parent=0 // loop_header
    %s12 = sphi 0, %s16
    %p13 = scmp.ge.s32.totalorder %s12, 4
    %s19 = sphi 0, %s31
    %s20 = sphi 0, %s27
    %s21 = sphi 0, %s19
    %s22 = sphi 0, %s20
    %s23 = sphi 0, %s21
    %s24 = sphi 0, %s22
    %s36 = sphi 0, %s38
    %s39 = sphi 0, %s36
    %s40 = sphi 0, %s39
    %s56 = sphi 0, %s40
    %s64 = sphi 0, %s66
    %s67 = sphi 0, %s64
    %s68 = sphi 0, %s67
    %s84 = sphi 0, %s68
    %s88 = sphi 0, %s88
    %s90 = sphi 0, %s88
    %s91 = sphi 0, %s90
    %s105 = sphi 0, %s91
    %s109 = sphi 0, %s109
    %s111 = sphi 0, %s109
    %s112 = sphi 0, %s111
    %s126 = sphi 0, %s112
    %s130 = sphi 0, %s130
    %s132 = sphi 0, %s130
    %s133 = sphi 0, %s132
    %s147 = sphi 0, %s133
    %s151 = sphi 0, %s151
    %s153 = sphi 0, %s151
    %s154 = sphi 0, %s153
    %s168 = sphi 0, %s154
    %s176 = sphi 0, %s178
    %s179 = sphi 0, %s176
    %s180 = sphi 0, %s179
    %s196 = sphi 0, %s180
  $region4: #{down_forward.1} parent=0 // loop_header_branch
    %15 = sbr.rel (%p13) target = $region8
  $region5: #{down_forward.1} parent=0 // loop_body
    %s17 = ssub.s32 %s12, 1
    %s18 = ssub.s32 %s12, 2
    %s25 = sadd.s32 1, %s20
    %p26 = scmp.ge.s32.totalorder %s25, 1
    %s27 = scalar_select %p26, 0, %s25
    %s28 = sadd.s32 1, %s19
    %s29 = scalar_select %p26, %s28, %s19
    %p30 = scmp.ge.s32.totalorder %s29, 2
    %s31 = scalar_select %p30, 0, %s29
    %s32 = ssub.s32 %s19, %s31
    %s33 = ssub.s32 %s20, %s27
    %s34 = sor.u32 %s32, %s33
    %p35 = scmp.eq.s32.totalorder %s34, 0
    %s37 = sadd.s32 %s36, 1
    %s38 = scalar_select %p35, %s36, %s37
    %p41 = pneg %p35
    %p42 = scmp.eq.s32.totalorder %s12, 1
    %p43 = por %p41, %p42
    %p44 = scmp.ne.s32.totalorder %s36, %s39
    %p45 = scmp.eq.s32.totalorder %s12, 0
    %p46 = por %p44, %p45
    %p47 = scmp.ne.s32.totalorder %s36, %s39
    %p48 = scmp.eq.s32.totalorder %s17, 1
    %p49 = por %p47, %p48
    %p50 = scmp.ne.s32.totalorder %s39, %s40
    %p51 = scmp.eq.s32.totalorder %s17, 0
    %p52 = por %p50, %p51
    %p53 = scmp.ne.s32.totalorder %s39, %s40
    %p54 = scmp.eq.s32.totalorder %s18, 1
    %p55 = por %p53, %p54
    %p57 = scmp.ne.s32.totalorder %s40, %s56
    %p58 = scmp.eq.s32.totalorder %s18, 0
    %p59 = por %p57, %p58
    %s60 = ssub.s32 %s19, %s31
    %s61 = ssub.s32 %s20, %s27
    %s62 = sor.u32 %s60, %s61
    %p63 = scmp.eq.s32.totalorder %s62, 0
    %s65 = sadd.s32 %s64, 1
    %s66 = scalar_select %p63, %s64, %s65
    %p69 = pneg %p63
    %p70 = scmp.eq.s32.totalorder %s12, 1
    %p71 = por %p69, %p70
    %p72 = scmp.ne.s32.totalorder %s64, %s67
    %p73 = scmp.eq.s32.totalorder %s12, 0
    %p74 = por %p72, %p73
    %p75 = scmp.ne.s32.totalorder %s64, %s67
    %p76 = scmp.eq.s32.totalorder %s17, 1
    %p77 = por %p75, %p76
    %p78 = scmp.ne.s32.totalorder %s67, %s68
    %p79 = scmp.eq.s32.totalorder %s17, 0
    %p80 = por %p78, %p79
    %p81 = scmp.ne.s32.totalorder %s67, %s68
    %p82 = scmp.eq.s32.totalorder %s18, 1
    %p83 = por %p81, %p82
    %p85 = scmp.ne.s32.totalorder %s68, %s84
    %p86 = scmp.eq.s32.totalorder %s18, 0
    %p87 = por %p85, %p86
    %s89 = sadd.s32 %s88, 1
    %p92 = scmp.eq.s32.totalorder %s12, 1
    %p93 = scmp.ne.s32.totalorder %s88, %s90
    %p94 = scmp.eq.s32.totalorder %s12, 0
    %p95 = por %p93, %p94
    %p96 = scmp.ne.s32.totalorder %s88, %s90
    %p97 = scmp.eq.s32.totalorder %s17, 1
    %p98 = por %p96, %p97
    %p99 = scmp.ne.s32.totalorder %s90, %s91
    %p100 = scmp.eq.s32.totalorder %s17, 0
    %p101 = por %p99, %p100
    %p102 = scmp.ne.s32.totalorder %s90, %s91
    %p103 = scmp.eq.s32.totalorder %s18, 1
    %p104 = por %p102, %p103
    %p106 = scmp.ne.s32.totalorder %s91, %s105
    %p107 = scmp.eq.s32.totalorder %s18, 0
    %p108 = por %p106, %p107
    %s110 = sadd.s32 %s109, 1
    %p113 = scmp.eq.s32.totalorder %s12, 1
    %p114 = scmp.ne.s32.totalorder %s109, %s111
    %p115 = scmp.eq.s32.totalorder %s12, 0
    %p116 = por %p114, %p115
    %p117 = scmp.ne.s32.totalorder %s109, %s111
    %p118 = scmp.eq.s32.totalorder %s17, 1
    %p119 = por %p117, %p118
    %p120 = scmp.ne.s32.totalorder %s111, %s112
    %p121 = scmp.eq.s32.totalorder %s17, 0
    %p122 = por %p120, %p121
    %p123 = scmp.ne.s32.totalorder %s111, %s112
    %p124 = scmp.eq.s32.totalorder %s18, 1
    %p125 = por %p123, %p124
    %p127 = scmp.ne.s32.totalorder %s112, %s126
    %p128 = scmp.eq.s32.totalorder %s18, 0
    %p129 = por %p127, %p128
    %s131 = sadd.s32 %s130, 1
    %p134 = scmp.eq.s32.totalorder %s12, 1
    %p135 = scmp.ne.s32.totalorder %s130, %s132
    %p136 = scmp.eq.s32.totalorder %s12, 0
    %p137 = por %p135, %p136
    %p138 = scmp.ne.s32.totalorder %s130, %s132
    %p139 = scmp.eq.s32.totalorder %s17, 1
    %p140 = por %p138, %p139
    %p141 = scmp.ne.s32.totalorder %s132, %s133
    %p142 = scmp.eq.s32.totalorder %s17, 0
    %p143 = por %p141, %p142
    %p144 = scmp.ne.s32.totalorder %s132, %s133
    %p145 = scmp.eq.s32.totalorder %s18, 1
    %p146 = por %p144, %p145
    %p148 = scmp.ne.s32.totalorder %s133, %s147
    %p149 = scmp.eq.s32.totalorder %s18, 0
    %p150 = por %p148, %p149
    %s152 = sadd.s32 %s151, 1
    %p155 = scmp.eq.s32.totalorder %s12, 1
    %p156 = scmp.ne.s32.totalorder %s151, %s153
    %p157 = scmp.eq.s32.totalorder %s12, 0
    %p158 = por %p156, %p157
    %p159 = scmp.ne.s32.totalorder %s151, %s153
    %p160 = scmp.eq.s32.totalorder %s17, 1
    %p161 = por %p159, %p160
    %p162 = scmp.ne.s32.totalorder %s153, %s154
    %p163 = scmp.eq.s32.totalorder %s17, 0
    %p164 = por %p162, %p163
    %p165 = scmp.ne.s32.totalorder %s153, %s154
    %p166 = scmp.eq.s32.totalorder %s18, 1
    %p167 = por %p165, %p166
    %p169 = scmp.ne.s32.totalorder %s154, %s168
    %p170 = scmp.eq.s32.totalorder %s18, 0
    %p171 = por %p169, %p170
    %s172 = ssub.s32 %s19, %s31
    %s173 = ssub.s32 %s20, %s27
    %s174 = sor.u32 %s172, %s173
    %p175 = scmp.eq.s32.totalorder %s174, 0
    %s177 = sadd.s32 %s176, 1
    %s178 = scalar_select %p175, %s176, %s177
    %p181 = pneg %p175
    %p182 = scmp.eq.s32.totalorder %s12, 1
    %p183 = por %p181, %p182
    %p184 = scmp.ne.s32.totalorder %s176, %s179
    %p185 = scmp.eq.s32.totalorder %s12, 0
    %p186 = por %p184, %p185
    %p187 = scmp.ne.s32.totalorder %s176, %s179
    %p188 = scmp.eq.s32.totalorder %s17, 1
    %p189 = por %p187, %p188
    %p190 = scmp.ne.s32.totalorder %s179, %s180
    %p191 = scmp.eq.s32.totalorder %s17, 0
    %p192 = por %p190, %p191
    %p193 = scmp.ne.s32.totalorder %s179, %s180
    %p194 = scmp.eq.s32.totalorder %s18, 1
    %p195 = por %p193, %p194
    %p197 = scmp.ne.s32.totalorder %s180, %s196
    %p198 = scmp.eq.s32.totalorder %s18, 0
    %p199 = por %p197, %p198
    %p200 = scmp.le.s32.totalorder 1, %s12
    %p201 = scmp.lt.s32.totalorder %s12, 3
    %p202 = pnand %p200, %p201
    %p203 = pneg %p202
    // Predicated region
    $region9: #{down_forward.1} parent=5 // pred_check
      _
    $region10: #{down_forward.1} parent=5 // pred_check_branch
      %205 = sbr.rel (%p202) target = $region12
    $region11: #{down_forward.1} parent=5 // pred_region
      %s206 = ssub.s32 %s12, 1
      // Predicated region
      $region13: #{down_forward.1} parent=11 // pred_check
        %p207 = pneg %p101
      $region14: #{down_forward.1} parent=11 // pred_check_branch
        %209 = sbr.rel (%p207) target = $region16
      $region15: #{down_forward.1} parent=11 // pred_region
        _
      $region16: #{down_forward.1} parent=11 // pred_fallthru
        _
      // Predicated region
      $region17: #{down_forward.1} parent=11 // pred_check
        %p210 = pneg %p122
      $region18: #{down_forward.1} parent=11 // pred_check_branch
        %212 = sbr.rel (%p210) target = $region20
      $region19: #{down_forward.1} parent=11 // pred_region
        _
      $region20: #{down_forward.1} parent=11 // pred_fallthru
        _
      // Predicated region
      $region21: #{down_forward.1} parent=11 // pred_check
        %p213 = pneg %p143
      $region22: #{down_forward.1} parent=11 // pred_check_branch
        %215 = sbr.rel (%p213) target = $region24
      $region23: #{down_forward.1} parent=11 // pred_region
        _
      $region24: #{down_forward.1} parent=11 // pred_fallthru
        _
      // Predicated region
      $region25: #{down_forward.1} parent=11 // pred_check
        %p216 = pneg %p164
      $region26: #{down_forward.1} parent=11 // pred_check_branch
        %218 = sbr.rel (%p216) target = $region28
      $region27: #{down_forward.1} parent=11 // pred_region
        _
      $region28: #{down_forward.1} parent=11 // pred_fallthru
        _
    $region12: #{down_forward.1} parent=5 // pred_fallthru
      _
    %p219 = scmp.lt.s32.totalorder %s12, 2
    // Predicated region
    $region29: #{down_forward.1} parent=5 // pred_check
      %p220 = pneg %p219
    $region30: #{down_forward.1} parent=5 // pred_check_branch
      %222 = sbr.rel (%p220) target = $region32
    $region31: #{down_forward.1} parent=5 // pred_region
      // Predicated region
      $region33: #{down_forward.1} parent=31 // pred_check
        %p223 = pneg %p46
      $region34: #{down_forward.1} parent=31 // pred_check_branch
        %225 = sbr.rel (%p223) target = $region36
      $region35: #{down_forward.1} parent=31 // pred_region
        %s226 = smul.u32 4, %s20
        %p227 = scmp.lt.s32.totalorder %s19, 1
        %s228 = scalar_select %p227, %s19, 1
        %p229 = scmp.lt.s32.totalorder %s226, 7
        %s230 = scalar_select %p229, %s226, 7
        %s231 = smul.addr %s230, 16
        %s232 = smul.addr %s228, 128
        %s233 = sadd.s32 %s231, %s232
        %s234 = scalar_lea.vmem %s0, %s233
        %s235 = smul.u32 4, %s20
      $region36: #{down_forward.1} parent=31 // pred_fallthru
        _
      // Predicated region
      $region37: #{down_forward.1} parent=31 // pred_check
        %p236 = pneg %p74
      $region38: #{down_forward.1} parent=31 // pred_check_branch
        %238 = sbr.rel (%p236) target = $region40
      $region39: #{down_forward.1} parent=31 // pred_region
        %p239 = scmp.lt.s32.totalorder %s19, 1
        %s240 = scalar_select %p239, %s19, 1
        %p241 = scmp.lt.s32.totalorder %s20, 0
        %s242 = scalar_select %p241, %s20, 0
        %s243 = smul.addr %s242, 64
        %s244 = smul.addr %s240, 64
        %s245 = sadd.s32 %s243, %s244
        %s246 = scalar_lea.vmem %s1, %s245
      $region40: #{down_forward.1} parent=31 // pred_fallthru
        _
    $region32: #{down_forward.1} parent=5 // pred_fallthru
      _
    %p247 = scmp.le.s32.totalorder 1, %s12
    %p248 = scmp.lt.s32.totalorder %s12, 3
    %p249 = pnand %p247, %p248
    %p250 = pneg %p249
    // Predicated region
    $region41: #{down_forward.1} parent=5 // pred_check
      _
    $region42: #{down_forward.1} parent=5 // pred_check_branch
      %252 = sbr.rel (%p249) target = $region44
    $region43: #{down_forward.1} parent=5 // pred_region
      %s253 = ssub.s32 %s12, 1
      %s254 = smul.u32 4, %s22
      %p255 = scmp.lt.s32.totalorder %s21, 1
      %s256 = scalar_select %p255, %s21, 1
      %p257 = scmp.lt.s32.totalorder %s254, 7
      %s258 = scalar_select %p257, %s254, 7
      %s259 = smul.addr %s258, 16
      %s260 = smul.addr %s256, 128
      %s261 = sadd.s32 %s259, %s260
      %s262 = scalar_lea.vmem %s0, %s261
      %p263 = pneg %p52
      %p264 = pneg %p49
      %p265 = scmp.lt.s32.totalorder %s21, 1
      %s266 = scalar_select %p265, %s21, 1
      %p267 = scmp.lt.s32.totalorder %s22, 0
      %s268 = scalar_select %p267, %s22, 0
      %s269 = smul.addr %s268, 64
      %s270 = smul.addr %s266, 64
      %s271 = sadd.s32 %s269, %s270
      %s272 = scalar_lea.vmem %s1, %s271
      %p273 = pneg %p80
      %p274 = pneg %p77
      %p275 = pneg %p101
      %p276 = pneg %p98
      %p277 = pneg %p122
      %p278 = pneg %p119
      %p279 = pneg %p143
      %p280 = pneg %p140
      %p281 = pneg %p164
      %p282 = pneg %p161
      %p283 = pneg %p192
      %p284 = pneg %p189
      %s285 = smul.u32 4, %s22
      %p286 = scmp.lt.s32.totalorder %s21, 1
      %s287 = scalar_select %p286, %s21, 1
      %p288 = scmp.lt.s32.totalorder %s285, 3
      %s289 = scalar_select %p288, %s285, 3
      %s290 = smul.addr %s287, 4
      %s291 = sadd.s32 %s289, %s290
      %s292 = smul.addr %s291, 4
      %s293 = scalar_lea.vmem %s6, %s292
      %s294 = smul.u32 4, %s22
      %p295 = scmp.lt.s32.totalorder %s21, 1
      %s296 = scalar_select %p295, %s21, 1
      %p297 = scmp.lt.s32.totalorder %s294, 7
      %s298 = scalar_select %p297, %s294, 7
      %s299 = smul.addr %s298, 16
      %s300 = smul.addr %s296, 128
      %s301 = sadd.s32 %s299, %s300
      %s302 = scalar_lea.vmem %s0, %s301
      %s303 = smul.u32 4, %s22
      %p304 = scmp.lt.s32.totalorder %s21, 1
      %s305 = scalar_select %p304, %s21, 1
      %p306 = scmp.lt.s32.totalorder %s22, 0
      %s307 = scalar_select %p306, %s22, 0
      %s308 = smul.addr %s307, 64
      %s309 = smul.addr %s305, 64
      %s310 = sadd.s32 %s308, %s309
      %s311 = scalar_lea.vmem %s1, %s310
      %s312 = smul.u32 4, %s22
      %p313 = scmp.lt.s32.totalorder %s21, 1
      %s314 = scalar_select %p313, %s21, 1
      %p315 = scmp.lt.s32.totalorder %s312, 3
      %s316 = scalar_select %p315, %s312, 3
      %s317 = smul.addr %s314, 4
      %s318 = sadd.s32 %s316, %s317
      %s319 = smul.addr %s318, 4
      %s320 = scalar_lea.vmem %s6, %s319
      %s321 = smul.u32 4, %s22
      %v323 = vld [vmem:[%s302] sm:$0x1]
      %v324 = vld [vmem:[%s302 + $0x1] sm:$0x1]
      %v325 = vld [vmem:[%s302 + $0x2] sm:$0x1]
      %v326 = vld [vmem:[%s302 + $0x3] sm:$0x1]
      %v327 = vld [vmem:[%s302 + $0x4] sm:$0x1]
      %v328 = vld [vmem:[%s302 + $0x5] sm:$0x1]
      %v329 = vld [vmem:[%s302 + $0x6] sm:$0x1]
      %v330 = vld [vmem:[%s302 + $0x7] sm:$0x1]
      %v331 = vld [vmem:[%s302 + $0x8] sm:$0x1]
      %v332 = vld [vmem:[%s302 + $0x9] sm:$0x1]
      %v333 = vld [vmem:[%s302 + $0xa] sm:$0x1]
      %v334 = vld [vmem:[%s302 + $0xb] sm:$0x1]
      %v335 = vld [vmem:[%s302 + $0xc] sm:$0x1]
      %v336 = vld [vmem:[%s302 + $0xd] sm:$0x1]
      %v337 = vld [vmem:[%s302 + $0xe] sm:$0x1]
      %v338 = vld [vmem:[%s302 + $0xf] sm:$0x1]
      %v339 = vld [vmem:[%s302 + $0x10] sm:$0x1]
      %v340 = vld [vmem:[%s302 + $0x11] sm:$0x1]
      %v341 = vld [vmem:[%s302 + $0x12] sm:$0x1]
      %v342 = vld [vmem:[%s302 + $0x13] sm:$0x1]
      %v343 = vld [vmem:[%s302 + $0x14] sm:$0x1]
      %v344 = vld [vmem:[%s302 + $0x15] sm:$0x1]
      %v345 = vld [vmem:[%s302 + $0x16] sm:$0x1]
      %v346 = vld [vmem:[%s302 + $0x17] sm:$0x1]
      %v347 = vld [vmem:[%s302 + $0x18] sm:$0x1]
      %v348 = vld [vmem:[%s302 + $0x19] sm:$0x1]
      %v349 = vld [vmem:[%s302 + $0x1a] sm:$0x1]
      %v350 = vld [vmem:[%s302 + $0x1b] sm:$0x1]
      %v351 = vld [vmem:[%s302 + $0x1c] sm:$0x1]
      %v352 = vld [vmem:[%s302 + $0x1d] sm:$0x1]
      %v353 = vld [vmem:[%s302 + $0x1e] sm:$0x1]
      %v354 = vld [vmem:[%s302 + $0x1f] sm:$0x1]
      %v355 = vld [vmem:[%s302 + $0x20] sm:$0x1]
      %v356 = vld [vmem:[%s302 + $0x21] sm:$0x1]
      %v357 = vld [vmem:[%s302 + $0x22] sm:$0x1]
      %v358 = vld [vmem:[%s302 + $0x23] sm:$0x1]
      %v359 = vld [vmem:[%s302 + $0x24] sm:$0x1]
      %v360 = vld [vmem:[%s302 + $0x25] sm:$0x1]
      %v361 = vld [vmem:[%s302 + $0x26] sm:$0x1]
      %v362 = vld [vmem:[%s302 + $0x27] sm:$0x1]
      %v363 = vld [vmem:[%s302 + $0x28] sm:$0x1]
      %v364 = vld [vmem:[%s302 + $0x29] sm:$0x1]
      %v365 = vld [vmem:[%s302 + $0x2a] sm:$0x1]
      %v366 = vld [vmem:[%s302 + $0x2b] sm:$0x1]
      %v367 = vld [vmem:[%s302 + $0x2c] sm:$0x1]
      %v368 = vld [vmem:[%s302 + $0x2d] sm:$0x1]
      %v369 = vld [vmem:[%s302 + $0x2e] sm:$0x1]
      %v370 = vld [vmem:[%s302 + $0x2f] sm:$0x1]
      %v371 = vld [vmem:[%s302 + $0x30] sm:$0x1]
      %v372 = vld [vmem:[%s302 + $0x31] sm:$0x1]
      %v373 = vld [vmem:[%s302 + $0x32] sm:$0x1]
      %v374 = vld [vmem:[%s302 + $0x33] sm:$0x1]
      %v375 = vld [vmem:[%s302 + $0x34] sm:$0x1]
      %v376 = vld [vmem:[%s302 + $0x35] sm:$0x1]
      %v377 = vld [vmem:[%s302 + $0x36] sm:$0x1]
      %v378 = vld [vmem:[%s302 + $0x37] sm:$0x1]
      %v379 = vld [vmem:[%s302 + $0x38] sm:$0x1]
      %v380 = vld [vmem:[%s302 + $0x39] sm:$0x1]
      %v381 = vld [vmem:[%s302 + $0x3a] sm:$0x1]
      %v382 = vld [vmem:[%s302 + $0x3b] sm:$0x1]
      %v383 = vld [vmem:[%s302 + $0x3c] sm:$0x1]
      %v384 = vld [vmem:[%s302 + $0x3d] sm:$0x1]
      %v385 = vld [vmem:[%s302 + $0x3e] sm:$0x1]
      %v386 = vld [vmem:[%s302 + $0x3f] sm:$0x1]
      %v387 = vunpack.c.l.bf16 %v323
      %v388 = vunpack.c.l.bf16 %v324
      %v389 = vunpack.c.l.bf16 %v325
      %v390 = vunpack.c.l.bf16 %v326
      %v391 = vunpack.c.l.bf16 %v327
      %v392 = vunpack.c.l.bf16 %v328
      %v393 = vunpack.c.l.bf16 %v329
      %v394 = vunpack.c.l.bf16 %v330
      %v395 = vunpack.c.l.bf16 %v331
      %v396 = vunpack.c.l.bf16 %v332
      %v397 = vunpack.c.l.bf16 %v333
      %v398 = vunpack.c.l.bf16 %v334
      %v399 = vunpack.c.l.bf16 %v335
      %v400 = vunpack.c.l.bf16 %v336
      %v401 = vunpack.c.l.bf16 %v337
      %v402 = vunpack.c.l.bf16 %v338
      %v403 = vunpack.c.l.bf16 %v339
      %v404 = vunpack.c.l.bf16 %v340
      %v405 = vunpack.c.l.bf16 %v341
      %v406 = vunpack.c.l.bf16 %v342
      %v407 = vunpack.c.l.bf16 %v343
      %v408 = vunpack.c.l.bf16 %v344
      %v409 = vunpack.c.l.bf16 %v345
      %v410 = vunpack.c.l.bf16 %v346
      %v411 = vunpack.c.l.bf16 %v347
      %v412 = vunpack.c.l.bf16 %v348
      %v413 = vunpack.c.l.bf16 %v349
      %v414 = vunpack.c.l.bf16 %v350
      %v415 = vunpack.c.l.bf16 %v351
      %v416 = vunpack.c.l.bf16 %v352
      %v417 = vunpack.c.l.bf16 %v353
      %v418 = vunpack.c.l.bf16 %v354
      %v419 = vunpack.c.l.bf16 %v355
      %v420 = vunpack.c.l.bf16 %v356
      %v421 = vunpack.c.l.bf16 %v357
      %v422 = vunpack.c.l.bf16 %v358
      %v423 = vunpack.c.l.bf16 %v359
      %v424 = vunpack.c.l.bf16 %v360
      %v425 = vunpack.c.l.bf16 %v361
      %v426 = vunpack.c.l.bf16 %v362
      %v427 = vunpack.c.l.bf16 %v363
      %v428 = vunpack.c.l.bf16 %v364
      %v429 = vunpack.c.l.bf16 %v365
      %v430 = vunpack.c.l.bf16 %v366
      %v431 = vunpack.c.l.bf16 %v367
      %v432 = vunpack.c.l.bf16 %v368
      %v433 = vunpack.c.l.bf16 %v369
      %v434 = vunpack.c.l.bf16 %v370
      %v435 = vunpack.c.l.bf16 %v371
      %v436 = vunpack.c.l.bf16 %v372
      %v437 = vunpack.c.l.bf16 %v373
      %v438 = vunpack.c.l.bf16 %v374
      %v439 = vunpack.c.l.bf16 %v375
      %v440 = vunpack.c.l.bf16 %v376
      %v441 = vunpack.c.l.bf16 %v377
      %v442 = vunpack.c.l.bf16 %v378
      %v443 = vunpack.c.l.bf16 %v379
      %v444 = vunpack.c.l.bf16 %v380
      %v445 = vunpack.c.l.bf16 %v381
      %v446 = vunpack.c.l.bf16 %v382
      %v447 = vunpack.c.l.bf16 %v383
      %v448 = vunpack.c.l.bf16 %v384
      %v449 = vunpack.c.l.bf16 %v385
      %v450 = vunpack.c.l.bf16 %v386
      %vm451 = vcmask 25600
      %v452 = vsel %vm451, %v387, -inf
      %v453 = vrot.slane %v452, 4
      %v454 = vmax.f32 %v452, %v453
      %v455 = vrot.slane %v454, 2
      %v456 = vmax.f32 %v454, %v455
      %v457 = vrot.slane %v456, 1
      %v458 = vmax.f32 %v456, %v457
      %v459 = vsel %vm451, %v388, -inf
      %v460 = vrot.slane %v459, 4
      %v461 = vmax.f32 %v459, %v460
      %v462 = vrot.slane %v461, 2
      %v463 = vmax.f32 %v461, %v462
      %v464 = vrot.slane %v463, 1
      %v465 = vmax.f32 %v463, %v464
      %v466 = vsel %vm451, %v389, -inf
      %v467 = vrot.slane %v466, 4
      %v468 = vmax.f32 %v466, %v467
      %v469 = vrot.slane %v468, 2
      %v470 = vmax.f32 %v468, %v469
      %v471 = vrot.slane %v470, 1
      %v472 = vmax.f32 %v470, %v471
      %v473 = vsel %vm451, %v390, -inf
      %v474 = vrot.slane %v473, 4
      %v475 = vmax.f32 %v473, %v474
      %v476 = vrot.slane %v475, 2
      %v477 = vmax.f32 %v475, %v476
      %v478 = vrot.slane %v477, 1
      %v479 = vmax.f32 %v477, %v478
      %v480 = vsel %vm451, %v391, -inf
      %v481 = vrot.slane %v480, 4
      %v482 = vmax.f32 %v480, %v481
      %v483 = vrot.slane %v482, 2
      %v484 = vmax.f32 %v482, %v483
      %v485 = vrot.slane %v484, 1
      %v486 = vmax.f32 %v484, %v485
      %v487 = vsel %vm451, %v392, -inf
      %v488 = vrot.slane %v487, 4
      %v489 = vmax.f32 %v487, %v488
      %v490 = vrot.slane %v489, 2
      %v491 = vmax.f32 %v489, %v490
      %v492 = vrot.slane %v491, 1
      %v493 = vmax.f32 %v491, %v492
      %v494 = vsel %vm451, %v393, -inf
      %v495 = vrot.slane %v494, 4
      %v496 = vmax.f32 %v494, %v495
      %v497 = vrot.slane %v496, 2
      %v498 = vmax.f32 %v496, %v497
      %v499 = vrot.slane %v498, 1
      %v500 = vmax.f32 %v498, %v499
      %v501 = vsel %vm451, %v394, -inf
      %v502 = vrot.slane %v501, 4
      %v503 = vmax.f32 %v501, %v502
      %v504 = vrot.slane %v503, 2
      %v505 = vmax.f32 %v503, %v504
      %v506 = vrot.slane %v505, 1
      %v507 = vmax.f32 %v505, %v506
      %v508 = vsel %vm451, %v395, -inf
      %v509 = vrot.slane %v508, 4
      %v510 = vmax.f32 %v508, %v509
      %v511 = vrot.slane %v510, 2
      %v512 = vmax.f32 %v510, %v511
      %v513 = vrot.slane %v512, 1
      %v514 = vmax.f32 %v512, %v513
      %v515 = vsel %vm451, %v396, -inf
      %v516 = vrot.slane %v515, 4
      %v517 = vmax.f32 %v515, %v516
      %v518 = vrot.slane %v517, 2
      %v519 = vmax.f32 %v517, %v518
      %v520 = vrot.slane %v519, 1
      %v521 = vmax.f32 %v519, %v520
      %v522 = vsel %vm451, %v397, -inf
      %v523 = vrot.slane %v522, 4
      %v524 = vmax.f32 %v522, %v523
      %v525 = vrot.slane %v524, 2
      %v526 = vmax.f32 %v524, %v525
      %v527 = vrot.slane %v526, 1
      %v528 = vmax.f32 %v526, %v527
      %v529 = vsel %vm451, %v398, -inf
      %v530 = vrot.slane %v529, 4
      %v531 = vmax.f32 %v529, %v530
      %v532 = vrot.slane %v531, 2
      %v533 = vmax.f32 %v531, %v532
      %v534 = vrot.slane %v533, 1
      %v535 = vmax.f32 %v533, %v534
      %v536 = vsel %vm451, %v399, -inf
      %v537 = vrot.slane %v536, 4
      %v538 = vmax.f32 %v536, %v537
      %v539 = vrot.slane %v538, 2
      %v540 = vmax.f32 %v538, %v539
      %v541 = vrot.slane %v540, 1
      %v542 = vmax.f32 %v540, %v541
      %v543 = vsel %vm451, %v400, -inf
      %v544 = vrot.slane %v543, 4
      %v545 = vmax.f32 %v543, %v544
      %v546 = vrot.slane %v545, 2
      %v547 = vmax.f32 %v545, %v546
      %v548 = vrot.slane %v547, 1
      %v549 = vmax.f32 %v547, %v548
      %v550 = vsel %vm451, %v401, -inf
      %v551 = vrot.slane %v550, 4
      %v552 = vmax.f32 %v550, %v551
      %v553 = vrot.slane %v552, 2
      %v554 = vmax.f32 %v552, %v553
      %v555 = vrot.slane %v554, 1
      %v556 = vmax.f32 %v554, %v555
      %v557 = vsel %vm451, %v402, -inf
      %v558 = vrot.slane %v557, 4
      %v559 = vmax.f32 %v557, %v558
      %v560 = vrot.slane %v559, 2
      %v561 = vmax.f32 %v559, %v560
      %v562 = vrot.slane %v561, 1
      %v563 = vmax.f32 %v561, %v562
      %v564 = vsel %vm451, %v403, -inf
      %v565 = vrot.slane %v564, 4
      %v566 = vmax.f32 %v564, %v565
      %v567 = vrot.slane %v566, 2
      %v568 = vmax.f32 %v566, %v567
      %v569 = vrot.slane %v568, 1
      %v570 = vmax.f32 %v568, %v569
      %v571 = vsel %vm451, %v404, -inf
      %v572 = vrot.slane %v571, 4
      %v573 = vmax.f32 %v571, %v572
      %v574 = vrot.slane %v573, 2
      %v575 = vmax.f32 %v573, %v574
      %v576 = vrot.slane %v575, 1
      %v577 = vmax.f32 %v575, %v576
      %v578 = vsel %vm451, %v405, -inf
      %v579 = vrot.slane %v578, 4
      %v580 = vmax.f32 %v578, %v579
      %v581 = vrot.slane %v580, 2
      %v582 = vmax.f32 %v580, %v581
      %v583 = vrot.slane %v582, 1
      %v584 = vmax.f32 %v582, %v583
      %v585 = vsel %vm451, %v406, -inf
      %v586 = vrot.slane %v585, 4
      %v587 = vmax.f32 %v585, %v586
      %v588 = vrot.slane %v587, 2
      %v589 = vmax.f32 %v587, %v588
      %v590 = vrot.slane %v589, 1
      %v591 = vmax.f32 %v589, %v590
      %v592 = vsel %vm451, %v407, -inf
      %v593 = vrot.slane %v592, 4
      %v594 = vmax.f32 %v592, %v593
      %v595 = vrot.slane %v594, 2
      %v596 = vmax.f32 %v594, %v595
      %v597 = vrot.slane %v596, 1
      %v598 = vmax.f32 %v596, %v597
      %v599 = vsel %vm451, %v408, -inf
      %v600 = vrot.slane %v599, 4
      %v601 = vmax.f32 %v599, %v600
      %v602 = vrot.slane %v601, 2
      %v603 = vmax.f32 %v601, %v602
      %v604 = vrot.slane %v603, 1
      %v605 = vmax.f32 %v603, %v604
      %v606 = vsel %vm451, %v409, -inf
      %v607 = vrot.slane %v606, 4
      %v608 = vmax.f32 %v606, %v607
      %v609 = vrot.slane %v608, 2
      %v610 = vmax.f32 %v608, %v609
      %v611 = vrot.slane %v610, 1
      %v612 = vmax.f32 %v610, %v611
      %v613 = vsel %vm451, %v410, -inf
      %v614 = vrot.slane %v613, 4
      %v615 = vmax.f32 %v613, %v614
      %v616 = vrot.slane %v615, 2
      %v617 = vmax.f32 %v615, %v616
      %v618 = vrot.slane %v617, 1
      %v619 = vmax.f32 %v617, %v618
      %v620 = vsel %vm451, %v411, -inf
      %v621 = vrot.slane %v620, 4
      %v622 = vmax.f32 %v620, %v621
      %v623 = vrot.slane %v622, 2
      %v624 = vmax.f32 %v622, %v623
      %v625 = vrot.slane %v624, 1
      %v626 = vmax.f32 %v624, %v625
      %v627 = vsel %vm451, %v412, -inf
      %v628 = vrot.slane %v627, 4
      %v629 = vmax.f32 %v627, %v628
      %v630 = vrot.slane %v629, 2
      %v631 = vmax.f32 %v629, %v630
      %v632 = vrot.slane %v631, 1
      %v633 = vmax.f32 %v631, %v632
      %v634 = vsel %vm451, %v413, -inf
      %v635 = vrot.slane %v634, 4
      %v636 = vmax.f32 %v634, %v635
      %v637 = vrot.slane %v636, 2
      %v638 = vmax.f32 %v636, %v637
      %v639 = vrot.slane %v638, 1
      %v640 = vmax.f32 %v638, %v639
      %v641 = vsel %vm451, %v414, -inf
      %v642 = vrot.slane %v641, 4
      %v643 = vmax.f32 %v641, %v642
      %v644 = vrot.slane %v643, 2
      %v645 = vmax.f32 %v643, %v644
      %v646 = vrot.slane %v645, 1
      %v647 = vmax.f32 %v645, %v646
      %v648 = vsel %vm451, %v415, -inf
      %v649 = vrot.slane %v648, 4
      %v650 = vmax.f32 %v648, %v649
      %v651 = vrot.slane %v650, 2
      %v652 = vmax.f32 %v650, %v651
      %v653 = vrot.slane %v652, 1
      %v654 = vmax.f32 %v652, %v653
      %v655 = vsel %vm451, %v416, -inf
      %v656 = vrot.slane %v655, 4
      %v657 = vmax.f32 %v655, %v656
      %v658 = vrot.slane %v657, 2
      %v659 = vmax.f32 %v657, %v658
      %v660 = vrot.slane %v659, 1
      %v661 = vmax.f32 %v659, %v660
      %v662 = vsel %vm451, %v417, -inf
      %v663 = vrot.slane %v662, 4
      %v664 = vmax.f32 %v662, %v663
      %v665 = vrot.slane %v664, 2
      %v666 = vmax.f32 %v664, %v665
      %v667 = vrot.slane %v666, 1
      %v668 = vmax.f32 %v666, %v667
      %v669 = vsel %vm451, %v418, -inf
      %v670 = vrot.slane %v669, 4
      %v671 = vmax.f32 %v669, %v670
      %v672 = vrot.slane %v671, 2
      %v673 = vmax.f32 %v671, %v672
      %v674 = vrot.slane %v673, 1
      %v675 = vmax.f32 %v673, %v674
      %v676 = vsel %vm451, %v419, -inf
      %v677 = vrot.slane %v676, 4
      %v678 = vmax.f32 %v676, %v677
      %v679 = vrot.slane %v678, 2
      %v680 = vmax.f32 %v678, %v679
      %v681 = vrot.slane %v680, 1
      %v682 = vmax.f32 %v680, %v681
      %v683 = vsel %vm451, %v420, -inf
      %v684 = vrot.slane %v683, 4
      %v685 = vmax.f32 %v683, %v684
      %v686 = vrot.slane %v685, 2
      %v687 = vmax.f32 %v685, %v686
      %v688 = vrot.slane %v687, 1
      %v689 = vmax.f32 %v687, %v688
      %v690 = vsel %vm451, %v421, -inf
      %v691 = vrot.slane %v690, 4
      %v692 = vmax.f32 %v690, %v691
      %v693 = vrot.slane %v692, 2
      %v694 = vmax.f32 %v692, %v693
      %v695 = vrot.slane %v694, 1
      %v696 = vmax.f32 %v694, %v695
      %v697 = vsel %vm451, %v422, -inf
      %v698 = vrot.slane %v697, 4
      %v699 = vmax.f32 %v697, %v698
      %v700 = vrot.slane %v699, 2
      %v701 = vmax.f32 %v699, %v700
      %v702 = vrot.slane %v701, 1
      %v703 = vmax.f32 %v701, %v702
      %v704 = vsel %vm451, %v423, -inf
      %v705 = vrot.slane %v704, 4
      %v706 = vmax.f32 %v704, %v705
      %v707 = vrot.slane %v706, 2
      %v708 = vmax.f32 %v706, %v707
      %v709 = vrot.slane %v708, 1
      %v710 = vmax.f32 %v708, %v709
      %v711 = vsel %vm451, %v424, -inf
      %v712 = vrot.slane %v711, 4
      %v713 = vmax.f32 %v711, %v712
      %v714 = vrot.slane %v713, 2
      %v715 = vmax.f32 %v713, %v714
      %v716 = vrot.slane %v715, 1
      %v717 = vmax.f32 %v715, %v716
      %v718 = vsel %vm451, %v425, -inf
      %v719 = vrot.slane %v718, 4
      %v720 = vmax.f32 %v718, %v719
      %v721 = vrot.slane %v720, 2
      %v722 = vmax.f32 %v720, %v721
      %v723 = vrot.slane %v722, 1
      %v724 = vmax.f32 %v722, %v723
      %v725 = vsel %vm451, %v426, -inf
      %v726 = vrot.slane %v725, 4
      %v727 = vmax.f32 %v725, %v726
      %v728 = vrot.slane %v727, 2
      %v729 = vmax.f32 %v727, %v728
      %v730 = vrot.slane %v729, 1
      %v731 = vmax.f32 %v729, %v730
      %v732 = vsel %vm451, %v427, -inf
      %v733 = vrot.slane %v732, 4
      %v734 = vmax.f32 %v732, %v733
      %v735 = vrot.slane %v734, 2
      %v736 = vmax.f32 %v734, %v735
      %v737 = vrot.slane %v736, 1
      %v738 = vmax.f32 %v736, %v737
      %v739 = vsel %vm451, %v428, -inf
      %v740 = vrot.slane %v739, 4
      %v741 = vmax.f32 %v739, %v740
      %v742 = vrot.slane %v741, 2
      %v743 = vmax.f32 %v741, %v742
      %v744 = vrot.slane %v743, 1
      %v745 = vmax.f32 %v743, %v744
      %v746 = vsel %vm451, %v429, -inf
      %v747 = vrot.slane %v746, 4
      %v748 = vmax.f32 %v746, %v747
      %v749 = vrot.slane %v748, 2
      %v750 = vmax.f32 %v748, %v749
      %v751 = vrot.slane %v750, 1
      %v752 = vmax.f32 %v750, %v751
      %v753 = vsel %vm451, %v430, -inf
      %v754 = vrot.slane %v753, 4
      %v755 = vmax.f32 %v753, %v754
      %v756 = vrot.slane %v755, 2
      %v757 = vmax.f32 %v755, %v756
      %v758 = vrot.slane %v757, 1
      %v759 = vmax.f32 %v757, %v758
      %v760 = vsel %vm451, %v431, -inf
      %v761 = vrot.slane %v760, 4
      %v762 = vmax.f32 %v760, %v761
      %v763 = vrot.slane %v762, 2
      %v764 = vmax.f32 %v762, %v763
      %v765 = vrot.slane %v764, 1
      %v766 = vmax.f32 %v764, %v765
      %v767 = vsel %vm451, %v432, -inf
      %v768 = vrot.slane %v767, 4
      %v769 = vmax.f32 %v767, %v768
      %v770 = vrot.slane %v769, 2
      %v771 = vmax.f32 %v769, %v770
      %v772 = vrot.slane %v771, 1
      %v773 = vmax.f32 %v771, %v772
      %v774 = vsel %vm451, %v433, -inf
      %v775 = vrot.slane %v774, 4
      %v776 = vmax.f32 %v774, %v775
      %v777 = vrot.slane %v776, 2
      %v778 = vmax.f32 %v776, %v777
      %v779 = vrot.slane %v778, 1
      %v780 = vmax.f32 %v778, %v779
      %v781 = vsel %vm451, %v434, -inf
      %v782 = vrot.slane %v781, 4
      %v783 = vmax.f32 %v781, %v782
      %v784 = vrot.slane %v783, 2
      %v785 = vmax.f32 %v783, %v784
      %v786 = vrot.slane %v785, 1
      %v787 = vmax.f32 %v785, %v786
      %v788 = vsel %vm451, %v435, -inf
      %v789 = vrot.slane %v788, 4
      %v790 = vmax.f32 %v788, %v789
      %v791 = vrot.slane %v790, 2
      %v792 = vmax.f32 %v790, %v791
      %v793 = vrot.slane %v792, 1
      %v794 = vmax.f32 %v792, %v793
      %v795 = vsel %vm451, %v436, -inf
      %v796 = vrot.slane %v795, 4
      %v797 = vmax.f32 %v795, %v796
      %v798 = vrot.slane %v797, 2
      %v799 = vmax.f32 %v797, %v798
      %v800 = vrot.slane %v799, 1
      %v801 = vmax.f32 %v799, %v800
      %v802 = vsel %vm451, %v437, -inf
      %v803 = vrot.slane %v802, 4
      %v804 = vmax.f32 %v802, %v803
      %v805 = vrot.slane %v804, 2
      %v806 = vmax.f32 %v804, %v805
      %v807 = vrot.slane %v806, 1
      %v808 = vmax.f32 %v806, %v807
      %v809 = vsel %vm451, %v438, -inf
      %v810 = vrot.slane %v809, 4
      %v811 = vmax.f32 %v809, %v810
      %v812 = vrot.slane %v811, 2
      %v813 = vmax.f32 %v811, %v812
      %v814 = vrot.slane %v813, 1
      %v815 = vmax.f32 %v813, %v814
      %v816 = vsel %vm451, %v439, -inf
      %v817 = vrot.slane %v816, 4
      %v818 = vmax.f32 %v816, %v817
      %v819 = vrot.slane %v818, 2
      %v820 = vmax.f32 %v818, %v819
      %v821 = vrot.slane %v820, 1
      %v822 = vmax.f32 %v820, %v821
      %v823 = vsel %vm451, %v440, -inf
      %v824 = vrot.slane %v823, 4
      %v825 = vmax.f32 %v823, %v824
      %v826 = vrot.slane %v825, 2
      %v827 = vmax.f32 %v825, %v826
      %v828 = vrot.slane %v827, 1
      %v829 = vmax.f32 %v827, %v828
      %v830 = vsel %vm451, %v441, -inf
      %v831 = vrot.slane %v830, 4
      %v832 = vmax.f32 %v830, %v831
      %v833 = vrot.slane %v832, 2
      %v834 = vmax.f32 %v832, %v833
      %v835 = vrot.slane %v834, 1
      %v836 = vmax.f32 %v834, %v835
      %v837 = vsel %vm451, %v442, -inf
      %v838 = vrot.slane %v837, 4
      %v839 = vmax.f32 %v837, %v838
      %v840 = vrot.slane %v839, 2
      %v841 = vmax.f32 %v839, %v840
      %v842 = vrot.slane %v841, 1
      %v843 = vmax.f32 %v841, %v842
      %v844 = vsel %vm451, %v443, -inf
      %v845 = vrot.slane %v844, 4
      %v846 = vmax.f32 %v844, %v845
      %v847 = vrot.slane %v846, 2
      %v848 = vmax.f32 %v846, %v847
      %v849 = vrot.slane %v848, 1
      %v850 = vmax.f32 %v848, %v849
      %v851 = vsel %vm451, %v444, -inf
      %v852 = vrot.slane %v851, 4
      %v853 = vmax.f32 %v851, %v852
      %v854 = vrot.slane %v853, 2
      %v855 = vmax.f32 %v853, %v854
      %v856 = vrot.slane %v855, 1
      %v857 = vmax.f32 %v855, %v856
      %v858 = vsel %vm451, %v445, -inf
      %v859 = vrot.slane %v858, 4
      %v860 = vmax.f32 %v858, %v859
      %v861 = vrot.slane %v860, 2
      %v862 = vmax.f32 %v860, %v861
      %v863 = vrot.slane %v862, 1
      %v864 = vmax.f32 %v862, %v863
      %v865 = vsel %vm451, %v446, -inf
      %v866 = vrot.slane %v865, 4
      %v867 = vmax.f32 %v865, %v866
      %v868 = vrot.slane %v867, 2
      %v869 = vmax.f32 %v867, %v868
      %v870 = vrot.slane %v869, 1
      %v871 = vmax.f32 %v869, %v870
      %v872 = vsel %vm451, %v447, -inf
      %v873 = vrot.slane %v872, 4
      %v874 = vmax.f32 %v872, %v873
      %v875 = vrot.slane %v874, 2
      %v876 = vmax.f32 %v874, %v875
      %v877 = vrot.slane %v876, 1
      %v878 = vmax.f32 %v876, %v877
      %v879 = vsel %vm451, %v448, -inf
      %v880 = vrot.slane %v879, 4
      %v881 = vmax.f32 %v879, %v880
      %v882 = vrot.slane %v881, 2
      %v883 = vmax.f32 %v881, %v882
      %v884 = vrot.slane %v883, 1
      %v885 = vmax.f32 %v883, %v884
      %v886 = vsel %vm451, %v449, -inf
      %v887 = vrot.slane %v886, 4
      %v888 = vmax.f32 %v886, %v887
      %v889 = vrot.slane %v888, 2
      %v890 = vmax.f32 %v888, %v889
      %v891 = vrot.slane %v890, 1
      %v892 = vmax.f32 %v890, %v891
      %v893 = vsel %vm451, %v450, -inf
      %v894 = vrot.slane %v893, 4
      %v895 = vmax.f32 %v893, %v894
      %v896 = vrot.slane %v895, 2
      %v897 = vmax.f32 %v895, %v896
      %v898 = vrot.slane %v897, 1
      %v899 = vmax.f32 %v897, %v898
      %v900 = vpack.c.bf16 %v458, %v458
      %v901 = vpack.c.bf16 %v465, %v465
      %v902 = vpack.c.bf16 %v472, %v472
      %v903 = vpack.c.bf16 %v479, %v479
      %v904 = vpack.c.bf16 %v486, %v486
      %v905 = vpack.c.bf16 %v493, %v493
      %v906 = vpack.c.bf16 %v500, %v500
      %v907 = vpack.c.bf16 %v507, %v507
      %v908 = vpack.c.bf16 %v514, %v514
      %v909 = vpack.c.bf16 %v521, %v521
      %v910 = vpack.c.bf16 %v528, %v528
      %v911 = vpack.c.bf16 %v535, %v535
      %v912 = vpack.c.bf16 %v542, %v542
      %v913 = vpack.c.bf16 %v549, %v549
      %v914 = vpack.c.bf16 %v556, %v556
      %v915 = vpack.c.bf16 %v563, %v563
      %v916 = vpack.c.bf16 %v570, %v570
      %v917 = vpack.c.bf16 %v577, %v577
      %v918 = vpack.c.bf16 %v584, %v584
      %v919 = vpack.c.bf16 %v591, %v591
      %v920 = vpack.c.bf16 %v598, %v598
      %v921 = vpack.c.bf16 %v605, %v605
      %v922 = vpack.c.bf16 %v612, %v612
      %v923 = vpack.c.bf16 %v619, %v619
      %v924 = vpack.c.bf16 %v626, %v626
      %v925 = vpack.c.bf16 %v633, %v633
      %v926 = vpack.c.bf16 %v640, %v640
      %v927 = vpack.c.bf16 %v647, %v647
      %v928 = vpack.c.bf16 %v654, %v654
      %v929 = vpack.c.bf16 %v661, %v661
      %v930 = vpack.c.bf16 %v668, %v668
      %v931 = vpack.c.bf16 %v675, %v675
      %v932 = vpack.c.bf16 %v682, %v682
      %v933 = vpack.c.bf16 %v689, %v689
      %v934 = vpack.c.bf16 %v696, %v696
      %v935 = vpack.c.bf16 %v703, %v703
      %v936 = vpack.c.bf16 %v710, %v710
      %v937 = vpack.c.bf16 %v717, %v717
      %v938 = vpack.c.bf16 %v724, %v724
      %v939 = vpack.c.bf16 %v731, %v731
      %v940 = vpack.c.bf16 %v738, %v738
      %v941 = vpack.c.bf16 %v745, %v745
      %v942 = vpack.c.bf16 %v752, %v752
      %v943 = vpack.c.bf16 %v759, %v759
      %v944 = vpack.c.bf16 %v766, %v766
      %v945 = vpack.c.bf16 %v773, %v773
      %v946 = vpack.c.bf16 %v780, %v780
      %v947 = vpack.c.bf16 %v787, %v787
      %v948 = vpack.c.bf16 %v794, %v794
      %v949 = vpack.c.bf16 %v801, %v801
      %v950 = vpack.c.bf16 %v808, %v808
      %v951 = vpack.c.bf16 %v815, %v815
      %v952 = vpack.c.bf16 %v822, %v822
      %v953 = vpack.c.bf16 %v829, %v829
      %v954 = vpack.c.bf16 %v836, %v836
      %v955 = vpack.c.bf16 %v843, %v843
      %v956 = vpack.c.bf16 %v850, %v850
      %v957 = vpack.c.bf16 %v857, %v857
      %v958 = vpack.c.bf16 %v864, %v864
      %v959 = vpack.c.bf16 %v871, %v871
      %v960 = vpack.c.bf16 %v878, %v878
      %v961 = vpack.c.bf16 %v885, %v885
      %v962 = vpack.c.bf16 %v892, %v892
      %v963 = vpack.c.bf16 %v899, %v899
      %v964 = vunpack.c.l.bf16 %v900
      %v965 = vunpack.c.l.bf16 %v901
      %v966 = vunpack.c.l.bf16 %v902
      %v967 = vunpack.c.l.bf16 %v903
      %v968 = vunpack.c.l.bf16 %v904
      %v969 = vunpack.c.l.bf16 %v905
      %v970 = vunpack.c.l.bf16 %v906
      %v971 = vunpack.c.l.bf16 %v907
      %v972 = vunpack.c.l.bf16 %v908
      %v973 = vunpack.c.l.bf16 %v909
      %v974 = vunpack.c.l.bf16 %v910
      %v975 = vunpack.c.l.bf16 %v911
      %v976 = vunpack.c.l.bf16 %v912
      %v977 = vunpack.c.l.bf16 %v913
      %v978 = vunpack.c.l.bf16 %v914
      %v979 = vunpack.c.l.bf16 %v915
      %v980 = vunpack.c.l.bf16 %v916
      %v981 = vunpack.c.l.bf16 %v917
      %v982 = vunpack.c.l.bf16 %v918
      %v983 = vunpack.c.l.bf16 %v919
      %v984 = vunpack.c.l.bf16 %v920
      %v985 = vunpack.c.l.bf16 %v921
      %v986 = vunpack.c.l.bf16 %v922
      %v987 = vunpack.c.l.bf16 %v923
      %v988 = vunpack.c.l.bf16 %v924
      %v989 = vunpack.c.l.bf16 %v925
      %v990 = vunpack.c.l.bf16 %v926
      %v991 = vunpack.c.l.bf16 %v927
      %v992 = vunpack.c.l.bf16 %v928
      %v993 = vunpack.c.l.bf16 %v929
      %v994 = vunpack.c.l.bf16 %v930
      %v995 = vunpack.c.l.bf16 %v931
      %v996 = vunpack.c.l.bf16 %v932
      %v997 = vunpack.c.l.bf16 %v933
      %v998 = vunpack.c.l.bf16 %v934
      %v999 = vunpack.c.l.bf16 %v935
      %v1000 = vunpack.c.l.bf16 %v936
      %v1001 = vunpack.c.l.bf16 %v937
      %v1002 = vunpack.c.l.bf16 %v938
      %v1003 = vunpack.c.l.bf16 %v939
      %v1004 = vunpack.c.l.bf16 %v940
      %v1005 = vunpack.c.l.bf16 %v941
      %v1006 = vunpack.c.l.bf16 %v942
      %v1007 = vunpack.c.l.bf16 %v943
      %v1008 = vunpack.c.l.bf16 %v944
      %v1009 = vunpack.c.l.bf16 %v945
      %v1010 = vunpack.c.l.bf16 %v946
      %v1011 = vunpack.c.l.bf16 %v947
      %v1012 = vunpack.c.l.bf16 %v948
      %v1013 = vunpack.c.l.bf16 %v949
      %v1014 = vunpack.c.l.bf16 %v950
      %v1015 = vunpack.c.l.bf16 %v951
      %v1016 = vunpack.c.l.bf16 %v952
      %v1017 = vunpack.c.l.bf16 %v953
      %v1018 = vunpack.c.l.bf16 %v954
      %v1019 = vunpack.c.l.bf16 %v955
      %v1020 = vunpack.c.l.bf16 %v956
      %v1021 = vunpack.c.l.bf16 %v957
      %v1022 = vunpack.c.l.bf16 %v958
      %v1023 = vunpack.c.l.bf16 %v959
      %v1024 = vunpack.c.l.bf16 %v960
      %v1025 = vunpack.c.l.bf16 %v961
      %v1026 = vunpack.c.l.bf16 %v962
      %v1027 = vunpack.c.l.bf16 %v963
      %vm1028 = vcmask 31744
      %v1029 = vsel %vm1028, %v964, -inf
      %v1030 = vsel %vm1028, %v972, -inf
      %v1031 = vmax.f32 %v1029, %v1030
      %v1032 = vsel %vm1028, %v965, -inf
      %v1033 = vsel %vm1028, %v973, -inf
      %v1034 = vmax.f32 %v1032, %v1033
      %v1035 = vsel %vm1028, %v966, -inf
      %v1036 = vsel %vm1028, %v974, -inf
      %v1037 = vmax.f32 %v1035, %v1036
      %v1038 = vsel %vm1028, %v967, -inf
      %v1039 = vsel %vm1028, %v975, -inf
      %v1040 = vmax.f32 %v1038, %v1039
      %v1041 = vsel %vm1028, %v968, -inf
      %v1042 = vsel %vm1028, %v976, -inf
      %v1043 = vmax.f32 %v1041, %v1042
      %v1044 = vsel %vm1028, %v969, -inf
      %v1045 = vsel %vm1028, %v977, -inf
      %v1046 = vmax.f32 %v1044, %v1045
      %v1047 = vsel %vm1028, %v970, -inf
      %v1048 = vsel %vm1028, %v978, -inf
      %v1049 = vmax.f32 %v1047, %v1048
      %v1050 = vsel %vm1028, %v971, -inf
      %v1051 = vsel %vm1028, %v979, -inf
      %v1052 = vmax.f32 %v1050, %v1051
      %v1053 = vsel %vm1028, %v980, -inf
      %v1054 = vsel %vm1028, %v988, -inf
      %v1055 = vmax.f32 %v1053, %v1054
      %v1056 = vsel %vm1028, %v981, -inf
      %v1057 = vsel %vm1028, %v989, -inf
      %v1058 = vmax.f32 %v1056, %v1057
      %v1059 = vsel %vm1028, %v982, -inf
      %v1060 = vsel %vm1028, %v990, -inf
      %v1061 = vmax.f32 %v1059, %v1060
      %v1062 = vsel %vm1028, %v983, -inf
      %v1063 = vsel %vm1028, %v991, -inf
      %v1064 = vmax.f32 %v1062, %v1063
      %v1065 = vsel %vm1028, %v984, -inf
      %v1066 = vsel %vm1028, %v992, -inf
      %v1067 = vmax.f32 %v1065, %v1066
      %v1068 = vsel %vm1028, %v985, -inf
      %v1069 = vsel %vm1028, %v993, -inf
      %v1070 = vmax.f32 %v1068, %v1069
      %v1071 = vsel %vm1028, %v986, -inf
      %v1072 = vsel %vm1028, %v994, -inf
      %v1073 = vmax.f32 %v1071, %v1072
      %v1074 = vsel %vm1028, %v987, -inf
      %v1075 = vsel %vm1028, %v995, -inf
      %v1076 = vmax.f32 %v1074, %v1075
      %v1077 = vsel %vm1028, %v996, -inf
      %v1078 = vsel %vm1028, %v1004, -inf
      %v1079 = vmax.f32 %v1077, %v1078
      %v1080 = vsel %vm1028, %v997, -inf
      %v1081 = vsel %vm1028, %v1005, -inf
      %v1082 = vmax.f32 %v1080, %v1081
      %v1083 = vsel %vm1028, %v998, -inf
      %v1084 = vsel %vm1028, %v1006, -inf
      %v1085 = vmax.f32 %v1083, %v1084
      %v1086 = vsel %vm1028, %v999, -inf
      %v1087 = vsel %vm1028, %v1007, -inf
      %v1088 = vmax.f32 %v1086, %v1087
      %v1089 = vsel %vm1028, %v1000, -inf
      %v1090 = vsel %vm1028, %v1008, -inf
      %v1091 = vmax.f32 %v1089, %v1090
      %v1092 = vsel %vm1028, %v1001, -inf
      %v1093 = vsel %vm1028, %v1009, -inf
      %v1094 = vmax.f32 %v1092, %v1093
      %v1095 = vsel %vm1028, %v1002, -inf
      %v1096 = vsel %vm1028, %v1010, -inf
      %v1097 = vmax.f32 %v1095, %v1096
      %v1098 = vsel %vm1028, %v1003, -inf
      %v1099 = vsel %vm1028, %v1011, -inf
      %v1100 = vmax.f32 %v1098, %v1099
      %v1101 = vsel %vm1028, %v1012, -inf
      %v1102 = vsel %vm1028, %v1020, -inf
      %v1103 = vmax.f32 %v1101, %v1102
      %v1104 = vsel %vm1028, %v1013, -inf
      %v1105 = vsel %vm1028, %v1021, -inf
      %v1106 = vmax.f32 %v1104, %v1105
      %v1107 = vsel %vm1028, %v1014, -inf
      %v1108 = vsel %vm1028, %v1022, -inf
      %v1109 = vmax.f32 %v1107, %v1108
      %v1110 = vsel %vm1028, %v1015, -inf
      %v1111 = vsel %vm1028, %v1023, -inf
      %v1112 = vmax.f32 %v1110, %v1111
      %v1113 = vsel %vm1028, %v1016, -inf
      %v1114 = vsel %vm1028, %v1024, -inf
      %v1115 = vmax.f32 %v1113, %v1114
      %v1116 = vsel %vm1028, %v1017, -inf
      %v1117 = vsel %vm1028, %v1025, -inf
      %v1118 = vmax.f32 %v1116, %v1117
      %v1119 = vsel %vm1028, %v1018, -inf
      %v1120 = vsel %vm1028, %v1026, -inf
      %v1121 = vmax.f32 %v1119, %v1120
      %v1122 = vsel %vm1028, %v1019, -inf
      %v1123 = vsel %vm1028, %v1027, -inf
      %v1124 = vmax.f32 %v1122, %v1123
      %v1125 = vpack.c.bf16 %v1031, %v1031
      %v1126 = vpack.c.bf16 %v1034, %v1034
      %v1127 = vpack.c.bf16 %v1037, %v1037
      %v1128 = vpack.c.bf16 %v1040, %v1040
      %v1129 = vpack.c.bf16 %v1043, %v1043
      %v1130 = vpack.c.bf16 %v1046, %v1046
      %v1131 = vpack.c.bf16 %v1049, %v1049
      %v1132 = vpack.c.bf16 %v1052, %v1052
      %v1133 = vpack.c.bf16 %v1055, %v1055
      %v1134 = vpack.c.bf16 %v1058, %v1058
      %v1135 = vpack.c.bf16 %v1061, %v1061
      %v1136 = vpack.c.bf16 %v1064, %v1064
      %v1137 = vpack.c.bf16 %v1067, %v1067
      %v1138 = vpack.c.bf16 %v1070, %v1070
      %v1139 = vpack.c.bf16 %v1073, %v1073
      %v1140 = vpack.c.bf16 %v1076, %v1076
      %v1141 = vpack.c.bf16 %v1079, %v1079
      %v1142 = vpack.c.bf16 %v1082, %v1082
      %v1143 = vpack.c.bf16 %v1085, %v1085
      %v1144 = vpack.c.bf16 %v1088, %v1088
      %v1145 = vpack.c.bf16 %v1091, %v1091
      %v1146 = vpack.c.bf16 %v1094, %v1094
      %v1147 = vpack.c.bf16 %v1097, %v1097
      %v1148 = vpack.c.bf16 %v1100, %v1100
      %v1149 = vpack.c.bf16 %v1103, %v1103
      %v1150 = vpack.c.bf16 %v1106, %v1106
      %v1151 = vpack.c.bf16 %v1109, %v1109
      %v1152 = vpack.c.bf16 %v1112, %v1112
      %v1153 = vpack.c.bf16 %v1115, %v1115
      %v1154 = vpack.c.bf16 %v1118, %v1118
      %v1155 = vpack.c.bf16 %v1121, %v1121
      %v1156 = vpack.c.bf16 %v1124, %v1124
      %v1157 = vunpack.c.l.bf16 %v1125
      %v1158 = vunpack.c.l.bf16 %v1126
      %v1159 = vunpack.c.l.bf16 %v1127
      %v1160 = vunpack.c.l.bf16 %v1128
      %v1161 = vunpack.c.l.bf16 %v1129
      %v1162 = vunpack.c.l.bf16 %v1130
      %v1163 = vunpack.c.l.bf16 %v1131
      %v1164 = vunpack.c.l.bf16 %v1132
      %v1165 = vunpack.c.l.bf16 %v1133
      %v1166 = vunpack.c.l.bf16 %v1134
      %v1167 = vunpack.c.l.bf16 %v1135
      %v1168 = vunpack.c.l.bf16 %v1136
      %v1169 = vunpack.c.l.bf16 %v1137
      %v1170 = vunpack.c.l.bf16 %v1138
      %v1171 = vunpack.c.l.bf16 %v1139
      %v1172 = vunpack.c.l.bf16 %v1140
      %v1173 = vunpack.c.l.bf16 %v1141
      %v1174 = vunpack.c.l.bf16 %v1142
      %v1175 = vunpack.c.l.bf16 %v1143
      %v1176 = vunpack.c.l.bf16 %v1144
      %v1177 = vunpack.c.l.bf16 %v1145
      %v1178 = vunpack.c.l.bf16 %v1146
      %v1179 = vunpack.c.l.bf16 %v1147
      %v1180 = vunpack.c.l.bf16 %v1148
      %v1181 = vunpack.c.l.bf16 %v1149
      %v1182 = vunpack.c.l.bf16 %v1150
      %v1183 = vunpack.c.l.bf16 %v1151
      %v1184 = vunpack.c.l.bf16 %v1152
      %v1185 = vunpack.c.l.bf16 %v1153
      %v1186 = vunpack.c.l.bf16 %v1154
      %v1187 = vunpack.c.l.bf16 %v1155
      %v1188 = vunpack.c.l.bf16 %v1156
      %vm1221 = vcmask 1041409
      %v1222 = vsel %vm1221, %v1158, %v1157
      %vm1223 = vcmask 1042434
      %v1224 = vsel %vm1223, %v1159, %v1222
      %vm1225 = vcmask 1043459
      %v1226 = vsel %vm1225, %v1160, %v1224
      %vm1227 = vcmask 1044484
      %v1228 = vsel %vm1227, %v1161, %v1226
      %vm1229 = vcmask 1045509
      %v1230 = vsel %vm1229, %v1162, %v1228
      %vm1231 = vcmask 1046534
      %v1232 = vsel %vm1231, %v1163, %v1230
      %vm1233 = vcmask 1047559
      %v1234 = vsel %vm1233, %v1164, %v1232
      %v1235 = vsel %vm1221, %v1166, %v1165
      %v1236 = vsel %vm1223, %v1167, %v1235
      %v1237 = vsel %vm1225, %v1168, %v1236
      %v1238 = vsel %vm1227, %v1169, %v1237
      %v1239 = vsel %vm1229, %v1170, %v1238
      %v1240 = vsel %vm1231, %v1171, %v1239
      %v1241 = vsel %vm1233, %v1172, %v1240
      %v1242 = vsel %vm1221, %v1174, %v1173
      %v1243 = vsel %vm1223, %v1175, %v1242
      %v1244 = vsel %vm1225, %v1176, %v1243
      %v1245 = vsel %vm1227, %v1177, %v1244
      %v1246 = vsel %vm1229, %v1178, %v1245
      %v1247 = vsel %vm1231, %v1179, %v1246
      %v1248 = vsel %vm1233, %v1180, %v1247
      %v1249 = vsel %vm1221, %v1182, %v1181
      %v1250 = vsel %vm1223, %v1183, %v1249
      %v1251 = vsel %vm1225, %v1184, %v1250
      %v1252 = vsel %vm1227, %v1185, %v1251
      %v1253 = vsel %vm1229, %v1186, %v1252
      %v1254 = vsel %vm1231, %v1187, %v1253
      %v1255 = vsel %vm1233, %v1188, %v1254
      %1260 = vst.msk [vmem:[#allocation2] sm:$0xff] %vm1028, %v1234
      %1261 = vst.msk [vmem:[#allocation2 + $0x8] sm:$0xff] %vm1028, %v1241
      %1262 = vst.msk [vmem:[#allocation2 + $0x10] sm:$0xff] %vm1028, %v1248
      %1263 = vst.msk [vmem:[#allocation2 + $0x18] sm:$0xff] %vm1028, %v1255
      %v1264 = vld [vmem:[%s311] sm:$0x1]
      %v1265 = vld [vmem:[%s311 + $0x1] sm:$0x1]
      %v1266 = vld [vmem:[%s311 + $0x2] sm:$0x1]
      %v1267 = vld [vmem:[%s311 + $0x3] sm:$0x1]
      %v1268 = vld [vmem:[%s311 + $0x4] sm:$0x1]
      %v1269 = vld [vmem:[%s311 + $0x5] sm:$0x1]
      %v1270 = vld [vmem:[%s311 + $0x6] sm:$0x1]
      %v1271 = vld [vmem:[%s311 + $0x7] sm:$0x1]
      %v1272 = vld [vmem:[%s311 + $0x8] sm:$0x1]
      %v1273 = vld [vmem:[%s311 + $0x9] sm:$0x1]
      %v1274 = vld [vmem:[%s311 + $0xa] sm:$0x1]
      %v1275 = vld [vmem:[%s311 + $0xb] sm:$0x1]
      %v1276 = vld [vmem:[%s311 + $0xc] sm:$0x1]
      %v1277 = vld [vmem:[%s311 + $0xd] sm:$0x1]
      %v1278 = vld [vmem:[%s311 + $0xe] sm:$0x1]
      %v1279 = vld [vmem:[%s311 + $0xf] sm:$0x1]
      %v1280 = vld [vmem:[%s311 + $0x10] sm:$0x1]
      %v1281 = vld [vmem:[%s311 + $0x11] sm:$0x1]
      %v1282 = vld [vmem:[%s311 + $0x12] sm:$0x1]
      %v1283 = vld [vmem:[%s311 + $0x13] sm:$0x1]
      %v1284 = vld [vmem:[%s311 + $0x14] sm:$0x1]
      %v1285 = vld [vmem:[%s311 + $0x15] sm:$0x1]
      %v1286 = vld [vmem:[%s311 + $0x16] sm:$0x1]
      %v1287 = vld [vmem:[%s311 + $0x17] sm:$0x1]
      %v1288 = vld [vmem:[%s311 + $0x18] sm:$0x1]
      %v1289 = vld [vmem:[%s311 + $0x19] sm:$0x1]
      %v1290 = vld [vmem:[%s311 + $0x1a] sm:$0x1]
      %v1291 = vld [vmem:[%s311 + $0x1b] sm:$0x1]
      %v1292 = vld [vmem:[%s311 + $0x1c] sm:$0x1]
      %v1293 = vld [vmem:[%s311 + $0x1d] sm:$0x1]
      %v1294 = vld [vmem:[%s311 + $0x1e] sm:$0x1]
      %v1295 = vld [vmem:[%s311 + $0x1f] sm:$0x1]
      %v1296 = vld [vmem:[%s311 + $0x20] sm:$0x1]
      %v1297 = vld [vmem:[%s311 + $0x21] sm:$0x1]
      %v1298 = vld [vmem:[%s311 + $0x22] sm:$0x1]
      %v1299 = vld [vmem:[%s311 + $0x23] sm:$0x1]
      %v1300 = vld [vmem:[%s311 + $0x24] sm:$0x1]
      %v1301 = vld [vmem:[%s311 + $0x25] sm:$0x1]
      %v1302 = vld [vmem:[%s311 + $0x26] sm:$0x1]
      %v1303 = vld [vmem:[%s311 + $0x27] sm:$0x1]
      %v1304 = vld [vmem:[%s311 + $0x28] sm:$0x1]
      %v1305 = vld [vmem:[%s311 + $0x29] sm:$0x1]
      %v1306 = vld [vmem:[%s311 + $0x2a] sm:$0x1]
      %v1307 = vld [vmem:[%s311 + $0x2b] sm:$0x1]
      %v1308 = vld [vmem:[%s311 + $0x2c] sm:$0x1]
      %v1309 = vld [vmem:[%s311 + $0x2d] sm:$0x1]
      %v1310 = vld [vmem:[%s311 + $0x2e] sm:$0x1]
      %v1311 = vld [vmem:[%s311 + $0x2f] sm:$0x1]
      %v1312 = vld [vmem:[%s311 + $0x30] sm:$0x1]
      %v1313 = vld [vmem:[%s311 + $0x31] sm:$0x1]
      %v1314 = vld [vmem:[%s311 + $0x32] sm:$0x1]
      %v1315 = vld [vmem:[%s311 + $0x33] sm:$0x1]
      %v1316 = vld [vmem:[%s311 + $0x34] sm:$0x1]
      %v1317 = vld [vmem:[%s311 + $0x35] sm:$0x1]
      %v1318 = vld [vmem:[%s311 + $0x36] sm:$0x1]
      %v1319 = vld [vmem:[%s311 + $0x37] sm:$0x1]
      %v1320 = vld [vmem:[%s311 + $0x38] sm:$0x1]
      %v1321 = vld [vmem:[%s311 + $0x39] sm:$0x1]
      %v1322 = vld [vmem:[%s311 + $0x3a] sm:$0x1]
      %v1323 = vld [vmem:[%s311 + $0x3b] sm:$0x1]
      %v1324 = vld [vmem:[%s311 + $0x3c] sm:$0x1]
      %v1325 = vld [vmem:[%s311 + $0x3d] sm:$0x1]
      %v1326 = vld [vmem:[%s311 + $0x3e] sm:$0x1]
      %v1327 = vld [vmem:[%s311 + $0x3f] sm:$0x1]
      %v1328 = vunpack.c.l.bf16 %v1264
      %v1329 = vunpack.c.l.bf16 %v1265
      %v1330 = vunpack.c.l.bf16 %v1266
      %v1331 = vunpack.c.l.bf16 %v1267
      %v1332 = vunpack.c.l.bf16 %v1268
      %v1333 = vunpack.c.l.bf16 %v1269
      %v1334 = vunpack.c.l.bf16 %v1270
      %v1335 = vunpack.c.l.bf16 %v1271
      %v1336 = vunpack.c.l.bf16 %v1272
      %v1337 = vunpack.c.l.bf16 %v1273
      %v1338 = vunpack.c.l.bf16 %v1274
      %v1339 = vunpack.c.l.bf16 %v1275
      %v1340 = vunpack.c.l.bf16 %v1276
      %v1341 = vunpack.c.l.bf16 %v1277
      %v1342 = vunpack.c.l.bf16 %v1278
      %v1343 = vunpack.c.l.bf16 %v1279
      %v1344 = vunpack.c.l.bf16 %v1280
      %v1345 = vunpack.c.l.bf16 %v1281
      %v1346 = vunpack.c.l.bf16 %v1282
      %v1347 = vunpack.c.l.bf16 %v1283
      %v1348 = vunpack.c.l.bf16 %v1284
      %v1349 = vunpack.c.l.bf16 %v1285
      %v1350 = vunpack.c.l.bf16 %v1286
      %v1351 = vunpack.c.l.bf16 %v1287
      %v1352 = vunpack.c.l.bf16 %v1288
      %v1353 = vunpack.c.l.bf16 %v1289
      %v1354 = vunpack.c.l.bf16 %v1290
      %v1355 = vunpack.c.l.bf16 %v1291
      %v1356 = vunpack.c.l.bf16 %v1292
      %v1357 = vunpack.c.l.bf16 %v1293
      %v1358 = vunpack.c.l.bf16 %v1294
      %v1359 = vunpack.c.l.bf16 %v1295
      %v1360 = vunpack.c.l.bf16 %v1296
      %v1361 = vunpack.c.l.bf16 %v1297
      %v1362 = vunpack.c.l.bf16 %v1298
      %v1363 = vunpack.c.l.bf16 %v1299
      %v1364 = vunpack.c.l.bf16 %v1300
      %v1365 = vunpack.c.l.bf16 %v1301
      %v1366 = vunpack.c.l.bf16 %v1302
      %v1367 = vunpack.c.l.bf16 %v1303
      %v1368 = vunpack.c.l.bf16 %v1304
      %v1369 = vunpack.c.l.bf16 %v1305
      %v1370 = vunpack.c.l.bf16 %v1306
      %v1371 = vunpack.c.l.bf16 %v1307
      %v1372 = vunpack.c.l.bf16 %v1308
      %v1373 = vunpack.c.l.bf16 %v1309
      %v1374 = vunpack.c.l.bf16 %v1310
      %v1375 = vunpack.c.l.bf16 %v1311
      %v1376 = vunpack.c.l.bf16 %v1312
      %v1377 = vunpack.c.l.bf16 %v1313
      %v1378 = vunpack.c.l.bf16 %v1314
      %v1379 = vunpack.c.l.bf16 %v1315
      %v1380 = vunpack.c.l.bf16 %v1316
      %v1381 = vunpack.c.l.bf16 %v1317
      %v1382 = vunpack.c.l.bf16 %v1318
      %v1383 = vunpack.c.l.bf16 %v1319
      %v1384 = vunpack.c.l.bf16 %v1320
      %v1385 = vunpack.c.l.bf16 %v1321
      %v1386 = vunpack.c.l.bf16 %v1322
      %v1387 = vunpack.c.l.bf16 %v1323
      %v1388 = vunpack.c.l.bf16 %v1324
      %v1389 = vunpack.c.l.bf16 %v1325
      %v1390 = vunpack.c.l.bf16 %v1326
      %v1391 = vunpack.c.l.bf16 %v1327
      %v1392 = vsel %vm451, %v1328, -inf
      %v1393 = vrot.slane %v1392, 4
      %v1394 = vmax.f32 %v1392, %v1393
      %v1395 = vrot.slane %v1394, 2
      %v1396 = vmax.f32 %v1394, %v1395
      %v1397 = vrot.slane %v1396, 1
      %v1398 = vmax.f32 %v1396, %v1397
      %v1399 = vsel %vm451, %v1329, -inf
      %v1400 = vrot.slane %v1399, 4
      %v1401 = vmax.f32 %v1399, %v1400
      %v1402 = vrot.slane %v1401, 2
      %v1403 = vmax.f32 %v1401, %v1402
      %v1404 = vrot.slane %v1403, 1
      %v1405 = vmax.f32 %v1403, %v1404
      %v1406 = vsel %vm451, %v1330, -inf
      %v1407 = vrot.slane %v1406, 4
      %v1408 = vmax.f32 %v1406, %v1407
      %v1409 = vrot.slane %v1408, 2
      %v1410 = vmax.f32 %v1408, %v1409
      %v1411 = vrot.slane %v1410, 1
      %v1412 = vmax.f32 %v1410, %v1411
      %v1413 = vsel %vm451, %v1331, -inf
      %v1414 = vrot.slane %v1413, 4
      %v1415 = vmax.f32 %v1413, %v1414
      %v1416 = vrot.slane %v1415, 2
      %v1417 = vmax.f32 %v1415, %v1416
      %v1418 = vrot.slane %v1417, 1
      %v1419 = vmax.f32 %v1417, %v1418
      %v1420 = vsel %vm451, %v1332, -inf
      %v1421 = vrot.slane %v1420, 4
      %v1422 = vmax.f32 %v1420, %v1421
      %v1423 = vrot.slane %v1422, 2
      %v1424 = vmax.f32 %v1422, %v1423
      %v1425 = vrot.slane %v1424, 1
      %v1426 = vmax.f32 %v1424, %v1425
      %v1427 = vsel %vm451, %v1333, -inf
      %v1428 = vrot.slane %v1427, 4
      %v1429 = vmax.f32 %v1427, %v1428
      %v1430 = vrot.slane %v1429, 2
      %v1431 = vmax.f32 %v1429, %v1430
      %v1432 = vrot.slane %v1431, 1
      %v1433 = vmax.f32 %v1431, %v1432
      %v1434 = vsel %vm451, %v1334, -inf
      %v1435 = vrot.slane %v1434, 4
      %v1436 = vmax.f32 %v1434, %v1435
      %v1437 = vrot.slane %v1436, 2
      %v1438 = vmax.f32 %v1436, %v1437
      %v1439 = vrot.slane %v1438, 1
      %v1440 = vmax.f32 %v1438, %v1439
      %v1441 = vsel %vm451, %v1335, -inf
      %v1442 = vrot.slane %v1441, 4
      %v1443 = vmax.f32 %v1441, %v1442
      %v1444 = vrot.slane %v1443, 2
      %v1445 = vmax.f32 %v1443, %v1444
      %v1446 = vrot.slane %v1445, 1
      %v1447 = vmax.f32 %v1445, %v1446
      %v1448 = vsel %vm451, %v1336, -inf
      %v1449 = vrot.slane %v1448, 4
      %v1450 = vmax.f32 %v1448, %v1449
      %v1451 = vrot.slane %v1450, 2
      %v1452 = vmax.f32 %v1450, %v1451
      %v1453 = vrot.slane %v1452, 1
      %v1454 = vmax.f32 %v1452, %v1453
      %v1455 = vsel %vm451, %v1337, -inf
      %v1456 = vrot.slane %v1455, 4
      %v1457 = vmax.f32 %v1455, %v1456
      %v1458 = vrot.slane %v1457, 2
      %v1459 = vmax.f32 %v1457, %v1458
      %v1460 = vrot.slane %v1459, 1
      %v1461 = vmax.f32 %v1459, %v1460
      %v1462 = vsel %vm451, %v1338, -inf
      %v1463 = vrot.slane %v1462, 4
      %v1464 = vmax.f32 %v1462, %v1463
      %v1465 = vrot.slane %v1464, 2
      %v1466 = vmax.f32 %v1464, %v1465
      %v1467 = vrot.slane %v1466, 1
      %v1468 = vmax.f32 %v1466, %v1467
      %v1469 = vsel %vm451, %v1339, -inf
      %v1470 = vrot.slane %v1469, 4
      %v1471 = vmax.f32 %v1469, %v1470
      %v1472 = vrot.slane %v1471, 2
      %v1473 = vmax.f32 %v1471, %v1472
      %v1474 = vrot.slane %v1473, 1
      %v1475 = vmax.f32 %v1473, %v1474
      %v1476 = vsel %vm451, %v1340, -inf
      %v1477 = vrot.slane %v1476, 4
      %v1478 = vmax.f32 %v1476, %v1477
      %v1479 = vrot.slane %v1478, 2
      %v1480 = vmax.f32 %v1478, %v1479
      %v1481 = vrot.slane %v1480, 1
      %v1482 = vmax.f32 %v1480, %v1481
      %v1483 = vsel %vm451, %v1341, -inf
      %v1484 = vrot.slane %v1483, 4
      %v1485 = vmax.f32 %v1483, %v1484
      %v1486 = vrot.slane %v1485, 2
      %v1487 = vmax.f32 %v1485, %v1486
      %v1488 = vrot.slane %v1487, 1
      %v1489 = vmax.f32 %v1487, %v1488
      %v1490 = vsel %vm451, %v1342, -inf
      %v1491 = vrot.slane %v1490, 4
      %v1492 = vmax.f32 %v1490, %v1491
      %v1493 = vrot.slane %v1492, 2
      %v1494 = vmax.f32 %v1492, %v1493
      %v1495 = vrot.slane %v1494, 1
      %v1496 = vmax.f32 %v1494, %v1495
      %v1497 = vsel %vm451, %v1343, -inf
      %v1498 = vrot.slane %v1497, 4
      %v1499 = vmax.f32 %v1497, %v1498
      %v1500 = vrot.slane %v1499, 2
      %v1501 = vmax.f32 %v1499, %v1500
      %v1502 = vrot.slane %v1501, 1
      %v1503 = vmax.f32 %v1501, %v1502
      %v1504 = vsel %vm451, %v1344, -inf
      %v1505 = vrot.slane %v1504, 4
      %v1506 = vmax.f32 %v1504, %v1505
      %v1507 = vrot.slane %v1506, 2
      %v1508 = vmax.f32 %v1506, %v1507
      %v1509 = vrot.slane %v1508, 1
      %v1510 = vmax.f32 %v1508, %v1509
      %v1511 = vsel %vm451, %v1345, -inf
      %v1512 = vrot.slane %v1511, 4
      %v1513 = vmax.f32 %v1511, %v1512
      %v1514 = vrot.slane %v1513, 2
      %v1515 = vmax.f32 %v1513, %v1514
      %v1516 = vrot.slane %v1515, 1
      %v1517 = vmax.f32 %v1515, %v1516
      %v1518 = vsel %vm451, %v1346, -inf
      %v1519 = vrot.slane %v1518, 4
      %v1520 = vmax.f32 %v1518, %v1519
      %v1521 = vrot.slane %v1520, 2
      %v1522 = vmax.f32 %v1520, %v1521
      %v1523 = vrot.slane %v1522, 1
      %v1524 = vmax.f32 %v1522, %v1523
      %v1525 = vsel %vm451, %v1347, -inf
      %v1526 = vrot.slane %v1525, 4
      %v1527 = vmax.f32 %v1525, %v1526
      %v1528 = vrot.slane %v1527, 2
      %v1529 = vmax.f32 %v1527, %v1528
      %v1530 = vrot.slane %v1529, 1
      %v1531 = vmax.f32 %v1529, %v1530
      %v1532 = vsel %vm451, %v1348, -inf
      %v1533 = vrot.slane %v1532, 4
      %v1534 = vmax.f32 %v1532, %v1533
      %v1535 = vrot.slane %v1534, 2
      %v1536 = vmax.f32 %v1534, %v1535
      %v1537 = vrot.slane %v1536, 1
      %v1538 = vmax.f32 %v1536, %v1537
      %v1539 = vsel %vm451, %v1349, -inf
      %v1540 = vrot.slane %v1539, 4
      %v1541 = vmax.f32 %v1539, %v1540
      %v1542 = vrot.slane %v1541, 2
      %v1543 = vmax.f32 %v1541, %v1542
      %v1544 = vrot.slane %v1543, 1
      %v1545 = vmax.f32 %v1543, %v1544
      %v1546 = vsel %vm451, %v1350, -inf
      %v1547 = vrot.slane %v1546, 4
      %v1548 = vmax.f32 %v1546, %v1547
      %v1549 = vrot.slane %v1548, 2
      %v1550 = vmax.f32 %v1548, %v1549
      %v1551 = vrot.slane %v1550, 1
      %v1552 = vmax.f32 %v1550, %v1551
      %v1553 = vsel %vm451, %v1351, -inf
      %v1554 = vrot.slane %v1553, 4
      %v1555 = vmax.f32 %v1553, %v1554
      %v1556 = vrot.slane %v1555, 2
      %v1557 = vmax.f32 %v1555, %v1556
      %v1558 = vrot.slane %v1557, 1
      %v1559 = vmax.f32 %v1557, %v1558
      %v1560 = vsel %vm451, %v1352, -inf
      %v1561 = vrot.slane %v1560, 4
      %v1562 = vmax.f32 %v1560, %v1561
      %v1563 = vrot.slane %v1562, 2
      %v1564 = vmax.f32 %v1562, %v1563
      %v1565 = vrot.slane %v1564, 1
      %v1566 = vmax.f32 %v1564, %v1565
      %v1567 = vsel %vm451, %v1353, -inf
      %v1568 = vrot.slane %v1567, 4
      %v1569 = vmax.f32 %v1567, %v1568
      %v1570 = vrot.slane %v1569, 2
      %v1571 = vmax.f32 %v1569, %v1570
      %v1572 = vrot.slane %v1571, 1
      %v1573 = vmax.f32 %v1571, %v1572
      %v1574 = vsel %vm451, %v1354, -inf
      %v1575 = vrot.slane %v1574, 4
      %v1576 = vmax.f32 %v1574, %v1575
      %v1577 = vrot.slane %v1576, 2
      %v1578 = vmax.f32 %v1576, %v1577
      %v1579 = vrot.slane %v1578, 1
      %v1580 = vmax.f32 %v1578, %v1579
      %v1581 = vsel %vm451, %v1355, -inf
      %v1582 = vrot.slane %v1581, 4
      %v1583 = vmax.f32 %v1581, %v1582
      %v1584 = vrot.slane %v1583, 2
      %v1585 = vmax.f32 %v1583, %v1584
      %v1586 = vrot.slane %v1585, 1
      %v1587 = vmax.f32 %v1585, %v1586
      %v1588 = vsel %vm451, %v1356, -inf
      %v1589 = vrot.slane %v1588, 4
      %v1590 = vmax.f32 %v1588, %v1589
      %v1591 = vrot.slane %v1590, 2
      %v1592 = vmax.f32 %v1590, %v1591
      %v1593 = vrot.slane %v1592, 1
      %v1594 = vmax.f32 %v1592, %v1593
      %v1595 = vsel %vm451, %v1357, -inf
      %v1596 = vrot.slane %v1595, 4
      %v1597 = vmax.f32 %v1595, %v1596
      %v1598 = vrot.slane %v1597, 2
      %v1599 = vmax.f32 %v1597, %v1598
      %v1600 = vrot.slane %v1599, 1
      %v1601 = vmax.f32 %v1599, %v1600
      %v1602 = vsel %vm451, %v1358, -inf
      %v1603 = vrot.slane %v1602, 4
      %v1604 = vmax.f32 %v1602, %v1603
      %v1605 = vrot.slane %v1604, 2
      %v1606 = vmax.f32 %v1604, %v1605
      %v1607 = vrot.slane %v1606, 1
      %v1608 = vmax.f32 %v1606, %v1607
      %v1609 = vsel %vm451, %v1359, -inf
      %v1610 = vrot.slane %v1609, 4
      %v1611 = vmax.f32 %v1609, %v1610
      %v1612 = vrot.slane %v1611, 2
      %v1613 = vmax.f32 %v1611, %v1612
      %v1614 = vrot.slane %v1613, 1
      %v1615 = vmax.f32 %v1613, %v1614
      %v1616 = vsel %vm451, %v1360, -inf
      %v1617 = vrot.slane %v1616, 4
      %v1618 = vmax.f32 %v1616, %v1617
      %v1619 = vrot.slane %v1618, 2
      %v1620 = vmax.f32 %v1618, %v1619
      %v1621 = vrot.slane %v1620, 1
      %v1622 = vmax.f32 %v1620, %v1621
      %v1623 = vsel %vm451, %v1361, -inf
      %v1624 = vrot.slane %v1623, 4
      %v1625 = vmax.f32 %v1623, %v1624
      %v1626 = vrot.slane %v1625, 2
      %v1627 = vmax.f32 %v1625, %v1626
      %v1628 = vrot.slane %v1627, 1
      %v1629 = vmax.f32 %v1627, %v1628
      %v1630 = vsel %vm451, %v1362, -inf
      %v1631 = vrot.slane %v1630, 4
      %v1632 = vmax.f32 %v1630, %v1631
      %v1633 = vrot.slane %v1632, 2
      %v1634 = vmax.f32 %v1632, %v1633
      %v1635 = vrot.slane %v1634, 1
      %v1636 = vmax.f32 %v1634, %v1635
      %v1637 = vsel %vm451, %v1363, -inf
      %v1638 = vrot.slane %v1637, 4
      %v1639 = vmax.f32 %v1637, %v1638
      %v1640 = vrot.slane %v1639, 2
      %v1641 = vmax.f32 %v1639, %v1640
      %v1642 = vrot.slane %v1641, 1
      %v1643 = vmax.f32 %v1641, %v1642
      %v1644 = vsel %vm451, %v1364, -inf
      %v1645 = vrot.slane %v1644, 4
      %v1646 = vmax.f32 %v1644, %v1645
      %v1647 = vrot.slane %v1646, 2
      %v1648 = vmax.f32 %v1646, %v1647
      %v1649 = vrot.slane %v1648, 1
      %v1650 = vmax.f32 %v1648, %v1649
      %v1651 = vsel %vm451, %v1365, -inf
      %v1652 = vrot.slane %v1651, 4
      %v1653 = vmax.f32 %v1651, %v1652
      %v1654 = vrot.slane %v1653, 2
      %v1655 = vmax.f32 %v1653, %v1654
      %v1656 = vrot.slane %v1655, 1
      %v1657 = vmax.f32 %v1655, %v1656
      %v1658 = vsel %vm451, %v1366, -inf
      %v1659 = vrot.slane %v1658, 4
      %v1660 = vmax.f32 %v1658, %v1659
      %v1661 = vrot.slane %v1660, 2
      %v1662 = vmax.f32 %v1660, %v1661
      %v1663 = vrot.slane %v1662, 1
      %v1664 = vmax.f32 %v1662, %v1663
      %v1665 = vsel %vm451, %v1367, -inf
      %v1666 = vrot.slane %v1665, 4
      %v1667 = vmax.f32 %v1665, %v1666
      %v1668 = vrot.slane %v1667, 2
      %v1669 = vmax.f32 %v1667, %v1668
      %v1670 = vrot.slane %v1669, 1
      %v1671 = vmax.f32 %v1669, %v1670
      %v1672 = vsel %vm451, %v1368, -inf
      %v1673 = vrot.slane %v1672, 4
      %v1674 = vmax.f32 %v1672, %v1673
      %v1675 = vrot.slane %v1674, 2
      %v1676 = vmax.f32 %v1674, %v1675
      %v1677 = vrot.slane %v1676, 1
      %v1678 = vmax.f32 %v1676, %v1677
      %v1679 = vsel %vm451, %v1369, -inf
      %v1680 = vrot.slane %v1679, 4
      %v1681 = vmax.f32 %v1679, %v1680
      %v1682 = vrot.slane %v1681, 2
      %v1683 = vmax.f32 %v1681, %v1682
      %v1684 = vrot.slane %v1683, 1
      %v1685 = vmax.f32 %v1683, %v1684
      %v1686 = vsel %vm451, %v1370, -inf
      %v1687 = vrot.slane %v1686, 4
      %v1688 = vmax.f32 %v1686, %v1687
      %v1689 = vrot.slane %v1688, 2
      %v1690 = vmax.f32 %v1688, %v1689
      %v1691 = vrot.slane %v1690, 1
      %v1692 = vmax.f32 %v1690, %v1691
      %v1693 = vsel %vm451, %v1371, -inf
      %v1694 = vrot.slane %v1693, 4
      %v1695 = vmax.f32 %v1693, %v1694
      %v1696 = vrot.slane %v1695, 2
      %v1697 = vmax.f32 %v1695, %v1696
      %v1698 = vrot.slane %v1697, 1
      %v1699 = vmax.f32 %v1697, %v1698
      %v1700 = vsel %vm451, %v1372, -inf
      %v1701 = vrot.slane %v1700, 4
      %v1702 = vmax.f32 %v1700, %v1701
      %v1703 = vrot.slane %v1702, 2
      %v1704 = vmax.f32 %v1702, %v1703
      %v1705 = vrot.slane %v1704, 1
      %v1706 = vmax.f32 %v1704, %v1705
      %v1707 = vsel %vm451, %v1373, -inf
      %v1708 = vrot.slane %v1707, 4
      %v1709 = vmax.f32 %v1707, %v1708
      %v1710 = vrot.slane %v1709, 2
      %v1711 = vmax.f32 %v1709, %v1710
      %v1712 = vrot.slane %v1711, 1
      %v1713 = vmax.f32 %v1711, %v1712
      %v1714 = vsel %vm451, %v1374, -inf
      %v1715 = vrot.slane %v1714, 4
      %v1716 = vmax.f32 %v1714, %v1715
      %v1717 = vrot.slane %v1716, 2
      %v1718 = vmax.f32 %v1716, %v1717
      %v1719 = vrot.slane %v1718, 1
      %v1720 = vmax.f32 %v1718, %v1719
      %v1721 = vsel %vm451, %v1375, -inf
      %v1722 = vrot.slane %v1721, 4
      %v1723 = vmax.f32 %v1721, %v1722
      %v1724 = vrot.slane %v1723, 2
      %v1725 = vmax.f32 %v1723, %v1724
      %v1726 = vrot.slane %v1725, 1
      %v1727 = vmax.f32 %v1725, %v1726
      %v1728 = vsel %vm451, %v1376, -inf
      %v1729 = vrot.slane %v1728, 4
      %v1730 = vmax.f32 %v1728, %v1729
      %v1731 = vrot.slane %v1730, 2
      %v1732 = vmax.f32 %v1730, %v1731
      %v1733 = vrot.slane %v1732, 1
      %v1734 = vmax.f32 %v1732, %v1733
      %v1735 = vsel %vm451, %v1377, -inf
      %v1736 = vrot.slane %v1735, 4
      %v1737 = vmax.f32 %v1735, %v1736
      %v1738 = vrot.slane %v1737, 2
      %v1739 = vmax.f32 %v1737, %v1738
      %v1740 = vrot.slane %v1739, 1
      %v1741 = vmax.f32 %v1739, %v1740
      %v1742 = vsel %vm451, %v1378, -inf
      %v1743 = vrot.slane %v1742, 4
      %v1744 = vmax.f32 %v1742, %v1743
      %v1745 = vrot.slane %v1744, 2
      %v1746 = vmax.f32 %v1744, %v1745
      %v1747 = vrot.slane %v1746, 1
      %v1748 = vmax.f32 %v1746, %v1747
      %v1749 = vsel %vm451, %v1379, -inf
      %v1750 = vrot.slane %v1749, 4
      %v1751 = vmax.f32 %v1749, %v1750
      %v1752 = vrot.slane %v1751, 2
      %v1753 = vmax.f32 %v1751, %v1752
      %v1754 = vrot.slane %v1753, 1
      %v1755 = vmax.f32 %v1753, %v1754
      %v1756 = vsel %vm451, %v1380, -inf
      %v1757 = vrot.slane %v1756, 4
      %v1758 = vmax.f32 %v1756, %v1757
      %v1759 = vrot.slane %v1758, 2
      %v1760 = vmax.f32 %v1758, %v1759
      %v1761 = vrot.slane %v1760, 1
      %v1762 = vmax.f32 %v1760, %v1761
      %v1763 = vsel %vm451, %v1381, -inf
      %v1764 = vrot.slane %v1763, 4
      %v1765 = vmax.f32 %v1763, %v1764
      %v1766 = vrot.slane %v1765, 2
      %v1767 = vmax.f32 %v1765, %v1766
      %v1768 = vrot.slane %v1767, 1
      %v1769 = vmax.f32 %v1767, %v1768
      %v1770 = vsel %vm451, %v1382, -inf
      %v1771 = vrot.slane %v1770, 4
      %v1772 = vmax.f32 %v1770, %v1771
      %v1773 = vrot.slane %v1772, 2
      %v1774 = vmax.f32 %v1772, %v1773
      %v1775 = vrot.slane %v1774, 1
      %v1776 = vmax.f32 %v1774, %v1775
      %v1777 = vsel %vm451, %v1383, -inf
      %v1778 = vrot.slane %v1777, 4
      %v1779 = vmax.f32 %v1777, %v1778
      %v1780 = vrot.slane %v1779, 2
      %v1781 = vmax.f32 %v1779, %v1780
      %v1782 = vrot.slane %v1781, 1
      %v1783 = vmax.f32 %v1781, %v1782
      %v1784 = vsel %vm451, %v1384, -inf
      %v1785 = vrot.slane %v1784, 4
      %v1786 = vmax.f32 %v1784, %v1785
      %v1787 = vrot.slane %v1786, 2
      %v1788 = vmax.f32 %v1786, %v1787
      %v1789 = vrot.slane %v1788, 1
      %v1790 = vmax.f32 %v1788, %v1789
      %v1791 = vsel %vm451, %v1385, -inf
      %v1792 = vrot.slane %v1791, 4
      %v1793 = vmax.f32 %v1791, %v1792
      %v1794 = vrot.slane %v1793, 2
      %v1795 = vmax.f32 %v1793, %v1794
      %v1796 = vrot.slane %v1795, 1
      %v1797 = vmax.f32 %v1795, %v1796
      %v1798 = vsel %vm451, %v1386, -inf
      %v1799 = vrot.slane %v1798, 4
      %v1800 = vmax.f32 %v1798, %v1799
      %v1801 = vrot.slane %v1800, 2
      %v1802 = vmax.f32 %v1800, %v1801
      %v1803 = vrot.slane %v1802, 1
      %v1804 = vmax.f32 %v1802, %v1803
      %v1805 = vsel %vm451, %v1387, -inf
      %v1806 = vrot.slane %v1805, 4
      %v1807 = vmax.f32 %v1805, %v1806
      %v1808 = vrot.slane %v1807, 2
      %v1809 = vmax.f32 %v1807, %v1808
      %v1810 = vrot.slane %v1809, 1
      %v1811 = vmax.f32 %v1809, %v1810
      %v1812 = vsel %vm451, %v1388, -inf
      %v1813 = vrot.slane %v1812, 4
      %v1814 = vmax.f32 %v1812, %v1813
      %v1815 = vrot.slane %v1814, 2
      %v1816 = vmax.f32 %v1814, %v1815
      %v1817 = vrot.slane %v1816, 1
      %v1818 = vmax.f32 %v1816, %v1817
      %v1819 = vsel %vm451, %v1389, -inf
      %v1820 = vrot.slane %v1819, 4
      %v1821 = vmax.f32 %v1819, %v1820
      %v1822 = vrot.slane %v1821, 2
      %v1823 = vmax.f32 %v1821, %v1822
      %v1824 = vrot.slane %v1823, 1
      %v1825 = vmax.f32 %v1823, %v1824
      %v1826 = vsel %vm451, %v1390, -inf
      %v1827 = vrot.slane %v1826, 4
      %v1828 = vmax.f32 %v1826, %v1827
      %v1829 = vrot.slane %v1828, 2
      %v1830 = vmax.f32 %v1828, %v1829
      %v1831 = vrot.slane %v1830, 1
      %v1832 = vmax.f32 %v1830, %v1831
      %v1833 = vsel %vm451, %v1391, -inf
      %v1834 = vrot.slane %v1833, 4
      %v1835 = vmax.f32 %v1833, %v1834
      %v1836 = vrot.slane %v1835, 2
      %v1837 = vmax.f32 %v1835, %v1836
      %v1838 = vrot.slane %v1837, 1
      %v1839 = vmax.f32 %v1837, %v1838
      %v1840 = vpack.c.bf16 %v1398, %v1398
      %v1841 = vpack.c.bf16 %v1405, %v1405
      %v1842 = vpack.c.bf16 %v1412, %v1412
      %v1843 = vpack.c.bf16 %v1419, %v1419
      %v1844 = vpack.c.bf16 %v1426, %v1426
      %v1845 = vpack.c.bf16 %v1433, %v1433
      %v1846 = vpack.c.bf16 %v1440, %v1440
      %v1847 = vpack.c.bf16 %v1447, %v1447
      %v1848 = vpack.c.bf16 %v1454, %v1454
      %v1849 = vpack.c.bf16 %v1461, %v1461
      %v1850 = vpack.c.bf16 %v1468, %v1468
      %v1851 = vpack.c.bf16 %v1475, %v1475
      %v1852 = vpack.c.bf16 %v1482, %v1482
      %v1853 = vpack.c.bf16 %v1489, %v1489
      %v1854 = vpack.c.bf16 %v1496, %v1496
      %v1855 = vpack.c.bf16 %v1503, %v1503
      %v1856 = vpack.c.bf16 %v1510, %v1510
      %v1857 = vpack.c.bf16 %v1517, %v1517
      %v1858 = vpack.c.bf16 %v1524, %v1524
      %v1859 = vpack.c.bf16 %v1531, %v1531
      %v1860 = vpack.c.bf16 %v1538, %v1538
      %v1861 = vpack.c.bf16 %v1545, %v1545
      %v1862 = vpack.c.bf16 %v1552, %v1552
      %v1863 = vpack.c.bf16 %v1559, %v1559
      %v1864 = vpack.c.bf16 %v1566, %v1566
      %v1865 = vpack.c.bf16 %v1573, %v1573
      %v1866 = vpack.c.bf16 %v1580, %v1580
      %v1867 = vpack.c.bf16 %v1587, %v1587
      %v1868 = vpack.c.bf16 %v1594, %v1594
      %v1869 = vpack.c.bf16 %v1601, %v1601
      %v1870 = vpack.c.bf16 %v1608, %v1608
      %v1871 = vpack.c.bf16 %v1615, %v1615
      %v1872 = vpack.c.bf16 %v1622, %v1622
      %v1873 = vpack.c.bf16 %v1629, %v1629
      %v1874 = vpack.c.bf16 %v1636, %v1636
      %v1875 = vpack.c.bf16 %v1643, %v1643
      %v1876 = vpack.c.bf16 %v1650, %v1650
      %v1877 = vpack.c.bf16 %v1657, %v1657
      %v1878 = vpack.c.bf16 %v1664, %v1664
      %v1879 = vpack.c.bf16 %v1671, %v1671
      %v1880 = vpack.c.bf16 %v1678, %v1678
      %v1881 = vpack.c.bf16 %v1685, %v1685
      %v1882 = vpack.c.bf16 %v1692, %v1692
      %v1883 = vpack.c.bf16 %v1699, %v1699
      %v1884 = vpack.c.bf16 %v1706, %v1706
      %v1885 = vpack.c.bf16 %v1713, %v1713
      %v1886 = vpack.c.bf16 %v1720, %v1720
      %v1887 = vpack.c.bf16 %v1727, %v1727
      %v1888 = vpack.c.bf16 %v1734, %v1734
      %v1889 = vpack.c.bf16 %v1741, %v1741
      %v1890 = vpack.c.bf16 %v1748, %v1748
      %v1891 = vpack.c.bf16 %v1755, %v1755
      %v1892 = vpack.c.bf16 %v1762, %v1762
      %v1893 = vpack.c.bf16 %v1769, %v1769
      %v1894 = vpack.c.bf16 %v1776, %v1776
      %v1895 = vpack.c.bf16 %v1783, %v1783
      %v1896 = vpack.c.bf16 %v1790, %v1790
      %v1897 = vpack.c.bf16 %v1797, %v1797
      %v1898 = vpack.c.bf16 %v1804, %v1804
      %v1899 = vpack.c.bf16 %v1811, %v1811
      %v1900 = vpack.c.bf16 %v1818, %v1818
      %v1901 = vpack.c.bf16 %v1825, %v1825
      %v1902 = vpack.c.bf16 %v1832, %v1832
      %v1903 = vpack.c.bf16 %v1839, %v1839
      %v1904 = vunpack.c.l.bf16 %v1840
      %v1905 = vunpack.c.l.bf16 %v1841
      %v1906 = vunpack.c.l.bf16 %v1842
      %v1907 = vunpack.c.l.bf16 %v1843
      %v1908 = vunpack.c.l.bf16 %v1844
      %v1909 = vunpack.c.l.bf16 %v1845
      %v1910 = vunpack.c.l.bf16 %v1846
      %v1911 = vunpack.c.l.bf16 %v1847
      %v1912 = vunpack.c.l.bf16 %v1848
      %v1913 = vunpack.c.l.bf16 %v1849
      %v1914 = vunpack.c.l.bf16 %v1850
      %v1915 = vunpack.c.l.bf16 %v1851
      %v1916 = vunpack.c.l.bf16 %v1852
      %v1917 = vunpack.c.l.bf16 %v1853
      %v1918 = vunpack.c.l.bf16 %v1854
      %v1919 = vunpack.c.l.bf16 %v1855
      %v1920 = vunpack.c.l.bf16 %v1856
      %v1921 = vunpack.c.l.bf16 %v1857
      %v1922 = vunpack.c.l.bf16 %v1858
      %v1923 = vunpack.c.l.bf16 %v1859
      %v1924 = vunpack.c.l.bf16 %v1860
      %v1925 = vunpack.c.l.bf16 %v1861
      %v1926 = vunpack.c.l.bf16 %v1862
      %v1927 = vunpack.c.l.bf16 %v1863
      %v1928 = vunpack.c.l.bf16 %v1864
      %v1929 = vunpack.c.l.bf16 %v1865
      %v1930 = vunpack.c.l.bf16 %v1866
      %v1931 = vunpack.c.l.bf16 %v1867
      %v1932 = vunpack.c.l.bf16 %v1868
      %v1933 = vunpack.c.l.bf16 %v1869
      %v1934 = vunpack.c.l.bf16 %v1870
      %v1935 = vunpack.c.l.bf16 %v1871
      %v1936 = vunpack.c.l.bf16 %v1872
      %v1937 = vunpack.c.l.bf16 %v1873
      %v1938 = vunpack.c.l.bf16 %v1874
      %v1939 = vunpack.c.l.bf16 %v1875
      %v1940 = vunpack.c.l.bf16 %v1876
      %v1941 = vunpack.c.l.bf16 %v1877
      %v1942 = vunpack.c.l.bf16 %v1878
      %v1943 = vunpack.c.l.bf16 %v1879
      %v1944 = vunpack.c.l.bf16 %v1880
      %v1945 = vunpack.c.l.bf16 %v1881
      %v1946 = vunpack.c.l.bf16 %v1882
      %v1947 = vunpack.c.l.bf16 %v1883
      %v1948 = vunpack.c.l.bf16 %v1884
      %v1949 = vunpack.c.l.bf16 %v1885
      %v1950 = vunpack.c.l.bf16 %v1886
      %v1951 = vunpack.c.l.bf16 %v1887
      %v1952 = vunpack.c.l.bf16 %v1888
      %v1953 = vunpack.c.l.bf16 %v1889
      %v1954 = vunpack.c.l.bf16 %v1890
      %v1955 = vunpack.c.l.bf16 %v1891
      %v1956 = vunpack.c.l.bf16 %v1892
      %v1957 = vunpack.c.l.bf16 %v1893
      %v1958 = vunpack.c.l.bf16 %v1894
      %v1959 = vunpack.c.l.bf16 %v1895
      %v1960 = vunpack.c.l.bf16 %v1896
      %v1961 = vunpack.c.l.bf16 %v1897
      %v1962 = vunpack.c.l.bf16 %v1898
      %v1963 = vunpack.c.l.bf16 %v1899
      %v1964 = vunpack.c.l.bf16 %v1900
      %v1965 = vunpack.c.l.bf16 %v1901
      %v1966 = vunpack.c.l.bf16 %v1902
      %v1967 = vunpack.c.l.bf16 %v1903
      %v1968 = vsel %vm1028, %v1904, -inf
      %v1969 = vsel %vm1028, %v1912, -inf
      %v1970 = vmax.f32 %v1968, %v1969
      %v1971 = vsel %vm1028, %v1905, -inf
      %v1972 = vsel %vm1028, %v1913, -inf
      %v1973 = vmax.f32 %v1971, %v1972
      %v1974 = vsel %vm1028, %v1906, -inf
      %v1975 = vsel %vm1028, %v1914, -inf
      %v1976 = vmax.f32 %v1974, %v1975
      %v1977 = vsel %vm1028, %v1907, -inf
      %v1978 = vsel %vm1028, %v1915, -inf
      %v1979 = vmax.f32 %v1977, %v1978
      %v1980 = vsel %vm1028, %v1908, -inf
      %v1981 = vsel %vm1028, %v1916, -inf
      %v1982 = vmax.f32 %v1980, %v1981
      %v1983 = vsel %vm1028, %v1909, -inf
      %v1984 = vsel %vm1028, %v1917, -inf
      %v1985 = vmax.f32 %v1983, %v1984
      %v1986 = vsel %vm1028, %v1910, -inf
      %v1987 = vsel %vm1028, %v1918, -inf
      %v1988 = vmax.f32 %v1986, %v1987
      %v1989 = vsel %vm1028, %v1911, -inf
      %v1990 = vsel %vm1028, %v1919, -inf
      %v1991 = vmax.f32 %v1989, %v1990
      %v1992 = vsel %vm1028, %v1920, -inf
      %v1993 = vsel %vm1028, %v1928, -inf
      %v1994 = vmax.f32 %v1992, %v1993
      %v1995 = vsel %vm1028, %v1921, -inf
      %v1996 = vsel %vm1028, %v1929, -inf
      %v1997 = vmax.f32 %v1995, %v1996
      %v1998 = vsel %vm1028, %v1922, -inf
      %v1999 = vsel %vm1028, %v1930, -inf
      %v2000 = vmax.f32 %v1998, %v1999
      %v2001 = vsel %vm1028, %v1923, -inf
      %v2002 = vsel %vm1028, %v1931, -inf
      %v2003 = vmax.f32 %v2001, %v2002
      %v2004 = vsel %vm1028, %v1924, -inf
      %v2005 = vsel %vm1028, %v1932, -inf
      %v2006 = vmax.f32 %v2004, %v2005
      %v2007 = vsel %vm1028, %v1925, -inf
      %v2008 = vsel %vm1028, %v1933, -inf
      %v2009 = vmax.f32 %v2007, %v2008
      %v2010 = vsel %vm1028, %v1926, -inf
      %v2011 = vsel %vm1028, %v1934, -inf
      %v2012 = vmax.f32 %v2010, %v2011
      %v2013 = vsel %vm1028, %v1927, -inf
      %v2014 = vsel %vm1028, %v1935, -inf
      %v2015 = vmax.f32 %v2013, %v2014
      %v2016 = vsel %vm1028, %v1936, -inf
      %v2017 = vsel %vm1028, %v1944, -inf
      %v2018 = vmax.f32 %v2016, %v2017
      %v2019 = vsel %vm1028, %v1937, -inf
      %v2020 = vsel %vm1028, %v1945, -inf
      %v2021 = vmax.f32 %v2019, %v2020
      %v2022 = vsel %vm1028, %v1938, -inf
      %v2023 = vsel %vm1028, %v1946, -inf
      %v2024 = vmax.f32 %v2022, %v2023
      %v2025 = vsel %vm1028, %v1939, -inf
      %v2026 = vsel %vm1028, %v1947, -inf
      %v2027 = vmax.f32 %v2025, %v2026
      %v2028 = vsel %vm1028, %v1940, -inf
      %v2029 = vsel %vm1028, %v1948, -inf
      %v2030 = vmax.f32 %v2028, %v2029
      %v2031 = vsel %vm1028, %v1941, -inf
      %v2032 = vsel %vm1028, %v1949, -inf
      %v2033 = vmax.f32 %v2031, %v2032
      %v2034 = vsel %vm1028, %v1942, -inf
      %v2035 = vsel %vm1028, %v1950, -inf
      %v2036 = vmax.f32 %v2034, %v2035
      %v2037 = vsel %vm1028, %v1943, -inf
      %v2038 = vsel %vm1028, %v1951, -inf
      %v2039 = vmax.f32 %v2037, %v2038
      %v2040 = vsel %vm1028, %v1952, -inf
      %v2041 = vsel %vm1028, %v1960, -inf
      %v2042 = vmax.f32 %v2040, %v2041
      %v2043 = vsel %vm1028, %v1953, -inf
      %v2044 = vsel %vm1028, %v1961, -inf
      %v2045 = vmax.f32 %v2043, %v2044
      %v2046 = vsel %vm1028, %v1954, -inf
      %v2047 = vsel %vm1028, %v1962, -inf
      %v2048 = vmax.f32 %v2046, %v2047
      %v2049 = vsel %vm1028, %v1955, -inf
      %v2050 = vsel %vm1028, %v1963, -inf
      %v2051 = vmax.f32 %v2049, %v2050
      %v2052 = vsel %vm1028, %v1956, -inf
      %v2053 = vsel %vm1028, %v1964, -inf
      %v2054 = vmax.f32 %v2052, %v2053
      %v2055 = vsel %vm1028, %v1957, -inf
      %v2056 = vsel %vm1028, %v1965, -inf
      %v2057 = vmax.f32 %v2055, %v2056
      %v2058 = vsel %vm1028, %v1958, -inf
      %v2059 = vsel %vm1028, %v1966, -inf
      %v2060 = vmax.f32 %v2058, %v2059
      %v2061 = vsel %vm1028, %v1959, -inf
      %v2062 = vsel %vm1028, %v1967, -inf
      %v2063 = vmax.f32 %v2061, %v2062
      %v2064 = vpack.c.bf16 %v1970, %v1970
      %v2065 = vpack.c.bf16 %v1973, %v1973
      %v2066 = vpack.c.bf16 %v1976, %v1976
      %v2067 = vpack.c.bf16 %v1979, %v1979
      %v2068 = vpack.c.bf16 %v1982, %v1982
      %v2069 = vpack.c.bf16 %v1985, %v1985
      %v2070 = vpack.c.bf16 %v1988, %v1988
      %v2071 = vpack.c.bf16 %v1991, %v1991
      %v2072 = vpack.c.bf16 %v1994, %v1994
      %v2073 = vpack.c.bf16 %v1997, %v1997
      %v2074 = vpack.c.bf16 %v2000, %v2000
      %v2075 = vpack.c.bf16 %v2003, %v2003
      %v2076 = vpack.c.bf16 %v2006, %v2006
      %v2077 = vpack.c.bf16 %v2009, %v2009
      %v2078 = vpack.c.bf16 %v2012, %v2012
      %v2079 = vpack.c.bf16 %v2015, %v2015
      %v2080 = vpack.c.bf16 %v2018, %v2018
      %v2081 = vpack.c.bf16 %v2021, %v2021
      %v2082 = vpack.c.bf16 %v2024, %v2024
      %v2083 = vpack.c.bf16 %v2027, %v2027
      %v2084 = vpack.c.bf16 %v2030, %v2030
      %v2085 = vpack.c.bf16 %v2033, %v2033
      %v2086 = vpack.c.bf16 %v2036, %v2036
      %v2087 = vpack.c.bf16 %v2039, %v2039
      %v2088 = vpack.c.bf16 %v2042, %v2042
      %v2089 = vpack.c.bf16 %v2045, %v2045
      %v2090 = vpack.c.bf16 %v2048, %v2048
      %v2091 = vpack.c.bf16 %v2051, %v2051
      %v2092 = vpack.c.bf16 %v2054, %v2054
      %v2093 = vpack.c.bf16 %v2057, %v2057
      %v2094 = vpack.c.bf16 %v2060, %v2060
      %v2095 = vpack.c.bf16 %v2063, %v2063
      %v2096 = vunpack.c.l.bf16 %v2064
      %v2097 = vunpack.c.l.bf16 %v2065
      %v2098 = vunpack.c.l.bf16 %v2066
      %v2099 = vunpack.c.l.bf16 %v2067
      %v2100 = vunpack.c.l.bf16 %v2068
      %v2101 = vunpack.c.l.bf16 %v2069
      %v2102 = vunpack.c.l.bf16 %v2070
      %v2103 = vunpack.c.l.bf16 %v2071
      %v2104 = vunpack.c.l.bf16 %v2072
      %v2105 = vunpack.c.l.bf16 %v2073
      %v2106 = vunpack.c.l.bf16 %v2074
      %v2107 = vunpack.c.l.bf16 %v2075
      %v2108 = vunpack.c.l.bf16 %v2076
      %v2109 = vunpack.c.l.bf16 %v2077
      %v2110 = vunpack.c.l.bf16 %v2078
      %v2111 = vunpack.c.l.bf16 %v2079
      %v2112 = vunpack.c.l.bf16 %v2080
      %v2113 = vunpack.c.l.bf16 %v2081
      %v2114 = vunpack.c.l.bf16 %v2082
      %v2115 = vunpack.c.l.bf16 %v2083
      %v2116 = vunpack.c.l.bf16 %v2084
      %v2117 = vunpack.c.l.bf16 %v2085
      %v2118 = vunpack.c.l.bf16 %v2086
      %v2119 = vunpack.c.l.bf16 %v2087
      %v2120 = vunpack.c.l.bf16 %v2088
      %v2121 = vunpack.c.l.bf16 %v2089
      %v2122 = vunpack.c.l.bf16 %v2090
      %v2123 = vunpack.c.l.bf16 %v2091
      %v2124 = vunpack.c.l.bf16 %v2092
      %v2125 = vunpack.c.l.bf16 %v2093
      %v2126 = vunpack.c.l.bf16 %v2094
      %v2127 = vunpack.c.l.bf16 %v2095
      %v2160 = vsel %vm1221, %v2097, %v2096
      %v2161 = vsel %vm1223, %v2098, %v2160
      %v2162 = vsel %vm1225, %v2099, %v2161
      %v2163 = vsel %vm1227, %v2100, %v2162
      %v2164 = vsel %vm1229, %v2101, %v2163
      %v2165 = vsel %vm1231, %v2102, %v2164
      %v2166 = vsel %vm1233, %v2103, %v2165
      %v2167 = vsel %vm1221, %v2105, %v2104
      %v2168 = vsel %vm1223, %v2106, %v2167
      %v2169 = vsel %vm1225, %v2107, %v2168
      %v2170 = vsel %vm1227, %v2108, %v2169
      %v2171 = vsel %vm1229, %v2109, %v2170
      %v2172 = vsel %vm1231, %v2110, %v2171
      %v2173 = vsel %vm1233, %v2111, %v2172
      %v2174 = vsel %vm1221, %v2113, %v2112
      %v2175 = vsel %vm1223, %v2114, %v2174
      %v2176 = vsel %vm1225, %v2115, %v2175
      %v2177 = vsel %vm1227, %v2116, %v2176
      %v2178 = vsel %vm1229, %v2117, %v2177
      %v2179 = vsel %vm1231, %v2118, %v2178
      %v2180 = vsel %vm1233, %v2119, %v2179
      %v2181 = vsel %vm1221, %v2121, %v2120
      %v2182 = vsel %vm1223, %v2122, %v2181
      %v2183 = vsel %vm1225, %v2123, %v2182
      %v2184 = vsel %vm1227, %v2124, %v2183
      %v2185 = vsel %vm1229, %v2125, %v2184
      %v2186 = vsel %vm1231, %v2126, %v2185
      %v2187 = vsel %vm1233, %v2127, %v2186
      %s2192 = scalar_lea.vmem [#allocation2], 32
      %2193 = vst.msk [vmem:[%s2192] sm:$0xff] %vm1028, %v2166
      %2194 = vst.msk [vmem:[%s2192 + $0x8] sm:$0xff] %vm1028, %v2173
      %2195 = vst.msk [vmem:[%s2192 + $0x10] sm:$0xff] %vm1028, %v2180
      %2196 = vst.msk [vmem:[%s2192 + $0x18] sm:$0xff] %vm1028, %v2187
      %v2197 = vld [vmem:[%s3] sm:$0x1]
      %v2198 = vld [vmem:[%s5] sm:$0x1]
      loop: start=0, step=1, limit=6
      $region45: #{down_forward.1} parent=43 // loop_pre_header
        _
      $region46: #{down_forward.1} parent=43 // loop_header
        %s2200 = sphi 0, %s2204
        %p2201 = scmp.ge.s32.totalorder %s2200, 6
      $region47: #{down_forward.1} parent=43 // loop_header_branch
        %2203 = sbr.rel (%p2201) target = $region51
      $region48: #{down_forward.1} parent=43 // loop_body
        %s2205 = smul.u32 %s2200, 8
        %s2206 = scalar_lea.vmem [#allocation2], %s2205
        %v2207 = vld [vmem:[%s2206] sm:$0x3f]
        %v2208 = vpack.c.bf16 %v2207, %v2207
        %v2209 = vld [vmem:[%s2] sm:$0x3]
        %v2210 = vld [vmem:[%s2206 + $0x1] sm:$0x3f]
        %v2211 = vpack.c.bf16 %v2210, %v2210
        %s2212 = scalar_lea.vmem %s2, 2
        %v2213 = vld [vmem:[%s2212] sm:$0x3]
        %v2215 = vsel %vm1028, %v2211, 0
        %vm2217 = vcmask 1041408
        %v2219 = vsel %vm2217, %v2213, 0
        %2221 = vmatpush.bf16.msra.mxu0 0
        %2222 = vmatpush.bf16.msra.mxu0 0
        %2223 = vmatpush.bf16.msra.mxu0 0
        %2224 = vmatpush.bf16.msra.mxu0 0
        %2225 = vmatpush.bf16.msra.mxu0 0
        %2226 = vmatpush.bf16.msra.mxu0 0
        %2227 = vmatpush.bf16.msra.mxu0 0
        %2228 = vmatpush.bf16.msra.mxu0 %v2219
        %2229 = vmatmul.bf16.gmra.mxu0 %v2215
        %v2230 = vpop.f32.mrf.mxu0
        %v2231 = vadd.f32 0.0, %v2230
        %v2232 = vpop.f32.mrf.mxu0
        %2233 = vdwg.mxu0
        %v2235 = vsel %vm1028, %v2208, 0
        %v2238 = vsel %vm2217, %v2209, 0
        %2240 = vmatpush.bf16.msra.mxu0 0
        %2241 = vmatpush.bf16.msra.mxu0 0
        %2242 = vmatpush.bf16.msra.mxu0 0
        %2243 = vmatpush.bf16.msra.mxu0 0
        %2244 = vmatpush.bf16.msra.mxu0 0
        %2245 = vmatpush.bf16.msra.mxu0 0
        %2246 = vmatpush.bf16.msra.mxu0 0
        %2247 = vmatpush.bf16.msra.mxu0 %v2238
        %2248 = vmatmul.bf16.gmra.mxu0 %v2235
        %v2249 = vpop.f32.mrf.mxu0
        %v2250 = vadd.f32 %v2231, %v2249
        %v2251 = vpop.f32.mrf.mxu0
        %2252 = vdwg.mxu0
        %v2253 = vld [vmem:[%s2206 + $0x2] sm:$0x3f]
        %v2254 = vpack.c.bf16 %v2253, %v2253
        %s2255 = scalar_lea.vmem %s2, 4
        %v2256 = vld [vmem:[%s2255] sm:$0x3]
        %v2258 = vsel %vm1028, %v2254, 0
        %v2261 = vsel %vm2217, %v2256, 0
        %2263 = vmatpush.bf16.msra.mxu0 0
        %2264 = vmatpush.bf16.msra.mxu0 0
        %2265 = vmatpush.bf16.msra.mxu0 0
        %2266 = vmatpush.bf16.msra.mxu0 0
        %2267 = vmatpush.bf16.msra.mxu0 0
        %2268 = vmatpush.bf16.msra.mxu0 0
        %2269 = vmatpush.bf16.msra.mxu0 0
        %2270 = vmatpush.bf16.msra.mxu0 %v2261
        %2271 = vmatmul.bf16.gmra.mxu0 %v2258
        %v2272 = vpop.f32.mrf.mxu0
        %v2273 = vadd.f32 0.0, %v2272
        %v2274 = vpop.f32.mrf.mxu0
        %2275 = vdwg.mxu0
        %v2276 = vadd.f32 %v2250, %v2273
        %s2277 = sadd.s32 %s2200, 1
        %s2278 = smul.u32 %s2277, 8
        %s2279 = scalar_lea.vmem [#allocation2], %s2278
        %v2280 = vld [vmem:[%s2279] sm:$0x3f]
        %v2281 = vpack.c.bf16 %v2280, %v2280
        %s2282 = scalar_lea.vmem %s2, 6
        %v2283 = vld [vmem:[%s2282] sm:$0x3]
        %v2285 = vsel %vm1028, %v2281, 0
        %v2288 = vsel %vm2217, %v2283, 0
        %2290 = vmatpush.bf16.msra.mxu0 0
        %2291 = vmatpush.bf16.msra.mxu0 0
        %2292 = vmatpush.bf16.msra.mxu0 0
        %2293 = vmatpush.bf16.msra.mxu0 0
        %2294 = vmatpush.bf16.msra.mxu0 0
        %2295 = vmatpush.bf16.msra.mxu0 0
        %2296 = vmatpush.bf16.msra.mxu0 0
        %2297 = vmatpush.bf16.msra.mxu0 %v2288
        %2298 = vmatmul.bf16.gmra.mxu0 %v2285
        %v2299 = vpop.f32.mrf.mxu0
        %v2300 = vadd.f32 0.0, %v2299
        %v2301 = vpop.f32.mrf.mxu0
        %2302 = vdwg.mxu0
        %v2303 = vadd.f32 %v2276, %v2300
        %v2304 = vld [vmem:[%s2279 + $0x1] sm:$0x3f]
        %v2305 = vpack.c.bf16 %v2304, %v2304
        %s2306 = scalar_lea.vmem %s2, 8
        %v2307 = vld [vmem:[%s2306] sm:$0x3]
        %v2309 = vsel %vm1028, %v2305, 0
        %v2312 = vsel %vm2217, %v2307, 0
        %2314 = vmatpush.bf16.msra.mxu0 0
        %2315 = vmatpush.bf16.msra.mxu0 0
        %2316 = vmatpush.bf16.msra.mxu0 0
        %2317 = vmatpush.bf16.msra.mxu0 0
        %2318 = vmatpush.bf16.msra.mxu0 0
        %2319 = vmatpush.bf16.msra.mxu0 0
        %2320 = vmatpush.bf16.msra.mxu0 0
        %2321 = vmatpush.bf16.msra.mxu0 %v2312
        %2322 = vmatmul.bf16.gmra.mxu0 %v2309
        %v2323 = vpop.f32.mrf.mxu0
        %v2324 = vadd.f32 0.0, %v2323
        %v2325 = vpop.f32.mrf.mxu0
        %2326 = vdwg.mxu0
        %v2327 = vadd.f32 %v2303, %v2324
        %v2328 = vld [vmem:[%s2279 + $0x2] sm:$0x3f]
        %v2329 = vpack.c.bf16 %v2328, %v2328
        %s2330 = scalar_lea.vmem %s2, 10
        %v2331 = vld [vmem:[%s2330] sm:$0x3]
        %v2333 = vsel %vm1028, %v2329, 0
        %v2336 = vsel %vm2217, %v2331, 0
        %2338 = vmatpush.bf16.msra.mxu0 0
        %2339 = vmatpush.bf16.msra.mxu0 0
        %2340 = vmatpush.bf16.msra.mxu0 0
        %2341 = vmatpush.bf16.msra.mxu0 0
        %2342 = vmatpush.bf16.msra.mxu0 0
        %2343 = vmatpush.bf16.msra.mxu0 0
        %2344 = vmatpush.bf16.msra.mxu0 0
        %2345 = vmatpush.bf16.msra.mxu0 %v2336
        %2346 = vmatmul.bf16.gmra.mxu0 %v2333
        %v2347 = vpop.f32.mrf.mxu0
        %v2348 = vadd.f32 0.0, %v2347
        %v2349 = vpop.f32.mrf.mxu0
        %2350 = vdwg.mxu0
        %v2351 = vadd.f32 %v2327, %v2348
        %s2352 = sadd.s32 %s2200, 2
        %s2353 = smul.u32 %s2352, 8
        %s2354 = scalar_lea.vmem [#allocation2], %s2353
        %v2355 = vld [vmem:[%s2354] sm:$0x3f]
        %v2356 = vpack.c.bf16 %v2355, %v2355
        %s2357 = scalar_lea.vmem %s2, 12
        %v2358 = vld [vmem:[%s2357] sm:$0x3]
        %v2360 = vsel %vm1028, %v2356, 0
        %v2363 = vsel %vm2217, %v2358, 0
        %2365 = vmatpush.bf16.msra.mxu0 0
        %2366 = vmatpush.bf16.msra.mxu0 0
        %2367 = vmatpush.bf16.msra.mxu0 0
        %2368 = vmatpush.bf16.msra.mxu0 0
        %2369 = vmatpush.bf16.msra.mxu0 0
        %2370 = vmatpush.bf16.msra.mxu0 0
        %2371 = vmatpush.bf16.msra.mxu0 0
        %2372 = vmatpush.bf16.msra.mxu0 %v2363
        %2373 = vmatmul.bf16.gmra.mxu0 %v2360
        %v2374 = vpop.f32.mrf.mxu0
        %v2375 = vadd.f32 0.0, %v2374
        %v2376 = vpop.f32.mrf.mxu0
        %2377 = vdwg.mxu0
        %v2378 = vadd.f32 %v2351, %v2375
        %v2379 = vld [vmem:[%s2354 + $0x1] sm:$0x3f]
        %v2380 = vpack.c.bf16 %v2379, %v2379
        %s2381 = scalar_lea.vmem %s2, 14
        %v2382 = vld [vmem:[%s2381] sm:$0x3]
        %v2384 = vsel %vm1028, %v2380, 0
        %v2387 = vsel %vm2217, %v2382, 0
        %2389 = vmatpush.bf16.msra.mxu0 0
        %2390 = vmatpush.bf16.msra.mxu0 0
        %2391 = vmatpush.bf16.msra.mxu0 0
        %2392 = vmatpush.bf16.msra.mxu0 0
        %2393 = vmatpush.bf16.msra.mxu0 0
        %2394 = vmatpush.bf16.msra.mxu0 0
        %2395 = vmatpush.bf16.msra.mxu0 0
        %2396 = vmatpush.bf16.msra.mxu0 %v2387
        %2397 = vmatmul.bf16.gmra.mxu0 %v2384
        %v2398 = vpop.f32.mrf.mxu0
        %v2399 = vadd.f32 0.0, %v2398
        %v2400 = vpop.f32.mrf.mxu0
        %2401 = vdwg.mxu0
        %v2402 = vadd.f32 %v2378, %v2399
        %v2403 = vld [vmem:[%s2354 + $0x2] sm:$0x3f]
        %v2404 = vpack.c.bf16 %v2403, %v2403
        %s2405 = scalar_lea.vmem %s2, 16
        %v2406 = vld [vmem:[%s2405] sm:$0x3]
        %v2408 = vsel %vm1028, %v2404, 0
        %v2411 = vsel %vm2217, %v2406, 0
        %2413 = vmatpush.bf16.msra.mxu0 0
        %2414 = vmatpush.bf16.msra.mxu0 0
        %2415 = vmatpush.bf16.msra.mxu0 0
        %2416 = vmatpush.bf16.msra.mxu0 0
        %2417 = vmatpush.bf16.msra.mxu0 0
        %2418 = vmatpush.bf16.msra.mxu0 0
        %2419 = vmatpush.bf16.msra.mxu0 0
        %2420 = vmatpush.bf16.msra.mxu0 %v2411
        %2421 = vmatmul.bf16.gmra.mxu0 %v2408
        %v2422 = vpop.f32.mrf.mxu0
        %v2423 = vadd.f32 0.0, %v2422
        %v2424 = vpop.f32.mrf.mxu0
        %2425 = vdwg.mxu0
        %v2426 = vadd.f32 %v2402, %v2423
        %v2428 = vperm.slane %v2197, 0
        %v2430 = vadd.f32 %v2426, %v2428
        %v2431 = vmax.f32 %v2430, 0.0
        %s2432 = scalar_lea.vmem [#allocation3], %s2205
        %2433 = vst [vmem:[%s2432] sm:$0x3f] %v2431
      $region49: #{down_forward.1} parent=43 // loop_footer
        %s2204 = sadd.s32 1, %s2200
      $region50: #{down_forward.1} parent=43 // loop_footer_branch
        %2199 = sbr.rel target = $region46
      $region51: #{down_forward.1} parent=43 // loop_exit
        _
      loop: start=0, step=1, limit=4
      $region52: #{down_forward.1} parent=43 // loop_pre_header
        _
      $region53: #{down_forward.1} parent=43 // loop_header
        %s2435 = sphi 0, %s2439
        %p2436 = scmp.ge.s32.totalorder %s2435, 4
      $region54: #{down_forward.1} parent=43 // loop_header_branch
        %2438 = sbr.rel (%p2436) target = $region58
      $region55: #{down_forward.1} parent=43 // loop_body
        %s2440 = smul.u32 %s2435, 8
        %s2441 = scalar_lea.vmem [#allocation3], %s2440
        %v2442 = vld [vmem:[%s2441] sm:$0xf]
        %v2443 = vpack.c.bf16 %v2442, %v2442
        %v2444 = vld [vmem:[%s4] sm:$0xf]
        %v2445 = vld [vmem:[%s4 + $0x4] sm:$0xf]
        %v2446 = vld [vmem:[%s4 + $0x8] sm:$0xf]
        %v2447 = vld [vmem:[%s4 + $0xc] sm:$0xf]
        %v2448 = vld [vmem:[%s4 + $0x10] sm:$0xf]
        %v2449 = vld [vmem:[%s4 + $0x14] sm:$0xf]
        %v2450 = vld [vmem:[%s4 + $0x18] sm:$0xf]
        %v2451 = vld [vmem:[%s4 + $0x1c] sm:$0xf]
        %v2452 = vld [vmem:[%s4 + $0x20] sm:$0xf]
        %v2453 = vld [vmem:[%s4 + $0x24] sm:$0xf]
        %v2454 = vld [vmem:[%s4 + $0x28] sm:$0xf]
        %v2455 = vld [vmem:[%s4 + $0x2c] sm:$0xf]
        %v2456 = vld [vmem:[%s4 + $0x30] sm:$0xf]
        %v2457 = vld [vmem:[%s4 + $0x34] sm:$0xf]
        %v2458 = vld [vmem:[%s4 + $0x38] sm:$0xf]
        %v2459 = vld [vmem:[%s4 + $0x3c] sm:$0xf]
        %v2460 = vld [vmem:[%s2441 + $0x1] sm:$0xf]
        %v2461 = vpack.c.bf16 %v2460, %v2460
        %s2462 = scalar_lea.vmem %s4, 64
        %v2463 = vld [vmem:[%s2462] sm:$0xf]
        %v2464 = vld [vmem:[%s2462 + $0x4] sm:$0xf]
        %v2465 = vld [vmem:[%s2462 + $0x8] sm:$0xf]
        %v2466 = vld [vmem:[%s2462 + $0xc] sm:$0xf]
        %v2467 = vld [vmem:[%s2462 + $0x10] sm:$0xf]
        %v2468 = vld [vmem:[%s2462 + $0x14] sm:$0xf]
        %v2469 = vld [vmem:[%s2462 + $0x18] sm:$0xf]
        %v2470 = vld [vmem:[%s2462 + $0x1c] sm:$0xf]
        %v2471 = vld [vmem:[%s2462 + $0x20] sm:$0xf]
        %v2472 = vld [vmem:[%s2462 + $0x24] sm:$0xf]
        %v2473 = vld [vmem:[%s2462 + $0x28] sm:$0xf]
        %v2474 = vld [vmem:[%s2462 + $0x2c] sm:$0xf]
        %v2475 = vld [vmem:[%s2462 + $0x30] sm:$0xf]
        %v2476 = vld [vmem:[%s2462 + $0x34] sm:$0xf]
        %v2477 = vld [vmem:[%s2462 + $0x38] sm:$0xf]
        %v2478 = vld [vmem:[%s2462 + $0x3c] sm:$0xf]
        %v2495 = vunpack.c.l.b16 %v2463
        %v2496 = vunpack.c.l.b16 %v2464
        %v2497 = vunpack.c.l.b16 %v2465
        %v2498 = vunpack.c.l.b16 %v2466
        %v2499 = vunpack.c.l.b16 %v2467
        %v2500 = vunpack.c.l.b16 %v2468
        %v2501 = vunpack.c.l.b16 %v2469
        %v2502 = vunpack.c.l.b16 %v2470
        %v2503 = vunpack.c.l.b16 %v2471
        %v2504 = vunpack.c.l.b16 %v2472
        %v2505 = vunpack.c.l.b16 %v2473
        %v2506 = vunpack.c.l.b16 %v2474
        %v2507 = vunpack.c.l.b16 %v2475
        %v2508 = vunpack.c.l.b16 %v2476
        %v2509 = vunpack.c.l.b16 %v2477
        %v2510 = vunpack.c.l.b16 %v2478
        %v2511 = vpack.c.b16 %v2496, %v2495
        %v2512 = vpack.c.b16 %v2498, %v2497
        %v2513 = vpack.c.b16 %v2500, %v2499
        %v2514 = vpack.c.b16 %v2502, %v2501
        %v2515 = vpack.c.b16 %v2504, %v2503
        %v2516 = vpack.c.b16 %v2506, %v2505
        %v2517 = vpack.c.b16 %v2508, %v2507
        %v2518 = vpack.c.b16 %v2510, %v2509
        %2527 = vmatpush.bf16.msra.mxu0 %v2518
        %2528 = vmatpush.bf16.msra.mxu0 %v2517
        %2529 = vmatpush.bf16.msra.mxu0 %v2516
        %2530 = vmatpush.bf16.msra.mxu0 %v2515
        %2531 = vmatpush.bf16.msra.mxu0 %v2514
        %2532 = vmatpush.bf16.msra.mxu0 %v2513
        %2533 = vmatpush.bf16.msra.mxu0 %v2512
        %2534 = vmatpush.bf16.msra.mxu0 %v2511
        %2535 = vmatmul.bf16.gmra.mxu0 %v2461
        %v2536 = vpop.f32.mrf.mxu0
        %v2537 = vadd.f32 0.0, %v2536
        %v2538 = vpop.f32.mrf.mxu0
        %2539 = vdwg.mxu0
        %v2556 = vunpack.c.l.b16 %v2444
        %v2557 = vunpack.c.l.b16 %v2445
        %v2558 = vunpack.c.l.b16 %v2446
        %v2559 = vunpack.c.l.b16 %v2447
        %v2560 = vunpack.c.l.b16 %v2448
        %v2561 = vunpack.c.l.b16 %v2449
        %v2562 = vunpack.c.l.b16 %v2450
        %v2563 = vunpack.c.l.b16 %v2451
        %v2564 = vunpack.c.l.b16 %v2452
        %v2565 = vunpack.c.l.b16 %v2453
        %v2566 = vunpack.c.l.b16 %v2454
        %v2567 = vunpack.c.l.b16 %v2455
        %v2568 = vunpack.c.l.b16 %v2456
        %v2569 = vunpack.c.l.b16 %v2457
        %v2570 = vunpack.c.l.b16 %v2458
        %v2571 = vunpack.c.l.b16 %v2459
        %v2572 = vpack.c.b16 %v2557, %v2556
        %v2573 = vpack.c.b16 %v2559, %v2558
        %v2574 = vpack.c.b16 %v2561, %v2560
        %v2575 = vpack.c.b16 %v2563, %v2562
        %v2576 = vpack.c.b16 %v2565, %v2564
        %v2577 = vpack.c.b16 %v2567, %v2566
        %v2578 = vpack.c.b16 %v2569, %v2568
        %v2579 = vpack.c.b16 %v2571, %v2570
        %2588 = vmatpush.bf16.msra.mxu0 %v2579
        %2589 = vmatpush.bf16.msra.mxu0 %v2578
        %2590 = vmatpush.bf16.msra.mxu0 %v2577
        %2591 = vmatpush.bf16.msra.mxu0 %v2576
        %2592 = vmatpush.bf16.msra.mxu0 %v2575
        %2593 = vmatpush.bf16.msra.mxu0 %v2574
        %2594 = vmatpush.bf16.msra.mxu0 %v2573
        %2595 = vmatpush.bf16.msra.mxu0 %v2572
        %2596 = vmatmul.bf16.gmra.mxu0 %v2443
        %v2597 = vpop.f32.mrf.mxu0
        %v2598 = vadd.f32 %v2537, %v2597
        %v2599 = vpop.f32.mrf.mxu0
        %2600 = vdwg.mxu0
        %v2601 = vld [vmem:[%s2441 + $0x2] sm:$0xf]
        %v2602 = vpack.c.bf16 %v2601, %v2601
        %s2603 = scalar_lea.vmem %s4, 128
        %v2604 = vld [vmem:[%s2603] sm:$0xf]
        %v2605 = vld [vmem:[%s2603 + $0x4] sm:$0xf]
        %v2606 = vld [vmem:[%s2603 + $0x8] sm:$0xf]
        %v2607 = vld [vmem:[%s2603 + $0xc] sm:$0xf]
        %v2608 = vld [vmem:[%s2603 + $0x10] sm:$0xf]
        %v2609 = vld [vmem:[%s2603 + $0x14] sm:$0xf]
        %v2610 = vld [vmem:[%s2603 + $0x18] sm:$0xf]
        %v2611 = vld [vmem:[%s2603 + $0x1c] sm:$0xf]
        %v2612 = vld [vmem:[%s2603 + $0x20] sm:$0xf]
        %v2613 = vld [vmem:[%s2603 + $0x24] sm:$0xf]
        %v2614 = vld [vmem:[%s2603 + $0x28] sm:$0xf]
        %v2615 = vld [vmem:[%s2603 + $0x2c] sm:$0xf]
        %v2616 = vld [vmem:[%s2603 + $0x30] sm:$0xf]
        %v2617 = vld [vmem:[%s2603 + $0x34] sm:$0xf]
        %v2618 = vld [vmem:[%s2603 + $0x38] sm:$0xf]
        %v2619 = vld [vmem:[%s2603 + $0x3c] sm:$0xf]
        %v2636 = vunpack.c.l.b16 %v2604
        %v2637 = vunpack.c.l.b16 %v2605
        %v2638 = vunpack.c.l.b16 %v2606
        %v2639 = vunpack.c.l.b16 %v2607
        %v2640 = vunpack.c.l.b16 %v2608
        %v2641 = vunpack.c.l.b16 %v2609
        %v2642 = vunpack.c.l.b16 %v2610
        %v2643 = vunpack.c.l.b16 %v2611
        %v2644 = vunpack.c.l.b16 %v2612
        %v2645 = vunpack.c.l.b16 %v2613
        %v2646 = vunpack.c.l.b16 %v2614
        %v2647 = vunpack.c.l.b16 %v2615
        %v2648 = vunpack.c.l.b16 %v2616
        %v2649 = vunpack.c.l.b16 %v2617
        %v2650 = vunpack.c.l.b16 %v2618
        %v2651 = vunpack.c.l.b16 %v2619
        %v2652 = vpack.c.b16 %v2637, %v2636
        %v2653 = vpack.c.b16 %v2639, %v2638
        %v2654 = vpack.c.b16 %v2641, %v2640
        %v2655 = vpack.c.b16 %v2643, %v2642
        %v2656 = vpack.c.b16 %v2645, %v2644
        %v2657 = vpack.c.b16 %v2647, %v2646
        %v2658 = vpack.c.b16 %v2649, %v2648
        %v2659 = vpack.c.b16 %v2651, %v2650
        %2668 = vmatpush.bf16.msra.mxu0 %v2659
        %2669 = vmatpush.bf16.msra.mxu0 %v2658
        %2670 = vmatpush.bf16.msra.mxu0 %v2657
        %2671 = vmatpush.bf16.msra.mxu0 %v2656
        %2672 = vmatpush.bf16.msra.mxu0 %v2655
        %2673 = vmatpush.bf16.msra.mxu0 %v2654
        %2674 = vmatpush.bf16.msra.mxu0 %v2653
        %2675 = vmatpush.bf16.msra.mxu0 %v2652
        %2676 = vmatmul.bf16.gmra.mxu0 %v2602
        %v2677 = vpop.f32.mrf.mxu0
        %v2678 = vadd.f32 0.0, %v2677
        %v2679 = vpop.f32.mrf.mxu0
        %2680 = vdwg.mxu0
        %v2681 = vadd.f32 %v2598, %v2678
        %s2682 = sadd.s32 %s2435, 1
        %s2683 = smul.u32 %s2682, 8
        %s2684 = scalar_lea.vmem [#allocation3], %s2683
        %v2685 = vld [vmem:[%s2684] sm:$0xf]
        %v2686 = vpack.c.bf16 %v2685, %v2685
        %s2687 = scalar_lea.vmem %s4, 192
        %v2688 = vld [vmem:[%s2687] sm:$0xf]
        %v2689 = vld [vmem:[%s2687 + $0x4] sm:$0xf]
        %v2690 = vld [vmem:[%s2687 + $0x8] sm:$0xf]
        %v2691 = vld [vmem:[%s2687 + $0xc] sm:$0xf]
        %v2692 = vld [vmem:[%s2687 + $0x10] sm:$0xf]
        %v2693 = vld [vmem:[%s2687 + $0x14] sm:$0xf]
        %v2694 = vld [vmem:[%s2687 + $0x18] sm:$0xf]
        %v2695 = vld [vmem:[%s2687 + $0x1c] sm:$0xf]
        %v2696 = vld [vmem:[%s2687 + $0x20] sm:$0xf]
        %v2697 = vld [vmem:[%s2687 + $0x24] sm:$0xf]
        %v2698 = vld [vmem:[%s2687 + $0x28] sm:$0xf]
        %v2699 = vld [vmem:[%s2687 + $0x2c] sm:$0xf]
        %v2700 = vld [vmem:[%s2687 + $0x30] sm:$0xf]
        %v2701 = vld [vmem:[%s2687 + $0x34] sm:$0xf]
        %v2702 = vld [vmem:[%s2687 + $0x38] sm:$0xf]
        %v2703 = vld [vmem:[%s2687 + $0x3c] sm:$0xf]
        %v2720 = vunpack.c.l.b16 %v2688
        %v2721 = vunpack.c.l.b16 %v2689
        %v2722 = vunpack.c.l.b16 %v2690
        %v2723 = vunpack.c.l.b16 %v2691
        %v2724 = vunpack.c.l.b16 %v2692
        %v2725 = vunpack.c.l.b16 %v2693
        %v2726 = vunpack.c.l.b16 %v2694
        %v2727 = vunpack.c.l.b16 %v2695
        %v2728 = vunpack.c.l.b16 %v2696
        %v2729 = vunpack.c.l.b16 %v2697
        %v2730 = vunpack.c.l.b16 %v2698
        %v2731 = vunpack.c.l.b16 %v2699
        %v2732 = vunpack.c.l.b16 %v2700
        %v2733 = vunpack.c.l.b16 %v2701
        %v2734 = vunpack.c.l.b16 %v2702
        %v2735 = vunpack.c.l.b16 %v2703
        %v2736 = vpack.c.b16 %v2721, %v2720
        %v2737 = vpack.c.b16 %v2723, %v2722
        %v2738 = vpack.c.b16 %v2725, %v2724
        %v2739 = vpack.c.b16 %v2727, %v2726
        %v2740 = vpack.c.b16 %v2729, %v2728
        %v2741 = vpack.c.b16 %v2731, %v2730
        %v2742 = vpack.c.b16 %v2733, %v2732
        %v2743 = vpack.c.b16 %v2735, %v2734
        %2752 = vmatpush.bf16.msra.mxu0 %v2743
        %2753 = vmatpush.bf16.msra.mxu0 %v2742
        %2754 = vmatpush.bf16.msra.mxu0 %v2741
        %2755 = vmatpush.bf16.msra.mxu0 %v2740
        %2756 = vmatpush.bf16.msra.mxu0 %v2739
        %2757 = vmatpush.bf16.msra.mxu0 %v2738
        %2758 = vmatpush.bf16.msra.mxu0 %v2737
        %2759 = vmatpush.bf16.msra.mxu0 %v2736
        %2760 = vmatmul.bf16.gmra.mxu0 %v2686
        %v2761 = vpop.f32.mrf.mxu0
        %v2762 = vadd.f32 0.0, %v2761
        %v2763 = vpop.f32.mrf.mxu0
        %2764 = vdwg.mxu0
        %v2765 = vadd.f32 %v2681, %v2762
        %v2766 = vld [vmem:[%s2684 + $0x1] sm:$0xf]
        %v2767 = vpack.c.bf16 %v2766, %v2766
        %s2768 = scalar_lea.vmem %s4, 256
        %v2769 = vld [vmem:[%s2768] sm:$0xf]
        %v2770 = vld [vmem:[%s2768 + $0x4] sm:$0xf]
        %v2771 = vld [vmem:[%s2768 + $0x8] sm:$0xf]
        %v2772 = vld [vmem:[%s2768 + $0xc] sm:$0xf]
        %v2773 = vld [vmem:[%s2768 + $0x10] sm:$0xf]
        %v2774 = vld [vmem:[%s2768 + $0x14] sm:$0xf]
        %v2775 = vld [vmem:[%s2768 + $0x18] sm:$0xf]
        %v2776 = vld [vmem:[%s2768 + $0x1c] sm:$0xf]
        %v2777 = vld [vmem:[%s2768 + $0x20] sm:$0xf]
        %v2778 = vld [vmem:[%s2768 + $0x24] sm:$0xf]
        %v2779 = vld [vmem:[%s2768 + $0x28] sm:$0xf]
        %v2780 = vld [vmem:[%s2768 + $0x2c] sm:$0xf]
        %v2781 = vld [vmem:[%s2768 + $0x30] sm:$0xf]
        %v2782 = vld [vmem:[%s2768 + $0x34] sm:$0xf]
        %v2783 = vld [vmem:[%s2768 + $0x38] sm:$0xf]
        %v2784 = vld [vmem:[%s2768 + $0x3c] sm:$0xf]
        %v2801 = vunpack.c.l.b16 %v2769
        %v2802 = vunpack.c.l.b16 %v2770
        %v2803 = vunpack.c.l.b16 %v2771
        %v2804 = vunpack.c.l.b16 %v2772
        %v2805 = vunpack.c.l.b16 %v2773
        %v2806 = vunpack.c.l.b16 %v2774
        %v2807 = vunpack.c.l.b16 %v2775
        %v2808 = vunpack.c.l.b16 %v2776
        %v2809 = vunpack.c.l.b16 %v2777
        %v2810 = vunpack.c.l.b16 %v2778
        %v2811 = vunpack.c.l.b16 %v2779
        %v2812 = vunpack.c.l.b16 %v2780
        %v2813 = vunpack.c.l.b16 %v2781
        %v2814 = vunpack.c.l.b16 %v2782
        %v2815 = vunpack.c.l.b16 %v2783
        %v2816 = vunpack.c.l.b16 %v2784
        %v2817 = vpack.c.b16 %v2802, %v2801
        %v2818 = vpack.c.b16 %v2804, %v2803
        %v2819 = vpack.c.b16 %v2806, %v2805
        %v2820 = vpack.c.b16 %v2808, %v2807
        %v2821 = vpack.c.b16 %v2810, %v2809
        %v2822 = vpack.c.b16 %v2812, %v2811
        %v2823 = vpack.c.b16 %v2814, %v2813
        %v2824 = vpack.c.b16 %v2816, %v2815
        %2833 = vmatpush.bf16.msra.mxu0 %v2824
        %2834 = vmatpush.bf16.msra.mxu0 %v2823
        %2835 = vmatpush.bf16.msra.mxu0 %v2822
        %2836 = vmatpush.bf16.msra.mxu0 %v2821
        %2837 = vmatpush.bf16.msra.mxu0 %v2820
        %2838 = vmatpush.bf16.msra.mxu0 %v2819
        %2839 = vmatpush.bf16.msra.mxu0 %v2818
        %2840 = vmatpush.bf16.msra.mxu0 %v2817
        %2841 = vmatmul.bf16.gmra.mxu0 %v2767
        %v2842 = vpop.f32.mrf.mxu0
        %v2843 = vadd.f32 0.0, %v2842
        %v2844 = vpop.f32.mrf.mxu0
        %2845 = vdwg.mxu0
        %v2846 = vadd.f32 %v2765, %v2843
        %v2847 = vld [vmem:[%s2684 + $0x2] sm:$0xf]
        %v2848 = vpack.c.bf16 %v2847, %v2847
        %s2849 = scalar_lea.vmem %s4, 320
        %v2850 = vld [vmem:[%s2849] sm:$0xf]
        %v2851 = vld [vmem:[%s2849 + $0x4] sm:$0xf]
        %v2852 = vld [vmem:[%s2849 + $0x8] sm:$0xf]
        %v2853 = vld [vmem:[%s2849 + $0xc] sm:$0xf]
        %v2854 = vld [vmem:[%s2849 + $0x10] sm:$0xf]
        %v2855 = vld [vmem:[%s2849 + $0x14] sm:$0xf]
        %v2856 = vld [vmem:[%s2849 + $0x18] sm:$0xf]
        %v2857 = vld [vmem:[%s2849 + $0x1c] sm:$0xf]
        %v2858 = vld [vmem:[%s2849 + $0x20] sm:$0xf]
        %v2859 = vld [vmem:[%s2849 + $0x24] sm:$0xf]
        %v2860 = vld [vmem:[%s2849 + $0x28] sm:$0xf]
        %v2861 = vld [vmem:[%s2849 + $0x2c] sm:$0xf]
        %v2862 = vld [vmem:[%s2849 + $0x30] sm:$0xf]
        %v2863 = vld [vmem:[%s2849 + $0x34] sm:$0xf]
        %v2864 = vld [vmem:[%s2849 + $0x38] sm:$0xf]
        %v2865 = vld [vmem:[%s2849 + $0x3c] sm:$0xf]
        %v2882 = vunpack.c.l.b16 %v2850
        %v2883 = vunpack.c.l.b16 %v2851
        %v2884 = vunpack.c.l.b16 %v2852
        %v2885 = vunpack.c.l.b16 %v2853
        %v2886 = vunpack.c.l.b16 %v2854
        %v2887 = vunpack.c.l.b16 %v2855
        %v2888 = vunpack.c.l.b16 %v2856
        %v2889 = vunpack.c.l.b16 %v2857
        %v2890 = vunpack.c.l.b16 %v2858
        %v2891 = vunpack.c.l.b16 %v2859
        %v2892 = vunpack.c.l.b16 %v2860
        %v2893 = vunpack.c.l.b16 %v2861
        %v2894 = vunpack.c.l.b16 %v2862
        %v2895 = vunpack.c.l.b16 %v2863
        %v2896 = vunpack.c.l.b16 %v2864
        %v2897 = vunpack.c.l.b16 %v2865
        %v2898 = vpack.c.b16 %v2883, %v2882
        %v2899 = vpack.c.b16 %v2885, %v2884
        %v2900 = vpack.c.b16 %v2887, %v2886
        %v2901 = vpack.c.b16 %v2889, %v2888
        %v2902 = vpack.c.b16 %v2891, %v2890
        %v2903 = vpack.c.b16 %v2893, %v2892
        %v2904 = vpack.c.b16 %v2895, %v2894
        %v2905 = vpack.c.b16 %v2897, %v2896
        %2914 = vmatpush.bf16.msra.mxu0 %v2905
        %2915 = vmatpush.bf16.msra.mxu0 %v2904
        %2916 = vmatpush.bf16.msra.mxu0 %v2903
        %2917 = vmatpush.bf16.msra.mxu0 %v2902
        %2918 = vmatpush.bf16.msra.mxu0 %v2901
        %2919 = vmatpush.bf16.msra.mxu0 %v2900
        %2920 = vmatpush.bf16.msra.mxu0 %v2899
        %2921 = vmatpush.bf16.msra.mxu0 %v2898
        %2922 = vmatmul.bf16.gmra.mxu0 %v2848
        %v2923 = vpop.f32.mrf.mxu0
        %v2924 = vadd.f32 0.0, %v2923
        %v2925 = vpop.f32.mrf.mxu0
        %2926 = vdwg.mxu0
        %v2927 = vadd.f32 %v2846, %v2924
        %s2928 = sadd.s32 %s2435, 2
        %s2929 = smul.u32 %s2928, 8
        %s2930 = scalar_lea.vmem [#allocation3], %s2929
        %v2931 = vld [vmem:[%s2930] sm:$0xf]
        %v2932 = vpack.c.bf16 %v2931, %v2931
        %s2933 = scalar_lea.vmem %s4, 384
        %v2934 = vld [vmem:[%s2933] sm:$0xf]
        %v2935 = vld [vmem:[%s2933 + $0x4] sm:$0xf]
        %v2936 = vld [vmem:[%s2933 + $0x8] sm:$0xf]
        %v2937 = vld [vmem:[%s2933 + $0xc] sm:$0xf]
        %v2938 = vld [vmem:[%s2933 + $0x10] sm:$0xf]
        %v2939 = vld [vmem:[%s2933 + $0x14] sm:$0xf]
        %v2940 = vld [vmem:[%s2933 + $0x18] sm:$0xf]
        %v2941 = vld [vmem:[%s2933 + $0x1c] sm:$0xf]
        %v2942 = vld [vmem:[%s2933 + $0x20] sm:$0xf]
        %v2943 = vld [vmem:[%s2933 + $0x24] sm:$0xf]
        %v2944 = vld [vmem:[%s2933 + $0x28] sm:$0xf]
        %v2945 = vld [vmem:[%s2933 + $0x2c] sm:$0xf]
        %v2946 = vld [vmem:[%s2933 + $0x30] sm:$0xf]
        %v2947 = vld [vmem:[%s2933 + $0x34] sm:$0xf]
        %v2948 = vld [vmem:[%s2933 + $0x38] sm:$0xf]
        %v2949 = vld [vmem:[%s2933 + $0x3c] sm:$0xf]
        %v2966 = vunpack.c.l.b16 %v2934
        %v2967 = vunpack.c.l.b16 %v2935
        %v2968 = vunpack.c.l.b16 %v2936
        %v2969 = vunpack.c.l.b16 %v2937
        %v2970 = vunpack.c.l.b16 %v2938
        %v2971 = vunpack.c.l.b16 %v2939
        %v2972 = vunpack.c.l.b16 %v2940
        %v2973 = vunpack.c.l.b16 %v2941
        %v2974 = vunpack.c.l.b16 %v2942
        %v2975 = vunpack.c.l.b16 %v2943
        %v2976 = vunpack.c.l.b16 %v2944
        %v2977 = vunpack.c.l.b16 %v2945
        %v2978 = vunpack.c.l.b16 %v2946
        %v2979 = vunpack.c.l.b16 %v2947
        %v2980 = vunpack.c.l.b16 %v2948
        %v2981 = vunpack.c.l.b16 %v2949
        %v2982 = vpack.c.b16 %v2967, %v2966
        %v2983 = vpack.c.b16 %v2969, %v2968
        %v2984 = vpack.c.b16 %v2971, %v2970
        %v2985 = vpack.c.b16 %v2973, %v2972
        %v2986 = vpack.c.b16 %v2975, %v2974
        %v2987 = vpack.c.b16 %v2977, %v2976
        %v2988 = vpack.c.b16 %v2979, %v2978
        %v2989 = vpack.c.b16 %v2981, %v2980
        %2998 = vmatpush.bf16.msra.mxu0 %v2989
        %2999 = vmatpush.bf16.msra.mxu0 %v2988
        %3000 = vmatpush.bf16.msra.mxu0 %v2987
        %3001 = vmatpush.bf16.msra.mxu0 %v2986
        %3002 = vmatpush.bf16.msra.mxu0 %v2985
        %3003 = vmatpush.bf16.msra.mxu0 %v2984
        %3004 = vmatpush.bf16.msra.mxu0 %v2983
        %3005 = vmatpush.bf16.msra.mxu0 %v2982
        %3006 = vmatmul.bf16.gmra.mxu0 %v2932
        %v3007 = vpop.f32.mrf.mxu0
        %v3008 = vadd.f32 0.0, %v3007
        %v3009 = vpop.f32.mrf.mxu0
        %3010 = vdwg.mxu0
        %v3011 = vadd.f32 %v2927, %v3008
        %v3012 = vld [vmem:[%s2930 + $0x1] sm:$0xf]
        %v3013 = vpack.c.bf16 %v3012, %v3012
        %s3014 = scalar_lea.vmem %s4, 448
        %v3015 = vld [vmem:[%s3014] sm:$0xf]
        %v3016 = vld [vmem:[%s3014 + $0x4] sm:$0xf]
        %v3017 = vld [vmem:[%s3014 + $0x8] sm:$0xf]
        %v3018 = vld [vmem:[%s3014 + $0xc] sm:$0xf]
        %v3019 = vld [vmem:[%s3014 + $0x10] sm:$0xf]
        %v3020 = vld [vmem:[%s3014 + $0x14] sm:$0xf]
        %v3021 = vld [vmem:[%s3014 + $0x18] sm:$0xf]
        %v3022 = vld [vmem:[%s3014 + $0x1c] sm:$0xf]
        %v3023 = vld [vmem:[%s3014 + $0x20] sm:$0xf]
        %v3024 = vld [vmem:[%s3014 + $0x24] sm:$0xf]
        %v3025 = vld [vmem:[%s3014 + $0x28] sm:$0xf]
        %v3026 = vld [vmem:[%s3014 + $0x2c] sm:$0xf]
        %v3027 = vld [vmem:[%s3014 + $0x30] sm:$0xf]
        %v3028 = vld [vmem:[%s3014 + $0x34] sm:$0xf]
        %v3029 = vld [vmem:[%s3014 + $0x38] sm:$0xf]
        %v3030 = vld [vmem:[%s3014 + $0x3c] sm:$0xf]
        %v3047 = vunpack.c.l.b16 %v3015
        %v3048 = vunpack.c.l.b16 %v3016
        %v3049 = vunpack.c.l.b16 %v3017
        %v3050 = vunpack.c.l.b16 %v3018
        %v3051 = vunpack.c.l.b16 %v3019
        %v3052 = vunpack.c.l.b16 %v3020
        %v3053 = vunpack.c.l.b16 %v3021
        %v3054 = vunpack.c.l.b16 %v3022
        %v3055 = vunpack.c.l.b16 %v3023
        %v3056 = vunpack.c.l.b16 %v3024
        %v3057 = vunpack.c.l.b16 %v3025
        %v3058 = vunpack.c.l.b16 %v3026
        %v3059 = vunpack.c.l.b16 %v3027
        %v3060 = vunpack.c.l.b16 %v3028
        %v3061 = vunpack.c.l.b16 %v3029
        %v3062 = vunpack.c.l.b16 %v3030
        %v3063 = vpack.c.b16 %v3048, %v3047
        %v3064 = vpack.c.b16 %v3050, %v3049
        %v3065 = vpack.c.b16 %v3052, %v3051
        %v3066 = vpack.c.b16 %v3054, %v3053
        %v3067 = vpack.c.b16 %v3056, %v3055
        %v3068 = vpack.c.b16 %v3058, %v3057
        %v3069 = vpack.c.b16 %v3060, %v3059
        %v3070 = vpack.c.b16 %v3062, %v3061
        %3079 = vmatpush.bf16.msra.mxu0 %v3070
        %3080 = vmatpush.bf16.msra.mxu0 %v3069
        %3081 = vmatpush.bf16.msra.mxu0 %v3068
        %3082 = vmatpush.bf16.msra.mxu0 %v3067
        %3083 = vmatpush.bf16.msra.mxu0 %v3066
        %3084 = vmatpush.bf16.msra.mxu0 %v3065
        %3085 = vmatpush.bf16.msra.mxu0 %v3064
        %3086 = vmatpush.bf16.msra.mxu0 %v3063
        %3087 = vmatmul.bf16.gmra.mxu0 %v3013
        %v3088 = vpop.f32.mrf.mxu0
        %v3089 = vadd.f32 0.0, %v3088
        %v3090 = vpop.f32.mrf.mxu0
        %3091 = vdwg.mxu0
        %v3092 = vadd.f32 %v3011, %v3089
        %v3093 = vld [vmem:[%s2930 + $0x2] sm:$0xf]
        %v3094 = vpack.c.bf16 %v3093, %v3093
        %s3095 = scalar_lea.vmem %s4, 512
        %v3096 = vld [vmem:[%s3095] sm:$0xf]
        %v3097 = vld [vmem:[%s3095 + $0x4] sm:$0xf]
        %v3098 = vld [vmem:[%s3095 + $0x8] sm:$0xf]
        %v3099 = vld [vmem:[%s3095 + $0xc] sm:$0xf]
        %v3100 = vld [vmem:[%s3095 + $0x10] sm:$0xf]
        %v3101 = vld [vmem:[%s3095 + $0x14] sm:$0xf]
        %v3102 = vld [vmem:[%s3095 + $0x18] sm:$0xf]
        %v3103 = vld [vmem:[%s3095 + $0x1c] sm:$0xf]
        %v3104 = vld [vmem:[%s3095 + $0x20] sm:$0xf]
        %v3105 = vld [vmem:[%s3095 + $0x24] sm:$0xf]
        %v3106 = vld [vmem:[%s3095 + $0x28] sm:$0xf]
        %v3107 = vld [vmem:[%s3095 + $0x2c] sm:$0xf]
        %v3108 = vld [vmem:[%s3095 + $0x30] sm:$0xf]
        %v3109 = vld [vmem:[%s3095 + $0x34] sm:$0xf]
        %v3110 = vld [vmem:[%s3095 + $0x38] sm:$0xf]
        %v3111 = vld [vmem:[%s3095 + $0x3c] sm:$0xf]
        %v3128 = vunpack.c.l.b16 %v3096
        %v3129 = vunpack.c.l.b16 %v3097
        %v3130 = vunpack.c.l.b16 %v3098
        %v3131 = vunpack.c.l.b16 %v3099
        %v3132 = vunpack.c.l.b16 %v3100
        %v3133 = vunpack.c.l.b16 %v3101
        %v3134 = vunpack.c.l.b16 %v3102
        %v3135 = vunpack.c.l.b16 %v3103
        %v3136 = vunpack.c.l.b16 %v3104
        %v3137 = vunpack.c.l.b16 %v3105
        %v3138 = vunpack.c.l.b16 %v3106
        %v3139 = vunpack.c.l.b16 %v3107
        %v3140 = vunpack.c.l.b16 %v3108
        %v3141 = vunpack.c.l.b16 %v3109
        %v3142 = vunpack.c.l.b16 %v3110
        %v3143 = vunpack.c.l.b16 %v3111
        %v3144 = vpack.c.b16 %v3129, %v3128
        %v3145 = vpack.c.b16 %v3131, %v3130
        %v3146 = vpack.c.b16 %v3133, %v3132
        %v3147 = vpack.c.b16 %v3135, %v3134
        %v3148 = vpack.c.b16 %v3137, %v3136
        %v3149 = vpack.c.b16 %v3139, %v3138
        %v3150 = vpack.c.b16 %v3141, %v3140
        %v3151 = vpack.c.b16 %v3143, %v3142
        %3160 = vmatpush.bf16.msra.mxu0 %v3151
        %3161 = vmatpush.bf16.msra.mxu0 %v3150
        %3162 = vmatpush.bf16.msra.mxu0 %v3149
        %3163 = vmatpush.bf16.msra.mxu0 %v3148
        %3164 = vmatpush.bf16.msra.mxu0 %v3147
        %3165 = vmatpush.bf16.msra.mxu0 %v3146
        %3166 = vmatpush.bf16.msra.mxu0 %v3145
        %3167 = vmatpush.bf16.msra.mxu0 %v3144
        %3168 = vmatmul.bf16.gmra.mxu0 %v3094
        %v3169 = vpop.f32.mrf.mxu0
        %v3170 = vadd.f32 0.0, %v3169
        %v3171 = vpop.f32.mrf.mxu0
        %3172 = vdwg.mxu0
        %v3173 = vadd.f32 %v3092, %v3170
        %v3175 = vperm.slane %v2198, 0
        %v3177 = vadd.f32 %v3173, %v3175
        %v3178 = vmax.f32 %v3177, 0.0
        %s3179 = smul.u32 %s2435, 4
        %s3180 = scalar_lea.vmem %s320, %s3179
        %3181 = vst [vmem:[%s3180] sm:$0xf] %v3178
      $region56: #{down_forward.1} parent=43 // loop_footer
        %s2439 = sadd.s32 1, %s2435
      $region57: #{down_forward.1} parent=43 // loop_footer_branch
        %2434 = sbr.rel target = $region53
      $region58: #{down_forward.1} parent=43 // loop_exit
        _
      %s3182 = smul.u32 4, %s22
      %p3183 = scmp.lt.s32.totalorder %s21, 1
      %s3184 = scalar_select %p3183, %s21, 1
      %p3185 = scmp.lt.s32.totalorder %s3182, 3
      %s3186 = scalar_select %p3185, %s3182, 3
      %s3187 = smul.addr %s3184, 4
      %s3188 = sadd.s32 %s3186, %s3187
      %s3189 = smul.addr %s3188, 4
      %s3190 = scalar_lea.vmem %s6, %s3189
      // Predicated region
      $region59: #{down_forward.1} parent=43 // pred_check
        %p3191 = pneg %p189
      $region60: #{down_forward.1} parent=43 // pred_check_branch
        %3193 = sbr.rel (%p3191) target = $region62
      $region61: #{down_forward.1} parent=43 // pred_region
        %s3194 = smul.u32 4, %s22
      $region62: #{down_forward.1} parent=43 // pred_fallthru
        _
    $region44: #{down_forward.1} parent=5 // pred_fallthru
      _
    %p3195 = scmp.le.s32.totalorder 2, %s12
    // Predicated region
    $region63: #{down_forward.1} parent=5 // pred_check
      %p3196 = pneg %p3195
    $region64: #{down_forward.1} parent=5 // pred_check_branch
      %3198 = sbr.rel (%p3196) target = $region66
    $region65: #{down_forward.1} parent=5 // pred_region
      %s3199 = ssub.s32 %s12, 2
      // Predicated region
      $region67: #{down_forward.1} parent=65 // pred_check
        %p3200 = pneg %p195
      $region68: #{down_forward.1} parent=65 // pred_check_branch
        %3202 = sbr.rel (%p3200) target = $region70
      $region69: #{down_forward.1} parent=65 // pred_region
        %s3203 = smul.u32 4, %s24
        %p3204 = scmp.lt.s32.totalorder %s23, 1
        %s3205 = scalar_select %p3204, %s23, 1
        %p3206 = scmp.lt.s32.totalorder %s3203, 3
        %s3207 = scalar_select %p3206, %s3203, 3
        %s3208 = smul.addr %s3205, 4
        %s3209 = sadd.s32 %s3207, %s3208
        %s3210 = smul.addr %s3209, 4
        %s3211 = scalar_lea.vmem %s6, %s3210
      $region70: #{down_forward.1} parent=65 // pred_fallthru
        _
    $region66: #{down_forward.1} parent=5 // pred_fallthru
      _
  $region6: #{down_forward.1} parent=0 // loop_footer
    %s16 = sadd.s32 1, %s12
  $region7: #{down_forward.1} parent=0 // loop_footer_branch
    %11 = sbr.rel target = $region3
  $region8: #{down_forward.1} parent=0 // loop_exit
    _

</llo_original>
